<compile_context>
chip_gen: v7x
topology: tpu7x:2x2x1
jax: 0.10.0
libtpu: 0.0.40
codegen_flags: <defaults>
</compile_context>

<pallas_src>
import functools
import math

import jax
import jax.numpy as jnp
import numpy as np
from jax.experimental import pallas as pl
from jax.experimental.pallas import tpu as pltpu


# ----------------------------- shared numerics ------------------------------

def _layer_norm(x, w, b, eps):
  # f32 statistics; eps=1e-6 as in GroupLayerNorm(nb=1).
  mu = jnp.mean(x, axis=-1, keepdims=True)
  var = jnp.mean(jnp.square(x - mu), axis=-1, keepdims=True)
  return (x - mu) * jax.lax.rsqrt(var + eps) * w + b


# --------------------------- fused decoder kernel ---------------------------

def _decoder_kernel(
    tgt_ref, mem_ref,
    sa_wqkv_ref, sa_bqkv_ref, sa_wo_ref, sa_bo_ref, n1_w_ref, n1_b_ref,
    ca_wq_ref, ca_bq_ref, ca_wkv_ref, ca_bkv_ref, ca_wo_ref, ca_bo_ref,
    n2_w_ref, n2_b_ref,
    w1_ref, b1_ref, w2_ref, b2_ref, n3_w_ref, n3_b_ref,
    final_w_ref, final_b_ref,
    out_ref, attn_scratch, *, nhead, eps):
  lyr = pl.program_id(1)
  nlayers = pl.num_programs(1)
  E = tgt_ref.shape[2]
  Dh = E // nhead
  bf16 = jnp.bfloat16
  f32 = jnp.float32

  def dot32(a, b):
    # bf16 x bf16 MXU matmul with f32 accumulation.
    return jnp.dot(a, b, preferred_element_type=f32)

  def attend(q_all, k_all, v_all, wo, bo):
    # q_all: (L, E) f32, k_all/v_all: (S, E) f32.  Per-head softmax; head
    # contexts land in an (L, E) VMEM slab so the output projection is a
    # single lane-dense K=E matmul.  Scale is already folded into Q weights.
    for h in range(nhead):
      lo, hi = h * Dh, (h + 1) * Dh
      qh = q_all[:, lo:hi].astype(bf16)                     # (L, Dh)
      kh = k_all[:, lo:hi].astype(bf16)                     # (S, Dh)
      vh = v_all[:, lo:hi].astype(bf16)                     # (S, Dh)
      s = jax.lax.dot_general(qh, kh, (((1,), (1,)), ((), ())),
                              preferred_element_type=f32)   # (L, S) f32
      s = s - jnp.max(s, axis=-1, keepdims=True)
      p = jnp.exp(s)
      p = p / jnp.sum(p, axis=-1, keepdims=True)
      attn_scratch[:, lo:hi] = dot32(p.astype(bf16), vh)    # (L, Dh) f32
    o_all = attn_scratch[...]                               # (L, E) f32
    return dot32(o_all.astype(bf16), wo) + bo               # (L, E) f32

  # Initialize the VMEM-resident carry from tgt on the first layer step.
  @pl.when(lyr == 0)
  def _():
    out_ref[0] = tgt_ref[0]

  x = out_ref[0]        # (L, E) f32, layer carry (resident across l)
  mem = mem_ref[0]      # (S, E) f32

  # --- self-attention (packed QKV projection) ---
  qkv = dot32(x.astype(bf16), sa_wqkv_ref[0]) + sa_bqkv_ref[0]
  t2 = attend(qkv[:, :E], qkv[:, E:2 * E], qkv[:, 2 * E:],
              sa_wo_ref[0], sa_bo_ref[0])
  x = _layer_norm(x + t2, n1_w_ref[0], n1_b_ref[0], eps)

  # --- cross-attention (packed KV projection on memory) ---
  q = dot32(x.astype(bf16), ca_wq_ref[0]) + ca_bq_ref[0]
  kv = dot32(mem.astype(bf16), ca_wkv_ref[0]) + ca_bkv_ref[0]
  t2 = attend(q, kv[:, :E], kv[:, E:], ca_wo_ref[0], ca_bo_ref[0])
  x = _layer_norm(x + t2, n2_w_ref[0], n2_b_ref[0], eps)

  # --- position-wise feed-forward ---
  h1 = jnp.maximum(dot32(x.astype(bf16), w1_ref[0]) + b1_ref[0], 0.0)
  ff = dot32(h1.astype(bf16), w2_ref[0]) + b2_ref[0]
  # Faithful to tim.py: the post-FFN residual adds the cross-attention
  # output tgt2 again (not the pre-FFN normalized activation).
  x = _layer_norm(ff + t2, n3_w_ref[0], n3_b_ref[0], eps)

  @pl.when(lyr < nlayers - 1)
  def _():
    out_ref[0] = x

  @pl.when(lyr == nlayers - 1)
  def _():
    # Fused final decoder LayerNorm.
    out_ref[0] = _layer_norm(x, final_w_ref[...], final_b_ref[...], eps)


_WEIGHT_NAMES = (
    "sa_wqkv", "sa_bqkv", "sa_wo", "sa_bo", "n1_w", "n1_b",
    "ca_wq", "ca_bq", "ca_wkv", "ca_bkv", "ca_wo", "ca_bo",
    "n2_w", "n2_b", "w1", "b1", "w2", "b2", "n3_w", "n3_b",
)


def transformer_decoder_pallas(tgt, memory, params, nhead, eps=1e-6):
  B, L, E = tgt.shape
  S = memory.shape[1]
  NL = params["sa_wqkv"].shape[0]
  d_ffn = params["w1"].shape[-1]
  weights = [params[n] for n in _WEIGHT_NAMES]

  def lspec(arr):
    # Stacked per-layer weight: pick layer block `l`, constant over batch.
    nd = arr.ndim
    return pl.BlockSpec((1,) + arr.shape[1:],
                        lambda b, l, _nd=nd: (l,) + (0,) * (_nd - 1))

  def cspec(arr):
    nd = arr.ndim
    return pl.BlockSpec(arr.shape, lambda b, l, _nd=nd: (0,) * _nd)

  # Advisory cost estimate (per batch element, per layer).
  mm_flops = (2 * L * E * 3 * E            # self-attn QKV projection
              + 4 * L * L * E              # self-attn scores + PV
              + 2 * L * E * E              # self-attn output projection
              + 2 * L * E * E              # cross-attn Q projection
              + 2 * S * E * 2 * E          # cross-attn KV projection
              + 4 * L * S * E              # cross-attn scores + PV
              + 2 * L * E * E              # cross-attn output projection
              + 4 * L * E * d_ffn)         # FFN
  flops = int(B * NL * mm_flops)
  transcendentals = int(B * NL * nhead * (L * L + L * S))
  wbytes = sum(int(w.size) * w.dtype.itemsize for w in weights)
  bytes_accessed = int(4 * (2 * B * L * E + B * S * E) + B * wbytes)

  return pl.pallas_call(
      functools.partial(_decoder_kernel, nhead=nhead, eps=eps),
      out_shape=jax.ShapeDtypeStruct((B, L, E), jnp.float32),
      grid=(B, NL),
      in_specs=[pl.BlockSpec((1, L, E), lambda b, l: (b, 0, 0)),
                pl.BlockSpec((1, S, E), lambda b, l: (b, 0, 0))]
               + [lspec(w) for w in weights]
               + [cspec(params["final_w"]), cspec(params["final_b"])],
      out_specs=pl.BlockSpec((1, L, E), lambda b, l: (b, 0, 0)),
      scratch_shapes=[pltpu.VMEM((L, E), jnp.float32)],
      compiler_params=pltpu.CompilerParams(
          dimension_semantics=("parallel", "arbitrary")),
      cost_estimate=pl.CostEstimate(flops=flops,
                                    transcendentals=transcendentals,
                                    bytes_accessed=bytes_accessed),
  )(tgt, memory, *weights, params["final_w"], params["final_b"])


# ------------------------- pure-JAX reference --------------------------------
# Mirrors the kernel's numerics exactly (bf16 MXU operands, f32 accumulation,
# f32 softmax / layernorm statistics, scale folded into Q weights).

def _bdot(x, w):
  return jnp.dot(x.astype(jnp.bfloat16), w.astype(jnp.bfloat16),
                 preferred_element_type=jnp.float32)


def _attend_ref(q, k, v, wo, bo, nhead):
  B, L, E = q.shape
  S = k.shape[1]
  Dh = E // nhead
  qh = q.reshape(B, L, nhead, Dh).transpose(0, 2, 1, 3).astype(jnp.bfloat16)
  kh = k.reshape(B, S, nhead, Dh).transpose(0, 2, 1, 3).astype(jnp.bfloat16)
  vh = v.reshape(B, S, nhead, Dh).transpose(0, 2, 1, 3).astype(jnp.bfloat16)
  s = jnp.einsum("bhld,bhsd->bhls", qh, kh,
                 preferred_element_type=jnp.float32)
  s = s - jnp.max(s, axis=-1, keepdims=True)
  p = jnp.exp(s)
  p = p / jnp.sum(p, axis=-1, keepdims=True)
  o = jnp.einsum("bhls,bhsd->bhld", p.astype(jnp.bfloat16), vh,
                 preferred_element_type=jnp.float32)
  o = o.transpose(0, 2, 1, 3).reshape(B, L, E)
  return _bdot(o, wo) + bo


def decoder_layer_ref(x, memory, lp, nhead, eps=1e-6):
  E = x.shape[-1]
  qkv = _bdot(x, lp["sa_wqkv"]) + lp["sa_bqkv"]
  t2 = _attend_ref(qkv[..., :E], qkv[..., E:2 * E], qkv[..., 2 * E:],
                   lp["sa_wo"], lp["sa_bo"], nhead)
  x = _layer_norm(x + t2, lp["n1_w"], lp["n1_b"], eps)
  q = _bdot(x, lp["ca_wq"]) + lp["ca_bq"]
  kv = _bdot(memory, lp["ca_wkv"]) + lp["ca_bkv"]
  t2 = _attend_ref(q, kv[..., :E], kv[..., E:], lp["ca_wo"], lp["ca_bo"],
                   nhead)
  x = _layer_norm(x + t2, lp["n2_w"], lp["n2_b"], eps)
  h1 = jnp.maximum(_bdot(x, lp["w1"]) + lp["b1"], 0.0)
  ff = _bdot(h1, lp["w2"]) + lp["b2"]
  x = _layer_norm(ff + t2, lp["n3_w"], lp["n3_b"], eps)
  return x


def transformer_decoder_ref(tgt, memory, params, nhead, eps=1e-6):
  NL = params["sa_wqkv"].shape[0]
  x = tgt
  for l in range(NL):
    lp = {k: params[k][l] for k in _WEIGHT_NAMES}
    x = decoder_layer_ref(x, memory, lp, nhead, eps)
  return _layer_norm(x, params["final_w"], params["final_b"], eps)


# ------------------------------- param init ----------------------------------

def init_params(key, num_layers, E, d_ffn, nhead):
  """Stacked per-layer params. Q-projection weights/bias carry the 1/sqrt(Dh)
  attention scale folded in at init time (zero-cost reparametrization)."""
  Dh = E // nhead
  scale = 1.0 / math.sqrt(Dh)
  ks = jax.random.split(key, 12)

  def uni(k, shape, a=0.1):
    return jax.random.uniform(k, shape, jnp.float32, -a, a)

  wqkv = uni(ks[0], (num_layers, E, 3 * E))
  wqkv = wqkv.at[:, :, :E].multiply(scale)                 # scale Q columns
  bqkv = uni(ks[1], (num_layers, 1, 3 * E))
  bqkv = bqkv.at[:, :, :E].multiply(scale)
  wq = uni(ks[2], (num_layers, E, E)) * scale
  bq = uni(ks[3], (num_layers, 1, E)) * scale

  bf16 = jnp.bfloat16
  params = {
      "sa_wqkv": wqkv.astype(bf16), "sa_bqkv": bqkv,
      "sa_wo": uni(ks[4], (num_layers, E, E)).astype(bf16),
      "sa_bo": uni(ks[5], (num_layers, 1, E)),
      "ca_wq": wq.astype(bf16), "ca_bq": bq,
      "ca_wkv": uni(ks[6], (num_layers, E, 2 * E)).astype(bf16),
      "ca_bkv": uni(ks[7], (num_layers, 1, 2 * E)),
      "ca_wo": uni(ks[8], (num_layers, E, E)).astype(bf16),
      "ca_bo": uni(ks[9], (num_layers, 1, E)),
      "w1": uni(ks[10], (num_layers, E, d_ffn)).astype(bf16),
      "b1": uni(ks[11], (num_layers, 1, d_ffn)),
      "w2": uni(ks[0], (num_layers, d_ffn, E)).astype(bf16),
      "b2": uni(ks[1], (num_layers, 1, E)),
      "final_w": jnp.ones((1, E), jnp.float32),
      "final_b": jnp.zeros((1, E), jnp.float32),
  }
  for n in ("n1", "n2", "n3"):
    params[f"{n}_w"] = jnp.ones((num_layers, 1, E), jnp.float32)
    params[f"{n}_b"] = jnp.zeros((num_layers, 1, E), jnp.float32)
  return params


# ---------------------------------- main --------------------------------------

if __name__ == "__main__":
  B, L, S = 2, 8, 16                              # batch, tgt seq, memory seq
  E, nhead, d_ffn, num_layers = 128, 4, 256, 2    # lane-dense model dims

  root = jax.random.PRNGKey(0)
  k_tgt, k_mem, k_par = jax.random.split(root, 3)
  tgt = jax.random.normal(k_tgt, (B, L, E), jnp.float32)
  memory = jax.random.normal(k_mem, (B, S, E), jnp.float32)
  params = init_params(k_par, num_layers, E, d_ffn, nhead)

  fwd = jax.jit(functools.partial(transformer_decoder_pallas, nhead=nhead))
  out = jax.block_until_ready(fwd(tgt, memory, params))

  ref = transformer_decoder_ref(tgt, memory, params, nhead)
  np.testing.assert_allclose(np.asarray(out), np.asarray(ref),
                             rtol=1e-2, atol=1e-2)

  # TODO(synk): dropout layers are identity (eval-mode); per-layer attention
  # weight maps are not returned (return_attention=False path only).
  print("KERNEL_OK")
</pallas_src>

<mosaic_0001>
module attributes {stable_mosaic.version = 11 : i64} {
  func.func @_decoder_kernel(%arg0: i32, %arg1: i32, %arg2: memref<1x8x128xf32, #tpu.memory_space<vmem>>, %arg3: memref<1x16x128xf32, #tpu.memory_space<vmem>>, %arg4: memref<1x128x384xbf16, #tpu.memory_space<vmem>>, %arg5: memref<1x1x384xf32, #tpu.memory_space<vmem>>, %arg6: memref<1x128x128xbf16, #tpu.memory_space<vmem>>, %arg7: memref<1x1x128xf32, #tpu.memory_space<vmem>>, %arg8: memref<1x1x128xf32, #tpu.memory_space<vmem>>, %arg9: memref<1x1x128xf32, #tpu.memory_space<vmem>>, %arg10: memref<1x128x128xbf16, #tpu.memory_space<vmem>>, %arg11: memref<1x1x128xf32, #tpu.memory_space<vmem>>, %arg12: memref<1x128x256xbf16, #tpu.memory_space<vmem>>, %arg13: memref<1x1x256xf32, #tpu.memory_space<vmem>>, %arg14: memref<1x128x128xbf16, #tpu.memory_space<vmem>>, %arg15: memref<1x1x128xf32, #tpu.memory_space<vmem>>, %arg16: memref<1x1x128xf32, #tpu.memory_space<vmem>>, %arg17: memref<1x1x128xf32, #tpu.memory_space<vmem>>, %arg18: memref<1x128x256xbf16, #tpu.memory_space<vmem>>, %arg19: memref<1x1x256xf32, #tpu.memory_space<vmem>>, %arg20: memref<1x256x128xbf16, #tpu.memory_space<vmem>>, %arg21: memref<1x1x128xf32, #tpu.memory_space<vmem>>, %arg22: memref<1x1x128xf32, #tpu.memory_space<vmem>>, %arg23: memref<1x1x128xf32, #tpu.memory_space<vmem>>, %arg24: memref<1x128xf32, #tpu.memory_space<vmem>>, %arg25: memref<1x128xf32, #tpu.memory_space<vmem>>, %arg26: memref<1x8x128xf32, #tpu.memory_space<vmem>>, %arg27: memref<8x128xf32, #tpu.memory_space<vmem>>) attributes {dimension_semantics = [#tpu.dimension_semantics<parallel>, #tpu.dimension_semantics<arbitrary>], iteration_bounds = array<i64: 2, 2>, scalar_prefetch = 0 : i64, scratch_operands = 1 : i64, tpu.core_type = #tpu.core_type<tc>, window_params = [{transform_indices = @transform_0, window_bounds = array<i64: 1, 8, 128>}, {transform_indices = @transform_1, window_bounds = array<i64: 1, 16, 128>}, {transform_indices = @transform_2, window_bounds = array<i64: 1, 128, 384>}, {transform_indices = @transform_3, window_bounds = array<i64: 1, 1, 384>}, {transform_indices = @transform_4, window_bounds = array<i64: 1, 128, 128>}, {transform_indices = @transform_5, window_bounds = array<i64: 1, 1, 128>}, {transform_indices = @transform_6, window_bounds = array<i64: 1, 1, 128>}, {transform_indices = @transform_7, window_bounds = array<i64: 1, 1, 128>}, {transform_indices = @transform_8, window_bounds = array<i64: 1, 128, 128>}, {transform_indices = @transform_9, window_bounds = array<i64: 1, 1, 128>}, {transform_indices = @transform_10, window_bounds = array<i64: 1, 128, 256>}, {transform_indices = @transform_11, window_bounds = array<i64: 1, 1, 256>}, {transform_indices = @transform_12, window_bounds = array<i64: 1, 128, 128>}, {transform_indices = @transform_13, window_bounds = array<i64: 1, 1, 128>}, {transform_indices = @transform_14, window_bounds = array<i64: 1, 1, 128>}, {transform_indices = @transform_15, window_bounds = array<i64: 1, 1, 128>}, {transform_indices = @transform_16, window_bounds = array<i64: 1, 128, 256>}, {transform_indices = @transform_17, window_bounds = array<i64: 1, 1, 256>}, {transform_indices = @transform_18, window_bounds = array<i64: 1, 256, 128>}, {transform_indices = @transform_19, window_bounds = array<i64: 1, 1, 128>}, {transform_indices = @transform_20, window_bounds = array<i64: 1, 1, 128>}, {transform_indices = @transform_21, window_bounds = array<i64: 1, 1, 128>}, {pipeline_mode = #tpu.pipeline_mode<synchronous>, transform_indices = @transform_22, window_bounds = array<i64: 1, 128>}, {pipeline_mode = #tpu.pipeline_mode<synchronous>, transform_indices = @transform_23, window_bounds = array<i64: 1, 128>}, {transform_indices = @transform_24, window_bounds = array<i64: 1, 8, 128>}]} {
    %c0_i32 = arith.constant 0 : i32
    %0 = arith.cmpi eq, %arg1, %c0_i32 : i32
    %1 = arith.extui %0 : i1 to i32
    %c0_i32_0 = arith.constant 0 : i32
    %2 = arith.cmpi ne, %1, %c0_i32_0 : i32
    scf.if %2 {
      %c0_140 = arith.constant 0 : index
      %c0_141 = arith.constant 0 : index
      %c0_142 = arith.constant 0 : index
      %311 = vector.load %arg2[%c0_140, %c0_141, %c0_142] : memref<1x8x128xf32, #tpu.memory_space<vmem>>, vector<1x8x128xf32>
      %312 = vector.shape_cast %311 : vector<1x8x128xf32> to vector<8x128xf32>
      %c0_143 = arith.constant 0 : index
      %c0_144 = arith.constant 0 : index
      %c0_145 = arith.constant 0 : index
      %313 = vector.load %arg26[%c0_143, %c0_144, %c0_145] : memref<1x8x128xf32, #tpu.memory_space<vmem>>, vector<1x8x128xf32>
      %314 = vector.shape_cast %313 : vector<1x8x128xf32> to vector<8x128xf32>
      %315 = vector.shape_cast %312 : vector<8x128xf32> to vector<1x8x128xf32>
      tpu.vector_store %arg26[%c0_143, %c0_144, %c0_145], %315 {strides = array<i32>} : memref<1x8x128xf32, #tpu.memory_space<vmem>>, vector<1x8x128xf32>,
    } else {
    }
    %c0 = arith.constant 0 : index
    %c0_1 = arith.constant 0 : index
    %c0_2 = arith.constant 0 : index
    %3 = vector.load %arg26[%c0, %c0_1, %c0_2] : memref<1x8x128xf32, #tpu.memory_space<vmem>>, vector<1x8x128xf32>
    %4 = vector.shape_cast %3 : vector<1x8x128xf32> to vector<8x128xf32>
    %c0_3 = arith.constant 0 : index
    %c0_4 = arith.constant 0 : index
    %c0_5 = arith.constant 0 : index
    %5 = vector.load %arg3[%c0_3, %c0_4, %c0_5] : memref<1x16x128xf32, #tpu.memory_space<vmem>>, vector<1x16x128xf32>
    %6 = vector.shape_cast %5 : vector<1x16x128xf32> to vector<16x128xf32>
    %7 = arith.truncf %4 : vector<8x128xf32> to vector<8x128xbf16>
    %c0_6 = arith.constant 0 : index
    %c0_7 = arith.constant 0 : index
    %c0_8 = arith.constant 0 : index
    %8 = vector.load %arg4[%c0_6, %c0_7, %c0_8] : memref<1x128x384xbf16, #tpu.memory_space<vmem>>, vector<1x128x384xbf16>
    %9 = vector.shape_cast %8 : vector<1x128x384xbf16> to vector<128x384xbf16>
    %cst = arith.constant dense<0.000000e+00> : vector<8x384xf32>
    %10 = tpu.matmul %7, %9, %cst {dimension_numbers = #tpu.dot_dimension_numbers<[1], [0], [0], [1], [0, 0, 1, 1], [], []>} : vector<8x128xbf16>, vector<128x384xbf16>, vector<8x384xf32> -> vector<8x384xf32>
    %c0_9 = arith.constant 0 : index
    %c0_10 = arith.constant 0 : index
    %c0_11 = arith.constant 0 : index
    %11 = vector.load %arg5[%c0_9, %c0_10, %c0_11] : memref<1x1x384xf32, #tpu.memory_space<vmem>>, vector<1x1x384xf32>
    %12 = vector.shape_cast %11 : vector<1x1x384xf32> to vector<1x384xf32>
    %13 = vector.broadcast %12 : vector<1x384xf32> to vector<8x384xf32>
    %14 = arith.addf %10, %13 : vector<8x384xf32>
    %15 = vector.extract_strided_slice %14 {offsets = [0, 0], sizes = [8, 128], strides = [1, 1]} : vector<8x384xf32> to vector<8x128xf32>
    %16 = vector.extract_strided_slice %14 {offsets = [0, 128], sizes = [8, 128], strides = [1, 1]} : vector<8x384xf32> to vector<8x128xf32>
    %17 = vector.extract_strided_slice %14 {offsets = [0, 256], sizes = [8, 128], strides = [1, 1]} : vector<8x384xf32> to vector<8x128xf32>
    %c0_12 = arith.constant 0 : index
    %c0_13 = arith.constant 0 : index
    %c0_14 = arith.constant 0 : index
    %18 = vector.load %arg6[%c0_12, %c0_13, %c0_14] : memref<1x128x128xbf16, #tpu.memory_space<vmem>>, vector<1x128x128xbf16>
    %19 = vector.shape_cast %18 : vector<1x128x128xbf16> to vector<128x128xbf16>
    %c0_15 = arith.constant 0 : index
    %c0_16 = arith.constant 0 : index
    %c0_17 = arith.constant 0 : index
    %20 = vector.load %arg7[%c0_15, %c0_16, %c0_17] : memref<1x1x128xf32, #tpu.memory_space<vmem>>, vector<1x1x128xf32>
    %21 = vector.shape_cast %20 : vector<1x1x128xf32> to vector<1x128xf32>
    %22 = vector.extract_strided_slice %15 {offsets = [0, 0], sizes = [8, 32], strides = [1, 1]} : vector<8x128xf32> to vector<8x32xf32>
    %23 = arith.truncf %22 : vector<8x32xf32> to vector<8x32xbf16>
    %24 = vector.extract_strided_slice %16 {offsets = [0, 0], sizes = [8, 32], strides = [1, 1]} : vector<8x128xf32> to vector<8x32xf32>
    %25 = arith.truncf %24 : vector<8x32xf32> to vector<8x32xbf16>
    %26 = vector.extract_strided_slice %17 {offsets = [0, 0], sizes = [8, 32], strides = [1, 1]} : vector<8x128xf32> to vector<8x32xf32>
    %27 = arith.truncf %26 : vector<8x32xf32> to vector<8x32xbf16>
    %cst_18 = arith.constant dense<0.000000e+00> : vector<8x8xf32>
    %28 = tpu.matmul %23, %25, %cst_18 {dimension_numbers = #tpu.dot_dimension_numbers<[1], [1], [0], [0], [0, 0, 1, 0], [], []>} : vector<8x32xbf16>, vector<8x32xbf16>, vector<8x8xf32> -> vector<8x8xf32>
    %cst_19 = arith.constant dense<0xFF800000> : vector<8xf32>
    %29 = vector.multi_reduction <maximumf>, %28, %cst_19 [1] : vector<8x8xf32> to vector<8xf32>
    %30 = vector.shape_cast %29 : vector<8xf32> to vector<8x1xf32>
    %31 = vector.broadcast %30 : vector<8x1xf32> to vector<8x8xf32>
    %32 = arith.subf %28, %31 : vector<8x8xf32>
    %33 = math.exp %32 : vector<8x8xf32>
    %cst_20 = arith.constant dense<0.000000e+00> : vector<8xf32>
    %34 = vector.multi_reduction <add>, %33, %cst_20 [1] : vector<8x8xf32> to vector<8xf32>
    %35 = vector.shape_cast %34 : vector<8xf32> to vector<8x1xf32>
    %36 = vector.broadcast %35 : vector<8x1xf32> to vector<8x8xf32>
    %37 = arith.divf %33, %36 : vector<8x8xf32>
    %38 = arith.truncf %37 : vector<8x8xf32> to vector<8x8xbf16>
    %cst_21 = arith.constant dense<0.000000e+00> : vector<8x32xf32>
    %39 = tpu.matmul %38, %27, %cst_21 {dimension_numbers = #tpu.dot_dimension_numbers<[1], [0], [0], [1], [0, 0, 1, 1], [], []>} : vector<8x8xbf16>, vector<8x32xbf16>, vector<8x32xf32> -> vector<8x32xf32>
    %c0_22 = arith.constant 0 : index
    %c0_23 = arith.constant 0 : index
    %40 = vector.load %arg27[%c0_22, %c0_23] : memref<8x128xf32, #tpu.memory_space<vmem>>, vector<8x32xf32>
    tpu.vector_store %arg27[%c0_22, %c0_23], %39 {strides = array<i32>} : memref<8x128xf32, #tpu.memory_space<vmem>>, vector<8x32xf32>,
    %41 = vector.extract_strided_slice %15 {offsets = [0, 32], sizes = [8, 32], strides = [1, 1]} : vector<8x128xf32> to vector<8x32xf32>
    %42 = arith.truncf %41 : vector<8x32xf32> to vector<8x32xbf16>
    %43 = vector.extract_strided_slice %16 {offsets = [0, 32], sizes = [8, 32], strides = [1, 1]} : vector<8x128xf32> to vector<8x32xf32>
    %44 = arith.truncf %43 : vector<8x32xf32> to vector<8x32xbf16>
    %45 = vector.extract_strided_slice %17 {offsets = [0, 32], sizes = [8, 32], strides = [1, 1]} : vector<8x128xf32> to vector<8x32xf32>
    %46 = arith.truncf %45 : vector<8x32xf32> to vector<8x32xbf16>
    %cst_24 = arith.constant dense<0.000000e+00> : vector<8x8xf32>
    %47 = tpu.matmul %42, %44, %cst_24 {dimension_numbers = #tpu.dot_dimension_numbers<[1], [1], [0], [0], [0, 0, 1, 0], [], []>} : vector<8x32xbf16>, vector<8x32xbf16>, vector<8x8xf32> -> vector<8x8xf32>
    %cst_25 = arith.constant dense<0xFF800000> : vector<8xf32>
    %48 = vector.multi_reduction <maximumf>, %47, %cst_25 [1] : vector<8x8xf32> to vector<8xf32>
    %49 = vector.shape_cast %48 : vector<8xf32> to vector<8x1xf32>
    %50 = vector.broadcast %49 : vector<8x1xf32> to vector<8x8xf32>
    %51 = arith.subf %47, %50 : vector<8x8xf32>
    %52 = math.exp %51 : vector<8x8xf32>
    %cst_26 = arith.constant dense<0.000000e+00> : vector<8xf32>
    %53 = vector.multi_reduction <add>, %52, %cst_26 [1] : vector<8x8xf32> to vector<8xf32>
    %54 = vector.shape_cast %53 : vector<8xf32> to vector<8x1xf32>
    %55 = vector.broadcast %54 : vector<8x1xf32> to vector<8x8xf32>
    %56 = arith.divf %52, %55 : vector<8x8xf32>
    %57 = arith.truncf %56 : vector<8x8xf32> to vector<8x8xbf16>
    %cst_27 = arith.constant dense<0.000000e+00> : vector<8x32xf32>
    %58 = tpu.matmul %57, %46, %cst_27 {dimension_numbers = #tpu.dot_dimension_numbers<[1], [0], [0], [1], [0, 0, 1, 1], [], []>} : vector<8x8xbf16>, vector<8x32xbf16>, vector<8x32xf32> -> vector<8x32xf32>
    %c0_28 = arith.constant 0 : index
    %c32 = arith.constant 32 : index
    %59 = vector.load %arg27[%c0_28, %c32] : memref<8x128xf32, #tpu.memory_space<vmem>>, vector<8x32xf32>
    tpu.vector_store %arg27[%c0_28, %c32], %58 {strides = array<i32>} : memref<8x128xf32, #tpu.memory_space<vmem>>, vector<8x32xf32>,
    %60 = vector.extract_strided_slice %15 {offsets = [0, 64], sizes = [8, 32], strides = [1, 1]} : vector<8x128xf32> to vector<8x32xf32>
    %61 = arith.truncf %60 : vector<8x32xf32> to vector<8x32xbf16>
    %62 = vector.extract_strided_slice %16 {offsets = [0, 64], sizes = [8, 32], strides = [1, 1]} : vector<8x128xf32> to vector<8x32xf32>
    %63 = arith.truncf %62 : vector<8x32xf32> to vector<8x32xbf16>
    %64 = vector.extract_strided_slice %17 {offsets = [0, 64], sizes = [8, 32], strides = [1, 1]} : vector<8x128xf32> to vector<8x32xf32>
    %65 = arith.truncf %64 : vector<8x32xf32> to vector<8x32xbf16>
    %cst_29 = arith.constant dense<0.000000e+00> : vector<8x8xf32>
    %66 = tpu.matmul %61, %63, %cst_29 {dimension_numbers = #tpu.dot_dimension_numbers<[1], [1], [0], [0], [0, 0, 1, 0], [], []>} : vector<8x32xbf16>, vector<8x32xbf16>, vector<8x8xf32> -> vector<8x8xf32>
    %cst_30 = arith.constant dense<0xFF800000> : vector<8xf32>
    %67 = vector.multi_reduction <maximumf>, %66, %cst_30 [1] : vector<8x8xf32> to vector<8xf32>
    %68 = vector.shape_cast %67 : vector<8xf32> to vector<8x1xf32>
    %69 = vector.broadcast %68 : vector<8x1xf32> to vector<8x8xf32>
    %70 = arith.subf %66, %69 : vector<8x8xf32>
    %71 = math.exp %70 : vector<8x8xf32>
    %cst_31 = arith.constant dense<0.000000e+00> : vector<8xf32>
    %72 = vector.multi_reduction <add>, %71, %cst_31 [1] : vector<8x8xf32> to vector<8xf32>
    %73 = vector.shape_cast %72 : vector<8xf32> to vector<8x1xf32>
    %74 = vector.broadcast %73 : vector<8x1xf32> to vector<8x8xf32>
    %75 = arith.divf %71, %74 : vector<8x8xf32>
    %76 = arith.truncf %75 : vector<8x8xf32> to vector<8x8xbf16>
    %cst_32 = arith.constant dense<0.000000e+00> : vector<8x32xf32>
    %77 = tpu.matmul %76, %65, %cst_32 {dimension_numbers = #tpu.dot_dimension_numbers<[1], [0], [0], [1], [0, 0, 1, 1], [], []>} : vector<8x8xbf16>, vector<8x32xbf16>, vector<8x32xf32> -> vector<8x32xf32>
    %c0_33 = arith.constant 0 : index
    %c64 = arith.constant 64 : index
    %78 = vector.load %arg27[%c0_33, %c64] : memref<8x128xf32, #tpu.memory_space<vmem>>, vector<8x32xf32>
    tpu.vector_store %arg27[%c0_33, %c64], %77 {strides = array<i32>} : memref<8x128xf32, #tpu.memory_space<vmem>>, vector<8x32xf32>,
    %79 = vector.extract_strided_slice %15 {offsets = [0, 96], sizes = [8, 32], strides = [1, 1]} : vector<8x128xf32> to vector<8x32xf32>
    %80 = arith.truncf %79 : vector<8x32xf32> to vector<8x32xbf16>
    %81 = vector.extract_strided_slice %16 {offsets = [0, 96], sizes = [8, 32], strides = [1, 1]} : vector<8x128xf32> to vector<8x32xf32>
    %82 = arith.truncf %81 : vector<8x32xf32> to vector<8x32xbf16>
    %83 = vector.extract_strided_slice %17 {offsets = [0, 96], sizes = [8, 32], strides = [1, 1]} : vector<8x128xf32> to vector<8x32xf32>
    %84 = arith.truncf %83 : vector<8x32xf32> to vector<8x32xbf16>
    %cst_34 = arith.constant dense<0.000000e+00> : vector<8x8xf32>
    %85 = tpu.matmul %80, %82, %cst_34 {dimension_numbers = #tpu.dot_dimension_numbers<[1], [1], [0], [0], [0, 0, 1, 0], [], []>} : vector<8x32xbf16>, vector<8x32xbf16>, vector<8x8xf32> -> vector<8x8xf32>
    %cst_35 = arith.constant dense<0xFF800000> : vector<8xf32>
    %86 = vector.multi_reduction <maximumf>, %85, %cst_35 [1] : vector<8x8xf32> to vector<8xf32>
    %87 = vector.shape_cast %86 : vector<8xf32> to vector<8x1xf32>
    %88 = vector.broadcast %87 : vector<8x1xf32> to vector<8x8xf32>
    %89 = arith.subf %85, %88 : vector<8x8xf32>
    %90 = math.exp %89 : vector<8x8xf32>
    %cst_36 = arith.constant dense<0.000000e+00> : vector<8xf32>
    %91 = vector.multi_reduction <add>, %90, %cst_36 [1] : vector<8x8xf32> to vector<8xf32>
    %92 = vector.shape_cast %91 : vector<8xf32> to vector<8x1xf32>
    %93 = vector.broadcast %92 : vector<8x1xf32> to vector<8x8xf32>
    %94 = arith.divf %90, %93 : vector<8x8xf32>
    %95 = arith.truncf %94 : vector<8x8xf32> to vector<8x8xbf16>
    %cst_37 = arith.constant dense<0.000000e+00> : vector<8x32xf32>
    %96 = tpu.matmul %95, %84, %cst_37 {dimension_numbers = #tpu.dot_dimension_numbers<[1], [0], [0], [1], [0, 0, 1, 1], [], []>} : vector<8x8xbf16>, vector<8x32xbf16>, vector<8x32xf32> -> vector<8x32xf32>
    %c0_38 = arith.constant 0 : index
    %c96 = arith.constant 96 : index
    %97 = vector.load %arg27[%c0_38, %c96] : memref<8x128xf32, #tpu.memory_space<vmem>>, vector<8x32xf32>
    tpu.vector_store %arg27[%c0_38, %c96], %96 {strides = array<i32>} : memref<8x128xf32, #tpu.memory_space<vmem>>, vector<8x32xf32>,
    %c0_39 = arith.constant 0 : index
    %c0_40 = arith.constant 0 : index
    %98 = vector.load %arg27[%c0_39, %c0_40] : memref<8x128xf32, #tpu.memory_space<vmem>>, vector<8x128xf32>
    %99 = arith.truncf %98 : vector<8x128xf32> to vector<8x128xbf16>
    %cst_41 = arith.constant dense<0.000000e+00> : vector<8x128xf32>
    %100 = tpu.matmul %99, %19, %cst_41 {dimension_numbers = #tpu.dot_dimension_numbers<[1], [0], [0], [1], [0, 0, 1, 1], [], []>} : vector<8x128xbf16>, vector<128x128xbf16>, vector<8x128xf32> -> vector<8x128xf32>
    %101 = vector.broadcast %21 : vector<1x128xf32> to vector<8x128xf32>
    %102 = arith.addf %100, %101 : vector<8x128xf32>
    %103 = arith.addf %4, %102 : vector<8x128xf32>
    %c0_42 = arith.constant 0 : index
    %c0_43 = arith.constant 0 : index
    %c0_44 = arith.constant 0 : index
    %104 = vector.load %arg8[%c0_42, %c0_43, %c0_44] : memref<1x1x128xf32, #tpu.memory_space<vmem>>, vector<1x1x128xf32>
    %105 = vector.shape_cast %104 : vector<1x1x128xf32> to vector<1x128xf32>
    %c0_45 = arith.constant 0 : index
    %c0_46 = arith.constant 0 : index
    %c0_47 = arith.constant 0 : index
    %106 = vector.load %arg9[%c0_45, %c0_46, %c0_47] : memref<1x1x128xf32, #tpu.memory_space<vmem>>, vector<1x1x128xf32>
    %107 = vector.shape_cast %106 : vector<1x1x128xf32> to vector<1x128xf32>
    %cst_48 = arith.constant dense<0.000000e+00> : vector<8xf32>
    %108 = vector.multi_reduction <add>, %103, %cst_48 [1] : vector<8x128xf32> to vector<8xf32>
    %109 = vector.shape_cast %108 : vector<8xf32> to vector<8x1xf32>
    %cst_49 = arith.constant 1.280000e+02 : f32
    %110 = vector.broadcast %cst_49 : f32 to vector<8x1xf32>
    %111 = arith.divf %109, %110 : vector<8x1xf32>
    %112 = vector.broadcast %111 : vector<8x1xf32> to vector<8x128xf32>
    %113 = arith.subf %103, %112 : vector<8x128xf32>
    %114 = arith.mulf %113, %113 : vector<8x128xf32>
    %cst_50 = arith.constant dense<0.000000e+00> : vector<8xf32>
    %115 = vector.multi_reduction <add>, %114, %cst_50 [1] : vector<8x128xf32> to vector<8xf32>
    %116 = vector.shape_cast %115 : vector<8xf32> to vector<8x1xf32>
    %cst_51 = arith.constant 1.280000e+02 : f32
    %117 = vector.broadcast %cst_51 : f32 to vector<8x1xf32>
    %118 = arith.divf %116, %117 : vector<8x1xf32>
    %119 = vector.broadcast %111 : vector<8x1xf32> to vector<8x128xf32>
    %120 = arith.subf %103, %119 : vector<8x128xf32>
    %cst_52 = arith.constant 9.99999997E-7 : f32
    %121 = vector.broadcast %cst_52 : f32 to vector<8x1xf32>
    %122 = arith.addf %118, %121 : vector<8x1xf32>
    %123 = math.rsqrt %122 : vector<8x1xf32>
    %124 = vector.broadcast %123 : vector<8x1xf32> to vector<8x128xf32>
    %125 = arith.mulf %120, %124 : vector<8x128xf32>
    %126 = vector.broadcast %105 : vector<1x128xf32> to vector<8x128xf32>
    %127 = arith.mulf %125, %126 : vector<8x128xf32>
    %128 = vector.broadcast %107 : vector<1x128xf32> to vector<8x128xf32>
    %129 = arith.addf %127, %128 : vector<8x128xf32>
    %130 = arith.truncf %129 : vector<8x128xf32> to vector<8x128xbf16>
    %c0_53 = arith.constant 0 : index
    %c0_54 = arith.constant 0 : index
    %c0_55 = arith.constant 0 : index
    %131 = vector.load %arg10[%c0_53, %c0_54, %c0_55] : memref<1x128x128xbf16, #tpu.memory_space<vmem>>, vector<1x128x128xbf16>
    %132 = vector.shape_cast %131 : vector<1x128x128xbf16> to vector<128x128xbf16>
    %cst_56 = arith.constant dense<0.000000e+00> : vector<8x128xf32>
    %133 = tpu.matmul %130, %132, %cst_56 {dimension_numbers = #tpu.dot_dimension_numbers<[1], [0], [0], [1], [0, 0, 1, 1], [], []>} : vector<8x128xbf16>, vector<128x128xbf16>, vector<8x128xf32> -> vector<8x128xf32>
    %c0_57 = arith.constant 0 : index
    %c0_58 = arith.constant 0 : index
    %c0_59 = arith.constant 0 : index
    %134 = vector.load %arg11[%c0_57, %c0_58, %c0_59] : memref<1x1x128xf32, #tpu.memory_space<vmem>>, vector<1x1x128xf32>
    %135 = vector.shape_cast %134 : vector<1x1x128xf32> to vector<1x128xf32>
    %136 = vector.broadcast %135 : vector<1x128xf32> to vector<8x128xf32>
    %137 = arith.addf %133, %136 : vector<8x128xf32>
    %138 = arith.truncf %6 : vector<16x128xf32> to vector<16x128xbf16>
    %c0_60 = arith.constant 0 : index
    %c0_61 = arith.constant 0 : index
    %c0_62 = arith.constant 0 : index
    %139 = vector.load %arg12[%c0_60, %c0_61, %c0_62] : memref<1x128x256xbf16, #tpu.memory_space<vmem>>, vector<1x128x256xbf16>
    %140 = vector.shape_cast %139 : vector<1x128x256xbf16> to vector<128x256xbf16>
    %cst_63 = arith.constant dense<0.000000e+00> : vector<16x256xf32>
    %141 = tpu.matmul %138, %140, %cst_63 {dimension_numbers = #tpu.dot_dimension_numbers<[1], [0], [0], [1], [0, 0, 1, 1], [], []>} : vector<16x128xbf16>, vector<128x256xbf16>, vector<16x256xf32> -> vector<16x256xf32>
    %c0_64 = arith.constant 0 : index
    %c0_65 = arith.constant 0 : index
    %c0_66 = arith.constant 0 : index
    %142 = vector.load %arg13[%c0_64, %c0_65, %c0_66] : memref<1x1x256xf32, #tpu.memory_space<vmem>>, vector<1x1x256xf32>
    %143 = vector.shape_cast %142 : vector<1x1x256xf32> to vector<1x256xf32>
    %144 = vector.broadcast %143 : vector<1x256xf32> to vector<16x256xf32>
    %145 = arith.addf %141, %144 : vector<16x256xf32>
    %146 = vector.extract_strided_slice %145 {offsets = [0, 0], sizes = [16, 128], strides = [1, 1]} : vector<16x256xf32> to vector<16x128xf32>
    %147 = vector.extract_strided_slice %145 {offsets = [0, 128], sizes = [16, 128], strides = [1, 1]} : vector<16x256xf32> to vector<16x128xf32>
    %c0_67 = arith.constant 0 : index
    %c0_68 = arith.constant 0 : index
    %c0_69 = arith.constant 0 : index
    %148 = vector.load %arg14[%c0_67, %c0_68, %c0_69] : memref<1x128x128xbf16, #tpu.memory_space<vmem>>, vector<1x128x128xbf16>
    %149 = vector.shape_cast %148 : vector<1x128x128xbf16> to vector<128x128xbf16>
    %c0_70 = arith.constant 0 : index
    %c0_71 = arith.constant 0 : index
    %c0_72 = arith.constant 0 : index
    %150 = vector.load %arg15[%c0_70, %c0_71, %c0_72] : memref<1x1x128xf32, #tpu.memory_space<vmem>>, vector<1x1x128xf32>
    %151 = vector.shape_cast %150 : vector<1x1x128xf32> to vector<1x128xf32>
    %152 = vector.extract_strided_slice %137 {offsets = [0, 0], sizes = [8, 32], strides = [1, 1]} : vector<8x128xf32> to vector<8x32xf32>
    %153 = arith.truncf %152 : vector<8x32xf32> to vector<8x32xbf16>
    %154 = vector.extract_strided_slice %146 {offsets = [0, 0], sizes = [16, 32], strides = [1, 1]} : vector<16x128xf32> to vector<16x32xf32>
    %155 = arith.truncf %154 : vector<16x32xf32> to vector<16x32xbf16>
    %156 = vector.extract_strided_slice %147 {offsets = [0, 0], sizes = [16, 32], strides = [1, 1]} : vector<16x128xf32> to vector<16x32xf32>
    %157 = arith.truncf %156 : vector<16x32xf32> to vector<16x32xbf16>
    %cst_73 = arith.constant dense<0.000000e+00> : vector<8x16xf32>
    %158 = tpu.matmul %153, %155, %cst_73 {dimension_numbers = #tpu.dot_dimension_numbers<[1], [1], [0], [0], [0, 0, 1, 0], [], []>} : vector<8x32xbf16>, vector<16x32xbf16>, vector<8x16xf32> -> vector<8x16xf32>
    %cst_74 = arith.constant dense<0xFF800000> : vector<8xf32>
    %159 = vector.multi_reduction <maximumf>, %158, %cst_74 [1] : vector<8x16xf32> to vector<8xf32>
    %160 = vector.shape_cast %159 : vector<8xf32> to vector<8x1xf32>
    %161 = vector.broadcast %160 : vector<8x1xf32> to vector<8x16xf32>
    %162 = arith.subf %158, %161 : vector<8x16xf32>
    %163 = math.exp %162 : vector<8x16xf32>
    %cst_75 = arith.constant dense<0.000000e+00> : vector<8xf32>
    %164 = vector.multi_reduction <add>, %163, %cst_75 [1] : vector<8x16xf32> to vector<8xf32>
    %165 = vector.shape_cast %164 : vector<8xf32> to vector<8x1xf32>
    %166 = vector.broadcast %165 : vector<8x1xf32> to vector<8x16xf32>
    %167 = arith.divf %163, %166 : vector<8x16xf32>
    %168 = arith.truncf %167 : vector<8x16xf32> to vector<8x16xbf16>
    %cst_76 = arith.constant dense<0.000000e+00> : vector<8x32xf32>
    %169 = tpu.matmul %168, %157, %cst_76 {dimension_numbers = #tpu.dot_dimension_numbers<[1], [0], [0], [1], [0, 0, 1, 1], [], []>} : vector<8x16xbf16>, vector<16x32xbf16>, vector<8x32xf32> -> vector<8x32xf32>
    %c0_77 = arith.constant 0 : index
    %c0_78 = arith.constant 0 : index
    %170 = vector.load %arg27[%c0_77, %c0_78] : memref<8x128xf32, #tpu.memory_space<vmem>>, vector<8x32xf32>
    tpu.vector_store %arg27[%c0_77, %c0_78], %169 {strides = array<i32>} : memref<8x128xf32, #tpu.memory_space<vmem>>, vector<8x32xf32>,
    %171 = vector.extract_strided_slice %137 {offsets = [0, 32], sizes = [8, 32], strides = [1, 1]} : vector<8x128xf32> to vector<8x32xf32>
    %172 = arith.truncf %171 : vector<8x32xf32> to vector<8x32xbf16>
    %173 = vector.extract_strided_slice %146 {offsets = [0, 32], sizes = [16, 32], strides = [1, 1]} : vector<16x128xf32> to vector<16x32xf32>
    %174 = arith.truncf %173 : vector<16x32xf32> to vector<16x32xbf16>
    %175 = vector.extract_strided_slice %147 {offsets = [0, 32], sizes = [16, 32], strides = [1, 1]} : vector<16x128xf32> to vector<16x32xf32>
    %176 = arith.truncf %175 : vector<16x32xf32> to vector<16x32xbf16>
    %cst_79 = arith.constant dense<0.000000e+00> : vector<8x16xf32>
    %177 = tpu.matmul %172, %174, %cst_79 {dimension_numbers = #tpu.dot_dimension_numbers<[1], [1], [0], [0], [0, 0, 1, 0], [], []>} : vector<8x32xbf16>, vector<16x32xbf16>, vector<8x16xf32> -> vector<8x16xf32>
    %cst_80 = arith.constant dense<0xFF800000> : vector<8xf32>
    %178 = vector.multi_reduction <maximumf>, %177, %cst_80 [1] : vector<8x16xf32> to vector<8xf32>
    %179 = vector.shape_cast %178 : vector<8xf32> to vector<8x1xf32>
    %180 = vector.broadcast %179 : vector<8x1xf32> to vector<8x16xf32>
    %181 = arith.subf %177, %180 : vector<8x16xf32>
    %182 = math.exp %181 : vector<8x16xf32>
    %cst_81 = arith.constant dense<0.000000e+00> : vector<8xf32>
    %183 = vector.multi_reduction <add>, %182, %cst_81 [1] : vector<8x16xf32> to vector<8xf32>
    %184 = vector.shape_cast %183 : vector<8xf32> to vector<8x1xf32>
    %185 = vector.broadcast %184 : vector<8x1xf32> to vector<8x16xf32>
    %186 = arith.divf %182, %185 : vector<8x16xf32>
    %187 = arith.truncf %186 : vector<8x16xf32> to vector<8x16xbf16>
    %cst_82 = arith.constant dense<0.000000e+00> : vector<8x32xf32>
    %188 = tpu.matmul %187, %176, %cst_82 {dimension_numbers = #tpu.dot_dimension_numbers<[1], [0], [0], [1], [0, 0, 1, 1], [], []>} : vector<8x16xbf16>, vector<16x32xbf16>, vector<8x32xf32> -> vector<8x32xf32>
    %c0_83 = arith.constant 0 : index
    %c32_84 = arith.constant 32 : index
    %189 = vector.load %arg27[%c0_83, %c32_84] : memref<8x128xf32, #tpu.memory_space<vmem>>, vector<8x32xf32>
    tpu.vector_store %arg27[%c0_83, %c32_84], %188 {strides = array<i32>} : memref<8x128xf32, #tpu.memory_space<vmem>>, vector<8x32xf32>,
    %190 = vector.extract_strided_slice %137 {offsets = [0, 64], sizes = [8, 32], strides = [1, 1]} : vector<8x128xf32> to vector<8x32xf32>
    %191 = arith.truncf %190 : vector<8x32xf32> to vector<8x32xbf16>
    %192 = vector.extract_strided_slice %146 {offsets = [0, 64], sizes = [16, 32], strides = [1, 1]} : vector<16x128xf32> to vector<16x32xf32>
    %193 = arith.truncf %192 : vector<16x32xf32> to vector<16x32xbf16>
    %194 = vector.extract_strided_slice %147 {offsets = [0, 64], sizes = [16, 32], strides = [1, 1]} : vector<16x128xf32> to vector<16x32xf32>
    %195 = arith.truncf %194 : vector<16x32xf32> to vector<16x32xbf16>
    %cst_85 = arith.constant dense<0.000000e+00> : vector<8x16xf32>
    %196 = tpu.matmul %191, %193, %cst_85 {dimension_numbers = #tpu.dot_dimension_numbers<[1], [1], [0], [0], [0, 0, 1, 0], [], []>} : vector<8x32xbf16>, vector<16x32xbf16>, vector<8x16xf32> -> vector<8x16xf32>
    %cst_86 = arith.constant dense<0xFF800000> : vector<8xf32>
    %197 = vector.multi_reduction <maximumf>, %196, %cst_86 [1] : vector<8x16xf32> to vector<8xf32>
    %198 = vector.shape_cast %197 : vector<8xf32> to vector<8x1xf32>
    %199 = vector.broadcast %198 : vector<8x1xf32> to vector<8x16xf32>
    %200 = arith.subf %196, %199 : vector<8x16xf32>
    %201 = math.exp %200 : vector<8x16xf32>
    %cst_87 = arith.constant dense<0.000000e+00> : vector<8xf32>
    %202 = vector.multi_reduction <add>, %201, %cst_87 [1] : vector<8x16xf32> to vector<8xf32>
    %203 = vector.shape_cast %202 : vector<8xf32> to vector<8x1xf32>
    %204 = vector.broadcast %203 : vector<8x1xf32> to vector<8x16xf32>
    %205 = arith.divf %201, %204 : vector<8x16xf32>
    %206 = arith.truncf %205 : vector<8x16xf32> to vector<8x16xbf16>
    %cst_88 = arith.constant dense<0.000000e+00> : vector<8x32xf32>
    %207 = tpu.matmul %206, %195, %cst_88 {dimension_numbers = #tpu.dot_dimension_numbers<[1], [0], [0], [1], [0, 0, 1, 1], [], []>} : vector<8x16xbf16>, vector<16x32xbf16>, vector<8x32xf32> -> vector<8x32xf32>
    %c0_89 = arith.constant 0 : index
    %c64_90 = arith.constant 64 : index
    %208 = vector.load %arg27[%c0_89, %c64_90] : memref<8x128xf32, #tpu.memory_space<vmem>>, vector<8x32xf32>
    tpu.vector_store %arg27[%c0_89, %c64_90], %207 {strides = array<i32>} : memref<8x128xf32, #tpu.memory_space<vmem>>, vector<8x32xf32>,
    %209 = vector.extract_strided_slice %137 {offsets = [0, 96], sizes = [8, 32], strides = [1, 1]} : vector<8x128xf32> to vector<8x32xf32>
    %210 = arith.truncf %209 : vector<8x32xf32> to vector<8x32xbf16>
    %211 = vector.extract_strided_slice %146 {offsets = [0, 96], sizes = [16, 32], strides = [1, 1]} : vector<16x128xf32> to vector<16x32xf32>
    %212 = arith.truncf %211 : vector<16x32xf32> to vector<16x32xbf16>
    %213 = vector.extract_strided_slice %147 {offsets = [0, 96], sizes = [16, 32], strides = [1, 1]} : vector<16x128xf32> to vector<16x32xf32>
    %214 = arith.truncf %213 : vector<16x32xf32> to vector<16x32xbf16>
    %cst_91 = arith.constant dense<0.000000e+00> : vector<8x16xf32>
    %215 = tpu.matmul %210, %212, %cst_91 {dimension_numbers = #tpu.dot_dimension_numbers<[1], [1], [0], [0], [0, 0, 1, 0], [], []>} : vector<8x32xbf16>, vector<16x32xbf16>, vector<8x16xf32> -> vector<8x16xf32>
    %cst_92 = arith.constant dense<0xFF800000> : vector<8xf32>
    %216 = vector.multi_reduction <maximumf>, %215, %cst_92 [1] : vector<8x16xf32> to vector<8xf32>
    %217 = vector.shape_cast %216 : vector<8xf32> to vector<8x1xf32>
    %218 = vector.broadcast %217 : vector<8x1xf32> to vector<8x16xf32>
    %219 = arith.subf %215, %218 : vector<8x16xf32>
    %220 = math.exp %219 : vector<8x16xf32>
    %cst_93 = arith.constant dense<0.000000e+00> : vector<8xf32>
    %221 = vector.multi_reduction <add>, %220, %cst_93 [1] : vector<8x16xf32> to vector<8xf32>
    %222 = vector.shape_cast %221 : vector<8xf32> to vector<8x1xf32>
    %223 = vector.broadcast %222 : vector<8x1xf32> to vector<8x16xf32>
    %224 = arith.divf %220, %223 : vector<8x16xf32>
    %225 = arith.truncf %224 : vector<8x16xf32> to vector<8x16xbf16>
    %cst_94 = arith.constant dense<0.000000e+00> : vector<8x32xf32>
    %226 = tpu.matmul %225, %214, %cst_94 {dimension_numbers = #tpu.dot_dimension_numbers<[1], [0], [0], [1], [0, 0, 1, 1], [], []>} : vector<8x16xbf16>, vector<16x32xbf16>, vector<8x32xf32> -> vector<8x32xf32>
    %c0_95 = arith.constant 0 : index
    %c96_96 = arith.constant 96 : index
    %227 = vector.load %arg27[%c0_95, %c96_96] : memref<8x128xf32, #tpu.memory_space<vmem>>, vector<8x32xf32>
    tpu.vector_store %arg27[%c0_95, %c96_96], %226 {strides = array<i32>} : memref<8x128xf32, #tpu.memory_space<vmem>>, vector<8x32xf32>,
    %c0_97 = arith.constant 0 : index
    %c0_98 = arith.constant 0 : index
    %228 = vector.load %arg27[%c0_97, %c0_98] : memref<8x128xf32, #tpu.memory_space<vmem>>, vector<8x128xf32>
    %229 = arith.truncf %228 : vector<8x128xf32> to vector<8x128xbf16>
    %cst_99 = arith.constant dense<0.000000e+00> : vector<8x128xf32>
    %230 = tpu.matmul %229, %149, %cst_99 {dimension_numbers = #tpu.dot_dimension_numbers<[1], [0], [0], [1], [0, 0, 1, 1], [], []>} : vector<8x128xbf16>, vector<128x128xbf16>, vector<8x128xf32> -> vector<8x128xf32>
    %231 = vector.broadcast %151 : vector<1x128xf32> to vector<8x128xf32>
    %232 = arith.addf %230, %231 : vector<8x128xf32>
    %233 = arith.addf %129, %232 : vector<8x128xf32>
    %c0_100 = arith.constant 0 : index
    %c0_101 = arith.constant 0 : index
    %c0_102 = arith.constant 0 : index
    %234 = vector.load %arg16[%c0_100, %c0_101, %c0_102] : memref<1x1x128xf32, #tpu.memory_space<vmem>>, vector<1x1x128xf32>
    %235 = vector.shape_cast %234 : vector<1x1x128xf32> to vector<1x128xf32>
    %c0_103 = arith.constant 0 : index
    %c0_104 = arith.constant 0 : index
    %c0_105 = arith.constant 0 : index
    %236 = vector.load %arg17[%c0_103, %c0_104, %c0_105] : memref<1x1x128xf32, #tpu.memory_space<vmem>>, vector<1x1x128xf32>
    %237 = vector.shape_cast %236 : vector<1x1x128xf32> to vector<1x128xf32>
    %cst_106 = arith.constant dense<0.000000e+00> : vector<8xf32>
    %238 = vector.multi_reduction <add>, %233, %cst_106 [1] : vector<8x128xf32> to vector<8xf32>
    %239 = vector.shape_cast %238 : vector<8xf32> to vector<8x1xf32>
    %cst_107 = arith.constant 1.280000e+02 : f32
    %240 = vector.broadcast %cst_107 : f32 to vector<8x1xf32>
    %241 = arith.divf %239, %240 : vector<8x1xf32>
    %242 = vector.broadcast %241 : vector<8x1xf32> to vector<8x128xf32>
    %243 = arith.subf %233, %242 : vector<8x128xf32>
    %244 = arith.mulf %243, %243 : vector<8x128xf32>
    %cst_108 = arith.constant dense<0.000000e+00> : vector<8xf32>
    %245 = vector.multi_reduction <add>, %244, %cst_108 [1] : vector<8x128xf32> to vector<8xf32>
    %246 = vector.shape_cast %245 : vector<8xf32> to vector<8x1xf32>
    %cst_109 = arith.constant 1.280000e+02 : f32
    %247 = vector.broadcast %cst_109 : f32 to vector<8x1xf32>
    %248 = arith.divf %246, %247 : vector<8x1xf32>
    %249 = vector.broadcast %241 : vector<8x1xf32> to vector<8x128xf32>
    %250 = arith.subf %233, %249 : vector<8x128xf32>
    %cst_110 = arith.constant 9.99999997E-7 : f32
    %251 = vector.broadcast %cst_110 : f32 to vector<8x1xf32>
    %252 = arith.addf %248, %251 : vector<8x1xf32>
    %253 = math.rsqrt %252 : vector<8x1xf32>
    %254 = vector.broadcast %253 : vector<8x1xf32> to vector<8x128xf32>
    %255 = arith.mulf %250, %254 : vector<8x128xf32>
    %256 = vector.broadcast %235 : vector<1x128xf32> to vector<8x128xf32>
    %257 = arith.mulf %255, %256 : vector<8x128xf32>
    %258 = vector.broadcast %237 : vector<1x128xf32> to vector<8x128xf32>
    %259 = arith.addf %257, %258 : vector<8x128xf32>
    %260 = arith.truncf %259 : vector<8x128xf32> to vector<8x128xbf16>
    %c0_111 = arith.constant 0 : index
    %c0_112 = arith.constant 0 : index
    %c0_113 = arith.constant 0 : index
    %261 = vector.load %arg18[%c0_111, %c0_112, %c0_113] : memref<1x128x256xbf16, #tpu.memory_space<vmem>>, vector<1x128x256xbf16>
    %262 = vector.shape_cast %261 : vector<1x128x256xbf16> to vector<128x256xbf16>
    %cst_114 = arith.constant dense<0.000000e+00> : vector<8x256xf32>
    %263 = tpu.matmul %260, %262, %cst_114 {dimension_numbers = #tpu.dot_dimension_numbers<[1], [0], [0], [1], [0, 0, 1, 1], [], []>} : vector<8x128xbf16>, vector<128x256xbf16>, vector<8x256xf32> -> vector<8x256xf32>
    %c0_115 = arith.constant 0 : index
    %c0_116 = arith.constant 0 : index
    %c0_117 = arith.constant 0 : index
    %264 = vector.load %arg19[%c0_115, %c0_116, %c0_117] : memref<1x1x256xf32, #tpu.memory_space<vmem>>, vector<1x1x256xf32>
    %265 = vector.shape_cast %264 : vector<1x1x256xf32> to vector<1x256xf32>
    %266 = vector.broadcast %265 : vector<1x256xf32> to vector<8x256xf32>
    %267 = arith.addf %263, %266 : vector<8x256xf32>
    %cst_118 = arith.constant 0.000000e+00 : f32
    %268 = vector.broadcast %cst_118 : f32 to vector<8x256xf32>
    %269 = arith.maximumf %267, %268 : vector<8x256xf32>
    %270 = arith.truncf %269 : vector<8x256xf32> to vector<8x256xbf16>
    %c0_119 = arith.constant 0 : index
    %c0_120 = arith.constant 0 : index
    %c0_121 = arith.constant 0 : index
    %271 = vector.load %arg20[%c0_119, %c0_120, %c0_121] : memref<1x256x128xbf16, #tpu.memory_space<vmem>>, vector<1x256x128xbf16>
    %272 = vector.shape_cast %271 : vector<1x256x128xbf16> to vector<256x128xbf16>
    %cst_122 = arith.constant dense<0.000000e+00> : vector<8x128xf32>
    %273 = tpu.matmul %270, %272, %cst_122 {dimension_numbers = #tpu.dot_dimension_numbers<[1], [0], [0], [1], [0, 0, 1, 1], [], []>} : vector<8x256xbf16>, vector<256x128xbf16>, vector<8x128xf32> -> vector<8x128xf32>
    %c0_123 = arith.constant 0 : index
    %c0_124 = arith.constant 0 : index
    %c0_125 = arith.constant 0 : index
    %274 = vector.load %arg21[%c0_123, %c0_124, %c0_125] : memref<1x1x128xf32, #tpu.memory_space<vmem>>, vector<1x1x128xf32>
    %275 = vector.shape_cast %274 : vector<1x1x128xf32> to vector<1x128xf32>
    %276 = vector.broadcast %275 : vector<1x128xf32> to vector<8x128xf32>
    %277 = arith.addf %273, %276 : vector<8x128xf32>
    %278 = arith.addf %277, %232 : vector<8x128xf32>
    %c0_126 = arith.constant 0 : index
    %c0_127 = arith.constant 0 : index
    %c0_128 = arith.constant 0 : index
    %279 = vector.load %arg22[%c0_126, %c0_127, %c0_128] : memref<1x1x128xf32, #tpu.memory_space<vmem>>, vector<1x1x128xf32>
    %280 = vector.shape_cast %279 : vector<1x1x128xf32> to vector<1x128xf32>
    %c0_129 = arith.constant 0 : index
    %c0_130 = arith.constant 0 : index
    %c0_131 = arith.constant 0 : index
    %281 = vector.load %arg23[%c0_129, %c0_130, %c0_131] : memref<1x1x128xf32, #tpu.memory_space<vmem>>, vector<1x1x128xf32>
    %282 = vector.shape_cast %281 : vector<1x1x128xf32> to vector<1x128xf32>
    %cst_132 = arith.constant dense<0.000000e+00> : vector<8xf32>
    %283 = vector.multi_reduction <add>, %278, %cst_132 [1] : vector<8x128xf32> to vector<8xf32>
    %284 = vector.shape_cast %283 : vector<8xf32> to vector<8x1xf32>
    %cst_133 = arith.constant 1.280000e+02 : f32
    %285 = vector.broadcast %cst_133 : f32 to vector<8x1xf32>
    %286 = arith.divf %284, %285 : vector<8x1xf32>
    %287 = vector.broadcast %286 : vector<8x1xf32> to vector<8x128xf32>
    %288 = arith.subf %278, %287 : vector<8x128xf32>
    %289 = arith.mulf %288, %288 : vector<8x128xf32>
    %cst_134 = arith.constant dense<0.000000e+00> : vector<8xf32>
    %290 = vector.multi_reduction <add>, %289, %cst_134 [1] : vector<8x128xf32> to vector<8xf32>
    %291 = vector.shape_cast %290 : vector<8xf32> to vector<8x1xf32>
    %cst_135 = arith.constant 1.280000e+02 : f32
    %292 = vector.broadcast %cst_135 : f32 to vector<8x1xf32>
    %293 = arith.divf %291, %292 : vector<8x1xf32>
    %294 = vector.broadcast %286 : vector<8x1xf32> to vector<8x128xf32>
    %295 = arith.subf %278, %294 : vector<8x128xf32>
    %cst_136 = arith.constant 9.99999997E-7 : f32
    %296 = vector.broadcast %cst_136 : f32 to vector<8x1xf32>
    %297 = arith.addf %293, %296 : vector<8x1xf32>
    %298 = math.rsqrt %297 : vector<8x1xf32>
    %299 = vector.broadcast %298 : vector<8x1xf32> to vector<8x128xf32>
    %300 = arith.mulf %295, %299 : vector<8x128xf32>
    %301 = vector.broadcast %280 : vector<1x128xf32> to vector<8x128xf32>
    %302 = arith.mulf %300, %301 : vector<8x128xf32>
    %303 = vector.broadcast %282 : vector<1x128xf32> to vector<8x128xf32>
    %304 = arith.addf %302, %303 : vector<8x128xf32>
    %c1_i32 = arith.constant 1 : i32
    %305 = arith.cmpi slt, %arg1, %c1_i32 : i32
    %306 = arith.extui %305 : i1 to i32
    %c0_i32_137 = arith.constant 0 : i32
    %307 = arith.cmpi ne, %306, %c0_i32_137 : i32
    scf.if %307 {
      %c0_140 = arith.constant 0 : index
      %c0_141 = arith.constant 0 : index
      %c0_142 = arith.constant 0 : index
      %311 = vector.load %arg26[%c0_140, %c0_141, %c0_142] : memref<1x8x128xf32, #tpu.memory_space<vmem>>, vector<1x8x128xf32>
      %312 = vector.shape_cast %311 : vector<1x8x128xf32> to vector<8x128xf32>
      %313 = vector.shape_cast %304 : vector<8x128xf32> to vector<1x8x128xf32>
      tpu.vector_store %arg26[%c0_140, %c0_141, %c0_142], %313 {strides = array<i32>} : memref<1x8x128xf32, #tpu.memory_space<vmem>>, vector<1x8x128xf32>,
    } else {
    }
    %c1_i32_138 = arith.constant 1 : i32
    %308 = arith.cmpi eq, %arg1, %c1_i32_138 : i32
    %309 = arith.extui %308 : i1 to i32
    %c0_i32_139 = arith.constant 0 : i32
    %310 = arith.cmpi ne, %309, %c0_i32_139 : i32
    scf.if %310 {
      %c0_140 = arith.constant 0 : index
      %c0_141 = arith.constant 0 : index
      %311 = vector.load %arg24[%c0_140, %c0_141] : memref<1x128xf32, #tpu.memory_space<vmem>>, vector<1x128xf32>
      %c0_142 = arith.constant 0 : index
      %c0_143 = arith.constant 0 : index
      %312 = vector.load %arg25[%c0_142, %c0_143] : memref<1x128xf32, #tpu.memory_space<vmem>>, vector<1x128xf32>
      %cst_144 = arith.constant dense<0.000000e+00> : vector<8xf32>
      %313 = vector.multi_reduction <add>, %304, %cst_144 [1] : vector<8x128xf32> to vector<8xf32>
      %314 = vector.shape_cast %313 : vector<8xf32> to vector<8x1xf32>
      %cst_145 = arith.constant 1.280000e+02 : f32
      %315 = vector.broadcast %cst_145 : f32 to vector<8x1xf32>
      %316 = arith.divf %314, %315 : vector<8x1xf32>
      %317 = vector.broadcast %316 : vector<8x1xf32> to vector<8x128xf32>
      %318 = arith.subf %304, %317 : vector<8x128xf32>
      %319 = arith.mulf %318, %318 : vector<8x128xf32>
      %cst_146 = arith.constant dense<0.000000e+00> : vector<8xf32>
      %320 = vector.multi_reduction <add>, %319, %cst_146 [1] : vector<8x128xf32> to vector<8xf32>
      %321 = vector.shape_cast %320 : vector<8xf32> to vector<8x1xf32>
      %cst_147 = arith.constant 1.280000e+02 : f32
      %322 = vector.broadcast %cst_147 : f32 to vector<8x1xf32>
      %323 = arith.divf %321, %322 : vector<8x1xf32>
      %324 = vector.broadcast %316 : vector<8x1xf32> to vector<8x128xf32>
      %325 = arith.subf %304, %324 : vector<8x128xf32>
      %cst_148 = arith.constant 9.99999997E-7 : f32
      %326 = vector.broadcast %cst_148 : f32 to vector<8x1xf32>
      %327 = arith.addf %323, %326 : vector<8x1xf32>
      %328 = math.rsqrt %327 : vector<8x1xf32>
      %329 = vector.broadcast %328 : vector<8x1xf32> to vector<8x128xf32>
      %330 = arith.mulf %325, %329 : vector<8x128xf32>
      %331 = vector.broadcast %311 : vector<1x128xf32> to vector<8x128xf32>
      %332 = arith.mulf %330, %331 : vector<8x128xf32>
      %333 = vector.broadcast %312 : vector<1x128xf32> to vector<8x128xf32>
      %334 = arith.addf %332, %333 : vector<8x128xf32>
      %c0_149 = arith.constant 0 : index
      %c0_150 = arith.constant 0 : index
      %c0_151 = arith.constant 0 : index
      %335 = vector.load %arg26[%c0_149, %c0_150, %c0_151] : memref<1x8x128xf32, #tpu.memory_space<vmem>>, vector<1x8x128xf32>
      %336 = vector.shape_cast %335 : vector<1x8x128xf32> to vector<8x128xf32>
      %337 = vector.shape_cast %334 : vector<8x128xf32> to vector<1x8x128xf32>
      tpu.vector_store %arg26[%c0_149, %c0_150, %c0_151], %337 {strides = array<i32>} : memref<1x8x128xf32, #tpu.memory_space<vmem>>, vector<1x8x128xf32>,
    } else {
    }
    return
  }
  func.func @transform_0(%arg0: i32, %arg1: i32) -> (i32, i32, i32) {
    %c0_i32 = arith.constant 0 : i32
    %c0_i32_0 = arith.constant 0 : i32
    %c0_i32_1 = arith.constant 0 : i32
    return %arg0, %c0_i32, %c0_i32_0 : i32, i32, i32
  }
  func.func @transform_1(%arg0: i32, %arg1: i32) -> (i32, i32, i32) {
    %c0_i32 = arith.constant 0 : i32
    %c0_i32_0 = arith.constant 0 : i32
    %c0_i32_1 = arith.constant 0 : i32
    return %arg0, %c0_i32, %c0_i32_0 : i32, i32, i32
  }
  func.func @transform_2(%arg0: i32, %arg1: i32) -> (i32, i32, i32) {
    %c0_i32 = arith.constant 0 : i32
    %c0_i32_0 = arith.constant 0 : i32
    %c0_i32_1 = arith.constant 0 : i32
    return %arg1, %c0_i32, %c0_i32_0 : i32, i32, i32
  }
  func.func @transform_3(%arg0: i32, %arg1: i32) -> (i32, i32, i32) {
    %c0_i32 = arith.constant 0 : i32
    %c0_i32_0 = arith.constant 0 : i32
    %c0_i32_1 = arith.constant 0 : i32
    return %arg1, %c0_i32, %c0_i32_0 : i32, i32, i32
  }
  func.func @transform_4(%arg0: i32, %arg1: i32) -> (i32, i32, i32) {
    %c0_i32 = arith.constant 0 : i32
    %c0_i32_0 = arith.constant 0 : i32
    %c0_i32_1 = arith.constant 0 : i32
    return %arg1, %c0_i32, %c0_i32_0 : i32, i32, i32
  }
  func.func @transform_5(%arg0: i32, %arg1: i32) -> (i32, i32, i32) {
    %c0_i32 = arith.constant 0 : i32
    %c0_i32_0 = arith.constant 0 : i32
    %c0_i32_1 = arith.constant 0 : i32
    return %arg1, %c0_i32, %c0_i32_0 : i32, i32, i32
  }
  func.func @transform_6(%arg0: i32, %arg1: i32) -> (i32, i32, i32) {
    %c0_i32 = arith.constant 0 : i32
    %c0_i32_0 = arith.constant 0 : i32
    %c0_i32_1 = arith.constant 0 : i32
    return %arg1, %c0_i32, %c0_i32_0 : i32, i32, i32
  }
  func.func @transform_7(%arg0: i32, %arg1: i32) -> (i32, i32, i32) {
    %c0_i32 = arith.constant 0 : i32
    %c0_i32_0 = arith.constant 0 : i32
    %c0_i32_1 = arith.constant 0 : i32
    return %arg1, %c0_i32, %c0_i32_0 : i32, i32, i32
  }
  func.func @transform_8(%arg0: i32, %arg1: i32) -> (i32, i32, i32) {
    %c0_i32 = arith.constant 0 : i32
    %c0_i32_0 = arith.constant 0 : i32
    %c0_i32_1 = arith.constant 0 : i32
    return %arg1, %c0_i32, %c0_i32_0 : i32, i32, i32
  }
  func.func @transform_9(%arg0: i32, %arg1: i32) -> (i32, i32, i32) {
    %c0_i32 = arith.constant 0 : i32
    %c0_i32_0 = arith.constant 0 : i32
    %c0_i32_1 = arith.constant 0 : i32
    return %arg1, %c0_i32, %c0_i32_0 : i32, i32, i32
  }
  func.func @transform_10(%arg0: i32, %arg1: i32) -> (i32, i32, i32) {
    %c0_i32 = arith.constant 0 : i32
    %c0_i32_0 = arith.constant 0 : i32
    %c0_i32_1 = arith.constant 0 : i32
    return %arg1, %c0_i32, %c0_i32_0 : i32, i32, i32
  }
  func.func @transform_11(%arg0: i32, %arg1: i32) -> (i32, i32, i32) {
    %c0_i32 = arith.constant 0 : i32
    %c0_i32_0 = arith.constant 0 : i32
    %c0_i32_1 = arith.constant 0 : i32
    return %arg1, %c0_i32, %c0_i32_0 : i32, i32, i32
  }
  func.func @transform_12(%arg0: i32, %arg1: i32) -> (i32, i32, i32) {
    %c0_i32 = arith.constant 0 : i32
    %c0_i32_0 = arith.constant 0 : i32
    %c0_i32_1 = arith.constant 0 : i32
    return %arg1, %c0_i32, %c0_i32_0 : i32, i32, i32
  }
  func.func @transform_13(%arg0: i32, %arg1: i32) -> (i32, i32, i32) {
    %c0_i32 = arith.constant 0 : i32
    %c0_i32_0 = arith.constant 0 : i32
    %c0_i32_1 = arith.constant 0 : i32
    return %arg1, %c0_i32, %c0_i32_0 : i32, i32, i32
  }
  func.func @transform_14(%arg0: i32, %arg1: i32) -> (i32, i32, i32) {
    %c0_i32 = arith.constant 0 : i32
    %c0_i32_0 = arith.constant 0 : i32
    %c0_i32_1 = arith.constant 0 : i32
    return %arg1, %c0_i32, %c0_i32_0 : i32, i32, i32
  }
  func.func @transform_15(%arg0: i32, %arg1: i32) -> (i32, i32, i32) {
    %c0_i32 = arith.constant 0 : i32
    %c0_i32_0 = arith.constant 0 : i32
    %c0_i32_1 = arith.constant 0 : i32
    return %arg1, %c0_i32, %c0_i32_0 : i32, i32, i32
  }
  func.func @transform_16(%arg0: i32, %arg1: i32) -> (i32, i32, i32) {
    %c0_i32 = arith.constant 0 : i32
    %c0_i32_0 = arith.constant 0 : i32
    %c0_i32_1 = arith.constant 0 : i32
    return %arg1, %c0_i32, %c0_i32_0 : i32, i32, i32
  }
  func.func @transform_17(%arg0: i32, %arg1: i32) -> (i32, i32, i32) {
    %c0_i32 = arith.constant 0 : i32
    %c0_i32_0 = arith.constant 0 : i32
    %c0_i32_1 = arith.constant 0 : i32
    return %arg1, %c0_i32, %c0_i32_0 : i32, i32, i32
  }
  func.func @transform_18(%arg0: i32, %arg1: i32) -> (i32, i32, i32) {
    %c0_i32 = arith.constant 0 : i32
    %c0_i32_0 = arith.constant 0 : i32
    %c0_i32_1 = arith.constant 0 : i32
    return %arg1, %c0_i32, %c0_i32_0 : i32, i32, i32
  }
  func.func @transform_19(%arg0: i32, %arg1: i32) -> (i32, i32, i32) {
    %c0_i32 = arith.constant 0 : i32
    %c0_i32_0 = arith.constant 0 : i32
    %c0_i32_1 = arith.constant 0 : i32
    return %arg1, %c0_i32, %c0_i32_0 : i32, i32, i32
  }
  func.func @transform_20(%arg0: i32, %arg1: i32) -> (i32, i32, i32) {
    %c0_i32 = arith.constant 0 : i32
    %c0_i32_0 = arith.constant 0 : i32
    %c0_i32_1 = arith.constant 0 : i32
    return %arg1, %c0_i32, %c0_i32_0 : i32, i32, i32
  }
  func.func @transform_21(%arg0: i32, %arg1: i32) -> (i32, i32, i32) {
    %c0_i32 = arith.constant 0 : i32
    %c0_i32_0 = arith.constant 0 : i32
    %c0_i32_1 = arith.constant 0 : i32
    return %arg1, %c0_i32, %c0_i32_0 : i32, i32, i32
  }
  func.func @transform_22(%arg0: i32, %arg1: i32) -> (i32, i32) {
    %c0_i32 = arith.constant 0 : i32
    %c0_i32_0 = arith.constant 0 : i32
    %c0_i32_1 = arith.constant 0 : i32
    return %c0_i32, %c0_i32_0 : i32, i32
  }
  func.func @transform_23(%arg0: i32, %arg1: i32) -> (i32, i32) {
    %c0_i32 = arith.constant 0 : i32
    %c0_i32_0 = arith.constant 0 : i32
    %c0_i32_1 = arith.constant 0 : i32
    return %c0_i32, %c0_i32_0 : i32, i32
  }
  func.func @transform_24(%arg0: i32, %arg1: i32) -> (i32, i32, i32) {
    %c0_i32 = arith.constant 0 : i32
    %c0_i32_0 = arith.constant 0 : i32
    %c0_i32_1 = arith.constant 0 : i32
    return %arg0, %c0_i32, %c0_i32_0 : i32, i32, i32
  }
}

</mosaic_0001>

<llo_original>
// kernel: transformer_decoder_pallas.1
$region0: #{transformer_decoder_pallas.1}
  #allocation0 [shape = 'u32[]', space=smem, size = 0x4, offset = 0x4, fixed_abs, tag = 'smem constant byte address 0x4 - core index']
  #allocation1 [shape = 'u32[144,128]{1,0:T(1,128)}', space=vmem, size = 0x12000, scoped, tag = 'internal scratch']
  #allocation2 [shape = 'f32[8,128]{1,0:T(8,128)}', space=vmem, size = 0x1000, scoped, tag = 'scratch operand']
  %s0 = inlined_call_operand.hbm [shape: f32[2,8,128], index: 0, kind: input, shape index: {}]
  %s1 = inlined_call_operand.hbm [shape: f32[2,16,128], index: 1, kind: input, shape index: {}]
  %s2 = inlined_call_operand.hbm [shape: bf16[2,128,384], index: 2, kind: input, shape index: {}]
  %s3 = inlined_call_operand.vmem [shape: f32[2,1,384], index: 3, kind: input, shape index: {}]
  %s4 = inlined_call_operand.hbm [shape: bf16[2,128,128], index: 4, kind: input, shape index: {}]
  %s5 = inlined_call_operand.vmem [shape: f32[2,1,128], index: 5, kind: input, shape index: {}]
  %s6 = inlined_call_operand.vmem [shape: f32[2,1,128], index: 6, kind: input, shape index: {}]
  %s7 = inlined_call_operand.vmem [shape: f32[2,1,128], index: 7, kind: input, shape index: {}]
  %s8 = inlined_call_operand.hbm [shape: bf16[2,128,128], index: 8, kind: input, shape index: {}]
  %s9 = inlined_call_operand.vmem [shape: f32[2,1,128], index: 9, kind: input, shape index: {}]
  %s10 = inlined_call_operand.hbm [shape: bf16[2,128,256], index: 10, kind: input, shape index: {}]
  %s11 = inlined_call_operand.vmem [shape: f32[2,1,256], index: 11, kind: input, shape index: {}]
  %s12 = inlined_call_operand.hbm [shape: bf16[2,128,128], index: 12, kind: input, shape index: {}]
  %s13 = inlined_call_operand.hbm [shape: f32[2,1,128], index: 13, kind: input, shape index: {}]
  %s14 = inlined_call_operand.vmem [shape: f32[2,1,128], index: 14, kind: input, shape index: {}]
  %s15 = inlined_call_operand.vmem [shape: f32[2,1,128], index: 15, kind: input, shape index: {}]
  %s16 = inlined_call_operand.hbm [shape: bf16[2,128,256], index: 16, kind: input, shape index: {}]
  %s17 = inlined_call_operand.hbm [shape: f32[2,1,256], index: 17, kind: input, shape index: {}]
  %s18 = inlined_call_operand.hbm [shape: bf16[2,256,128], index: 18, kind: input, shape index: {}]
  %s19 = inlined_call_operand.hbm [shape: f32[2,1,128], index: 19, kind: input, shape index: {}]
  %s20 = inlined_call_operand.vmem [shape: f32[2,1,128], index: 20, kind: input, shape index: {}]
  %s21 = inlined_call_operand.vmem [shape: f32[2,1,128], index: 21, kind: input, shape index: {}]
  %s22 = inlined_call_operand.vmem [shape: f32[1,128], index: 22, kind: input, shape index: {}]
  %s23 = inlined_call_operand.vmem [shape: f32[1,128], index: 23, kind: input, shape index: {}]
  %s24 = inlined_call_operand.hbm [shape: f32[2,8,128], index: 24, kind: output, shape index: {}]
  %s25 = sld [smem:[#allocation0]]
  $region189: #{transformer_decoder_pallas.1} parent=0
    _
  %s27 = ssub.s32 1, %s25
  %s28 = scalar_select 0, %s27, %s25
  $region1: #{transformer_decoder_pallas.1} parent=0
    #allocation3 [shape = 'u8[8192]{0}', space=vmem, size = 0x2000, scoped, tag = 'input window, operand 0']
    #allocation4 [shape = 's32[2]{0}', space=sflag, size = 0x8, scoped, tag = 'scoped memory for transformer_decoder_pallas.1']
    #allocation5 [shape = 's32[2]{0}', space=sflag, size = 0x8, scoped, tag = 'scoped memory for transformer_decoder_pallas.1']
    #allocation6 [shape = 'u8[16384]{0}', space=vmem, size = 0x4000, scoped, tag = 'input window, operand 1']
    #allocation7 [shape = 's32[2]{0}', space=sflag, size = 0x8, scoped, tag = 'scoped memory for transformer_decoder_pallas.1']
    #allocation8 [shape = 'u8[196608]{0}', space=vmem, size = 0x30000, scoped, tag = 'input window, operand 2']
    #allocation9 [shape = 'u8[65536]{0}', space=vmem, size = 0x10000, scoped, tag = 'input window, operand 4']
    #allocation10 [shape = 's32[2]{0}', space=sflag, size = 0x8, scoped, tag = 'scoped memory for transformer_decoder_pallas.1']
    #allocation11 [shape = 'u8[65536]{0}', space=vmem, size = 0x10000, scoped, tag = 'input window, operand 8']
    #allocation12 [shape = 'u8[131072]{0}', space=vmem, size = 0x20000, scoped, tag = 'input window, operand 10']
    #allocation13 [shape = 's32[2]{0}', space=sflag, size = 0x8, scoped, tag = 'scoped memory for transformer_decoder_pallas.1']
    #allocation14 [shape = 'u8[65536]{0}', space=vmem, size = 0x10000, scoped, tag = 'input window, operand 12']
    #allocation15 [shape = 'u8[1024]{0}', space=vmem, size = 0x400, scoped, tag = 'input window, operand 13']
    #allocation16 [shape = 's32[2]{0}', space=sflag, size = 0x8, scoped, tag = 'scoped memory for transformer_decoder_pallas.1']
    #allocation17 [shape = 'u8[131072]{0}', space=vmem, size = 0x20000, scoped, tag = 'input window, operand 16']
    #allocation18 [shape = 'u8[2048]{0}', space=vmem, size = 0x800, scoped, tag = 'input window, operand 17']
    #allocation19 [shape = 's32[2]{0}', space=sflag, size = 0x8, scoped, tag = 'scoped memory for transformer_decoder_pallas.1']
    #allocation20 [shape = 'u8[131072]{0}', space=vmem, size = 0x20000, scoped, tag = 'input window, operand 18']
    #allocation21 [shape = 'u8[1024]{0}', space=vmem, size = 0x400, scoped, tag = 'input window, operand 19']
    #allocation22 [shape = 's32[2]{0}', space=sflag, size = 0x8, scoped, tag = 'scoped memory for transformer_decoder_pallas.1']
    #allocation23 [shape = 'u8[8192]{0}', space=vmem, size = 0x2000, scoped, tag = 'output window, operand 0']
    %29 = vsyncpa [#allocation4], 0
    %s30 = scalar_lea.sflag [#allocation4], 1
    %31 = vsyncpa %s30, 0
    %32 = vsyncpa [#allocation7], 0
    %s33 = scalar_lea.sflag [#allocation7], 1
    %34 = vsyncpa %s33, 0
    %35 = vsyncpa [#allocation10], 0
    %s36 = scalar_lea.sflag [#allocation10], 1
    %37 = vsyncpa %s36, 0
    %38 = vsyncpa [#allocation13], 0
    %s39 = scalar_lea.sflag [#allocation13], 1
    %40 = vsyncpa %s39, 0
    %41 = vsyncpa [#allocation16], 0
    %s42 = scalar_lea.sflag [#allocation16], 1
    %43 = vsyncpa %s42, 0
    %44 = vsyncpa [#allocation19], 0
    %s45 = scalar_lea.sflag [#allocation19], 1
    %46 = vsyncpa %s45, 0
    %47 = vsyncpa [#allocation22], 0
    %s48 = scalar_lea.sflag [#allocation22], 1
    %49 = vsyncpa %s48, 0
    %50 = vsyncpa [#allocation5], 0
    %s51 = scalar_lea.sflag [#allocation5], 1
    %52 = vsyncpa %s51, 0
    loop: start=0, step=1, limit=6
    $region2: #{transformer_decoder_pallas.1} parent=1 // loop_pre_header
      _
    $region3: #{transformer_decoder_pallas.1} parent=1 // loop_header
      %s54 = sphi 0, %s58
      %p55 = scmp.ge.s32.totalorder %s54, 6
      %s61 = sphi 0, %s73
      %s62 = sphi 0, %s69
      %s63 = sphi 0, %s61
      %s64 = sphi 0, %s62
      %s65 = sphi 0, %s63
      %s66 = sphi 0, %s64
      %s76 = sphi 0, %s78
      %s79 = sphi 0, %s76
      %s80 = sphi 0, %s79
      %s96 = sphi 0, %s80
      %s102 = sphi 0, %s104
      %s105 = sphi 0, %s102
      %s106 = sphi 0, %s105
      %s122 = sphi 0, %s106
      %s128 = sphi 0, %s130
      %s131 = sphi 0, %s128
      %s132 = sphi 0, %s131
      %s148 = sphi 0, %s132
      %s154 = sphi 0, %s156
      %s157 = sphi 0, %s154
      %s158 = sphi 0, %s157
      %s174 = sphi 0, %s158
      %s180 = sphi 0, %s182
      %s183 = sphi 0, %s180
      %s184 = sphi 0, %s183
      %s200 = sphi 0, %s184
      %s206 = sphi 0, %s208
      %s209 = sphi 0, %s206
      %s210 = sphi 0, %s209
      %s226 = sphi 0, %s210
      %s232 = sphi 0, %s234
      %s235 = sphi 0, %s232
      %s236 = sphi 0, %s235
      %s252 = sphi 0, %s236
      %s258 = sphi 0, %s260
      %s261 = sphi 0, %s258
      %s262 = sphi 0, %s261
      %s278 = sphi 0, %s262
      %s284 = sphi 0, %s286
      %s287 = sphi 0, %s284
      %s288 = sphi 0, %s287
      %s304 = sphi 0, %s288
      %s310 = sphi 0, %s312
      %s313 = sphi 0, %s310
      %s314 = sphi 0, %s313
      %s330 = sphi 0, %s314
      %s336 = sphi 0, %s338
      %s339 = sphi 0, %s336
      %s340 = sphi 0, %s339
      %s356 = sphi 0, %s340
      %s362 = sphi 0, %s364
      %s365 = sphi 0, %s362
      %s366 = sphi 0, %s365
      %s382 = sphi 0, %s366
      %s388 = sphi 0, %s390
      %s391 = sphi 0, %s388
      %s392 = sphi 0, %s391
      %s408 = sphi 0, %s392
      %s414 = sphi 0, %s416
      %s417 = sphi 0, %s414
      %s418 = sphi 0, %s417
      %s434 = sphi 0, %s418
      %s440 = sphi 0, %s442
      %s443 = sphi 0, %s440
      %s444 = sphi 0, %s443
      %s460 = sphi 0, %s444
      %s466 = sphi 0, %s468
      %s469 = sphi 0, %s466
      %s470 = sphi 0, %s469
      %s486 = sphi 0, %s470
      %s492 = sphi 0, %s494
      %s495 = sphi 0, %s492
      %s496 = sphi 0, %s495
      %s512 = sphi 0, %s496
      %s518 = sphi 0, %s520
      %s521 = sphi 0, %s518
      %s522 = sphi 0, %s521
      %s538 = sphi 0, %s522
      %s544 = sphi 0, %s546
      %s547 = sphi 0, %s544
      %s548 = sphi 0, %s547
      %s564 = sphi 0, %s548
      %s570 = sphi 0, %s572
      %s573 = sphi 0, %s570
      %s574 = sphi 0, %s573
      %s590 = sphi 0, %s574
      %s596 = sphi 0, %s598
      %s599 = sphi 0, %s596
      %s600 = sphi 0, %s599
      %s616 = sphi 0, %s600
      %s622 = sphi 0, %s624
      %s625 = sphi 0, %s622
      %s626 = sphi 0, %s625
      %s642 = sphi 0, %s626
      %s646 = sphi 0, %s646
      %s648 = sphi 0, %s646
      %s649 = sphi 0, %s648
      %s663 = sphi 0, %s649
      %s667 = sphi 0, %s667
      %s669 = sphi 0, %s667
      %s670 = sphi 0, %s669
      %s684 = sphi 0, %s670
      %s690 = sphi 0, %s692
      %s693 = sphi 0, %s690
      %s694 = sphi 0, %s693
      %s710 = sphi 0, %s694
    $region4: #{transformer_decoder_pallas.1} parent=1 // loop_header_branch
      %57 = sbr.rel (%p55) target = $region8
    $region5: #{transformer_decoder_pallas.1} parent=1 // loop_body
      %s59 = ssub.s32 %s54, 1
      %s60 = ssub.s32 %s54, 2
      %s67 = sadd.s32 1, %s62
      %p68 = scmp.ge.s32.totalorder %s67, 2
      %s69 = scalar_select %p68, 0, %s67
      %s70 = sadd.s32 1, %s61
      %s71 = scalar_select %p68, %s70, %s61
      %p72 = scmp.ge.s32.totalorder %s71, 2
      %s73 = scalar_select %p72, 0, %s71
      %s74 = ssub.s32 %s61, %s73
      %p75 = scmp.eq.s32.totalorder %s74, 0
      %s77 = sadd.s32 %s76, 1
      %s78 = scalar_select %p75, %s76, %s77
      %p81 = pneg %p75
      %p82 = scmp.eq.s32.totalorder %s54, 3
      %p83 = por %p81, %p82
      %p84 = scmp.ne.s32.totalorder %s76, %s79
      %p85 = scmp.eq.s32.totalorder %s54, 0
      %p86 = por %p84, %p85
      %p87 = scmp.ne.s32.totalorder %s76, %s79
      %p88 = scmp.eq.s32.totalorder %s59, 3
      %p89 = por %p87, %p88
      %p90 = scmp.ne.s32.totalorder %s79, %s80
      %p91 = scmp.eq.s32.totalorder %s59, 0
      %p92 = por %p90, %p91
      %p93 = scmp.ne.s32.totalorder %s79, %s80
      %p94 = scmp.eq.s32.totalorder %s60, 3
      %p95 = por %p93, %p94
      %p97 = scmp.ne.s32.totalorder %s80, %s96
      %p98 = scmp.eq.s32.totalorder %s60, 0
      %p99 = por %p97, %p98
      %s100 = ssub.s32 %s61, %s73
      %p101 = scmp.eq.s32.totalorder %s100, 0
      %s103 = sadd.s32 %s102, 1
      %s104 = scalar_select %p101, %s102, %s103
      %p107 = pneg %p101
      %p108 = scmp.eq.s32.totalorder %s54, 3
      %p109 = por %p107, %p108
      %p110 = scmp.ne.s32.totalorder %s102, %s105
      %p111 = scmp.eq.s32.totalorder %s54, 0
      %p112 = por %p110, %p111
      %p113 = scmp.ne.s32.totalorder %s102, %s105
      %p114 = scmp.eq.s32.totalorder %s59, 3
      %p115 = por %p113, %p114
      %p116 = scmp.ne.s32.totalorder %s105, %s106
      %p117 = scmp.eq.s32.totalorder %s59, 0
      %p118 = por %p116, %p117
      %p119 = scmp.ne.s32.totalorder %s105, %s106
      %p120 = scmp.eq.s32.totalorder %s60, 3
      %p121 = por %p119, %p120
      %p123 = scmp.ne.s32.totalorder %s106, %s122
      %p124 = scmp.eq.s32.totalorder %s60, 0
      %p125 = por %p123, %p124
      %s126 = ssub.s32 %s62, %s69
      %p127 = scmp.eq.s32.totalorder %s126, 0
      %s129 = sadd.s32 %s128, 1
      %s130 = scalar_select %p127, %s128, %s129
      %p133 = pneg %p127
      %p134 = scmp.eq.s32.totalorder %s54, 3
      %p135 = por %p133, %p134
      %p136 = scmp.ne.s32.totalorder %s128, %s131
      %p137 = scmp.eq.s32.totalorder %s54, 0
      %p138 = por %p136, %p137
      %p139 = scmp.ne.s32.totalorder %s128, %s131
      %p140 = scmp.eq.s32.totalorder %s59, 3
      %p141 = por %p139, %p140
      %p142 = scmp.ne.s32.totalorder %s131, %s132
      %p143 = scmp.eq.s32.totalorder %s59, 0
      %p144 = por %p142, %p143
      %p145 = scmp.ne.s32.totalorder %s131, %s132
      %p146 = scmp.eq.s32.totalorder %s60, 3
      %p147 = por %p145, %p146
      %p149 = scmp.ne.s32.totalorder %s132, %s148
      %p150 = scmp.eq.s32.totalorder %s60, 0
      %p151 = por %p149, %p150
      %s152 = ssub.s32 %s62, %s69
      %p153 = scmp.eq.s32.totalorder %s152, 0
      %s155 = sadd.s32 %s154, 1
      %s156 = scalar_select %p153, %s154, %s155
      %p159 = pneg %p153
      %p160 = scmp.eq.s32.totalorder %s54, 3
      %p161 = por %p159, %p160
      %p162 = scmp.ne.s32.totalorder %s154, %s157
      %p163 = scmp.eq.s32.totalorder %s54, 0
      %p164 = por %p162, %p163
      %p165 = scmp.ne.s32.totalorder %s154, %s157
      %p166 = scmp.eq.s32.totalorder %s59, 3
      %p167 = por %p165, %p166
      %p168 = scmp.ne.s32.totalorder %s157, %s158
      %p169 = scmp.eq.s32.totalorder %s59, 0
      %p170 = por %p168, %p169
      %p171 = scmp.ne.s32.totalorder %s157, %s158
      %p172 = scmp.eq.s32.totalorder %s60, 3
      %p173 = por %p171, %p172
      %p175 = scmp.ne.s32.totalorder %s158, %s174
      %p176 = scmp.eq.s32.totalorder %s60, 0
      %p177 = por %p175, %p176
      %s178 = ssub.s32 %s62, %s69
      %p179 = scmp.eq.s32.totalorder %s178, 0
      %s181 = sadd.s32 %s180, 1
      %s182 = scalar_select %p179, %s180, %s181
      %p185 = pneg %p179
      %p186 = scmp.eq.s32.totalorder %s54, 3
      %p187 = por %p185, %p186
      %p188 = scmp.ne.s32.totalorder %s180, %s183
      %p189 = scmp.eq.s32.totalorder %s54, 0
      %p190 = por %p188, %p189
      %p191 = scmp.ne.s32.totalorder %s180, %s183
      %p192 = scmp.eq.s32.totalorder %s59, 3
      %p193 = por %p191, %p192
      %p194 = scmp.ne.s32.totalorder %s183, %s184
      %p195 = scmp.eq.s32.totalorder %s59, 0
      %p196 = por %p194, %p195
      %p197 = scmp.ne.s32.totalorder %s183, %s184
      %p198 = scmp.eq.s32.totalorder %s60, 3
      %p199 = por %p197, %p198
      %p201 = scmp.ne.s32.totalorder %s184, %s200
      %p202 = scmp.eq.s32.totalorder %s60, 0
      %p203 = por %p201, %p202
      %s204 = ssub.s32 %s62, %s69
      %p205 = scmp.eq.s32.totalorder %s204, 0
      %s207 = sadd.s32 %s206, 1
      %s208 = scalar_select %p205, %s206, %s207
      %p211 = pneg %p205
      %p212 = scmp.eq.s32.totalorder %s54, 3
      %p213 = por %p211, %p212
      %p214 = scmp.ne.s32.totalorder %s206, %s209
      %p215 = scmp.eq.s32.totalorder %s54, 0
      %p216 = por %p214, %p215
      %p217 = scmp.ne.s32.totalorder %s206, %s209
      %p218 = scmp.eq.s32.totalorder %s59, 3
      %p219 = por %p217, %p218
      %p220 = scmp.ne.s32.totalorder %s209, %s210
      %p221 = scmp.eq.s32.totalorder %s59, 0
      %p222 = por %p220, %p221
      %p223 = scmp.ne.s32.totalorder %s209, %s210
      %p224 = scmp.eq.s32.totalorder %s60, 3
      %p225 = por %p223, %p224
      %p227 = scmp.ne.s32.totalorder %s210, %s226
      %p228 = scmp.eq.s32.totalorder %s60, 0
      %p229 = por %p227, %p228
      %s230 = ssub.s32 %s62, %s69
      %p231 = scmp.eq.s32.totalorder %s230, 0
      %s233 = sadd.s32 %s232, 1
      %s234 = scalar_select %p231, %s232, %s233
      %p237 = pneg %p231
      %p238 = scmp.eq.s32.totalorder %s54, 3
      %p239 = por %p237, %p238
      %p240 = scmp.ne.s32.totalorder %s232, %s235
      %p241 = scmp.eq.s32.totalorder %s54, 0
      %p242 = por %p240, %p241
      %p243 = scmp.ne.s32.totalorder %s232, %s235
      %p244 = scmp.eq.s32.totalorder %s59, 3
      %p245 = por %p243, %p244
      %p246 = scmp.ne.s32.totalorder %s235, %s236
      %p247 = scmp.eq.s32.totalorder %s59, 0
      %p248 = por %p246, %p247
      %p249 = scmp.ne.s32.totalorder %s235, %s236
      %p250 = scmp.eq.s32.totalorder %s60, 3
      %p251 = por %p249, %p250
      %p253 = scmp.ne.s32.totalorder %s236, %s252
      %p254 = scmp.eq.s32.totalorder %s60, 0
      %p255 = por %p253, %p254
      %s256 = ssub.s32 %s62, %s69
      %p257 = scmp.eq.s32.totalorder %s256, 0
      %s259 = sadd.s32 %s258, 1
      %s260 = scalar_select %p257, %s258, %s259
      %p263 = pneg %p257
      %p264 = scmp.eq.s32.totalorder %s54, 3
      %p265 = por %p263, %p264
      %p266 = scmp.ne.s32.totalorder %s258, %s261
      %p267 = scmp.eq.s32.totalorder %s54, 0
      %p268 = por %p266, %p267
      %p269 = scmp.ne.s32.totalorder %s258, %s261
      %p270 = scmp.eq.s32.totalorder %s59, 3
      %p271 = por %p269, %p270
      %p272 = scmp.ne.s32.totalorder %s261, %s262
      %p273 = scmp.eq.s32.totalorder %s59, 0
      %p274 = por %p272, %p273
      %p275 = scmp.ne.s32.totalorder %s261, %s262
      %p276 = scmp.eq.s32.totalorder %s60, 3
      %p277 = por %p275, %p276
      %p279 = scmp.ne.s32.totalorder %s262, %s278
      %p280 = scmp.eq.s32.totalorder %s60, 0
      %p281 = por %p279, %p280
      %s282 = ssub.s32 %s62, %s69
      %p283 = scmp.eq.s32.totalorder %s282, 0
      %s285 = sadd.s32 %s284, 1
      %s286 = scalar_select %p283, %s284, %s285
      %p289 = pneg %p283
      %p290 = scmp.eq.s32.totalorder %s54, 3
      %p291 = por %p289, %p290
      %p292 = scmp.ne.s32.totalorder %s284, %s287
      %p293 = scmp.eq.s32.totalorder %s54, 0
      %p294 = por %p292, %p293
      %p295 = scmp.ne.s32.totalorder %s284, %s287
      %p296 = scmp.eq.s32.totalorder %s59, 3
      %p297 = por %p295, %p296
      %p298 = scmp.ne.s32.totalorder %s287, %s288
      %p299 = scmp.eq.s32.totalorder %s59, 0
      %p300 = por %p298, %p299
      %p301 = scmp.ne.s32.totalorder %s287, %s288
      %p302 = scmp.eq.s32.totalorder %s60, 3
      %p303 = por %p301, %p302
      %p305 = scmp.ne.s32.totalorder %s288, %s304
      %p306 = scmp.eq.s32.totalorder %s60, 0
      %p307 = por %p305, %p306
      %s308 = ssub.s32 %s62, %s69
      %p309 = scmp.eq.s32.totalorder %s308, 0
      %s311 = sadd.s32 %s310, 1
      %s312 = scalar_select %p309, %s310, %s311
      %p315 = pneg %p309
      %p316 = scmp.eq.s32.totalorder %s54, 3
      %p317 = por %p315, %p316
      %p318 = scmp.ne.s32.totalorder %s310, %s313
      %p319 = scmp.eq.s32.totalorder %s54, 0
      %p320 = por %p318, %p319
      %p321 = scmp.ne.s32.totalorder %s310, %s313
      %p322 = scmp.eq.s32.totalorder %s59, 3
      %p323 = por %p321, %p322
      %p324 = scmp.ne.s32.totalorder %s313, %s314
      %p325 = scmp.eq.s32.totalorder %s59, 0
      %p326 = por %p324, %p325
      %p327 = scmp.ne.s32.totalorder %s313, %s314
      %p328 = scmp.eq.s32.totalorder %s60, 3
      %p329 = por %p327, %p328
      %p331 = scmp.ne.s32.totalorder %s314, %s330
      %p332 = scmp.eq.s32.totalorder %s60, 0
      %p333 = por %p331, %p332
      %s334 = ssub.s32 %s62, %s69
      %p335 = scmp.eq.s32.totalorder %s334, 0
      %s337 = sadd.s32 %s336, 1
      %s338 = scalar_select %p335, %s336, %s337
      %p341 = pneg %p335
      %p342 = scmp.eq.s32.totalorder %s54, 3
      %p343 = por %p341, %p342
      %p344 = scmp.ne.s32.totalorder %s336, %s339
      %p345 = scmp.eq.s32.totalorder %s54, 0
      %p346 = por %p344, %p345
      %p347 = scmp.ne.s32.totalorder %s336, %s339
      %p348 = scmp.eq.s32.totalorder %s59, 3
      %p349 = por %p347, %p348
      %p350 = scmp.ne.s32.totalorder %s339, %s340
      %p351 = scmp.eq.s32.totalorder %s59, 0
      %p352 = por %p350, %p351
      %p353 = scmp.ne.s32.totalorder %s339, %s340
      %p354 = scmp.eq.s32.totalorder %s60, 3
      %p355 = por %p353, %p354
      %p357 = scmp.ne.s32.totalorder %s340, %s356
      %p358 = scmp.eq.s32.totalorder %s60, 0
      %p359 = por %p357, %p358
      %s360 = ssub.s32 %s62, %s69
      %p361 = scmp.eq.s32.totalorder %s360, 0
      %s363 = sadd.s32 %s362, 1
      %s364 = scalar_select %p361, %s362, %s363
      %p367 = pneg %p361
      %p368 = scmp.eq.s32.totalorder %s54, 3
      %p369 = por %p367, %p368
      %p370 = scmp.ne.s32.totalorder %s362, %s365
      %p371 = scmp.eq.s32.totalorder %s54, 0
      %p372 = por %p370, %p371
      %p373 = scmp.ne.s32.totalorder %s362, %s365
      %p374 = scmp.eq.s32.totalorder %s59, 3
      %p375 = por %p373, %p374
      %p376 = scmp.ne.s32.totalorder %s365, %s366
      %p377 = scmp.eq.s32.totalorder %s59, 0
      %p378 = por %p376, %p377
      %p379 = scmp.ne.s32.totalorder %s365, %s366
      %p380 = scmp.eq.s32.totalorder %s60, 3
      %p381 = por %p379, %p380
      %p383 = scmp.ne.s32.totalorder %s366, %s382
      %p384 = scmp.eq.s32.totalorder %s60, 0
      %p385 = por %p383, %p384
      %s386 = ssub.s32 %s62, %s69
      %p387 = scmp.eq.s32.totalorder %s386, 0
      %s389 = sadd.s32 %s388, 1
      %s390 = scalar_select %p387, %s388, %s389
      %p393 = pneg %p387
      %p394 = scmp.eq.s32.totalorder %s54, 3
      %p395 = por %p393, %p394
      %p396 = scmp.ne.s32.totalorder %s388, %s391
      %p397 = scmp.eq.s32.totalorder %s54, 0
      %p398 = por %p396, %p397
      %p399 = scmp.ne.s32.totalorder %s388, %s391
      %p400 = scmp.eq.s32.totalorder %s59, 3
      %p401 = por %p399, %p400
      %p402 = scmp.ne.s32.totalorder %s391, %s392
      %p403 = scmp.eq.s32.totalorder %s59, 0
      %p404 = por %p402, %p403
      %p405 = scmp.ne.s32.totalorder %s391, %s392
      %p406 = scmp.eq.s32.totalorder %s60, 3
      %p407 = por %p405, %p406
      %p409 = scmp.ne.s32.totalorder %s392, %s408
      %p410 = scmp.eq.s32.totalorder %s60, 0
      %p411 = por %p409, %p410
      %s412 = ssub.s32 %s62, %s69
      %p413 = scmp.eq.s32.totalorder %s412, 0
      %s415 = sadd.s32 %s414, 1
      %s416 = scalar_select %p413, %s414, %s415
      %p419 = pneg %p413
      %p420 = scmp.eq.s32.totalorder %s54, 3
      %p421 = por %p419, %p420
      %p422 = scmp.ne.s32.totalorder %s414, %s417
      %p423 = scmp.eq.s32.totalorder %s54, 0
      %p424 = por %p422, %p423
      %p425 = scmp.ne.s32.totalorder %s414, %s417
      %p426 = scmp.eq.s32.totalorder %s59, 3
      %p427 = por %p425, %p426
      %p428 = scmp.ne.s32.totalorder %s417, %s418
      %p429 = scmp.eq.s32.totalorder %s59, 0
      %p430 = por %p428, %p429
      %p431 = scmp.ne.s32.totalorder %s417, %s418
      %p432 = scmp.eq.s32.totalorder %s60, 3
      %p433 = por %p431, %p432
      %p435 = scmp.ne.s32.totalorder %s418, %s434
      %p436 = scmp.eq.s32.totalorder %s60, 0
      %p437 = por %p435, %p436
      %s438 = ssub.s32 %s62, %s69
      %p439 = scmp.eq.s32.totalorder %s438, 0
      %s441 = sadd.s32 %s440, 1
      %s442 = scalar_select %p439, %s440, %s441
      %p445 = pneg %p439
      %p446 = scmp.eq.s32.totalorder %s54, 3
      %p447 = por %p445, %p446
      %p448 = scmp.ne.s32.totalorder %s440, %s443
      %p449 = scmp.eq.s32.totalorder %s54, 0
      %p450 = por %p448, %p449
      %p451 = scmp.ne.s32.totalorder %s440, %s443
      %p452 = scmp.eq.s32.totalorder %s59, 3
      %p453 = por %p451, %p452
      %p454 = scmp.ne.s32.totalorder %s443, %s444
      %p455 = scmp.eq.s32.totalorder %s59, 0
      %p456 = por %p454, %p455
      %p457 = scmp.ne.s32.totalorder %s443, %s444
      %p458 = scmp.eq.s32.totalorder %s60, 3
      %p459 = por %p457, %p458
      %p461 = scmp.ne.s32.totalorder %s444, %s460
      %p462 = scmp.eq.s32.totalorder %s60, 0
      %p463 = por %p461, %p462
      %s464 = ssub.s32 %s62, %s69
      %p465 = scmp.eq.s32.totalorder %s464, 0
      %s467 = sadd.s32 %s466, 1
      %s468 = scalar_select %p465, %s466, %s467
      %p471 = pneg %p465
      %p472 = scmp.eq.s32.totalorder %s54, 3
      %p473 = por %p471, %p472
      %p474 = scmp.ne.s32.totalorder %s466, %s469
      %p475 = scmp.eq.s32.totalorder %s54, 0
      %p476 = por %p474, %p475
      %p477 = scmp.ne.s32.totalorder %s466, %s469
      %p478 = scmp.eq.s32.totalorder %s59, 3
      %p479 = por %p477, %p478
      %p480 = scmp.ne.s32.totalorder %s469, %s470
      %p481 = scmp.eq.s32.totalorder %s59, 0
      %p482 = por %p480, %p481
      %p483 = scmp.ne.s32.totalorder %s469, %s470
      %p484 = scmp.eq.s32.totalorder %s60, 3
      %p485 = por %p483, %p484
      %p487 = scmp.ne.s32.totalorder %s470, %s486
      %p488 = scmp.eq.s32.totalorder %s60, 0
      %p489 = por %p487, %p488
      %s490 = ssub.s32 %s62, %s69
      %p491 = scmp.eq.s32.totalorder %s490, 0
      %s493 = sadd.s32 %s492, 1
      %s494 = scalar_select %p491, %s492, %s493
      %p497 = pneg %p491
      %p498 = scmp.eq.s32.totalorder %s54, 3
      %p499 = por %p497, %p498
      %p500 = scmp.ne.s32.totalorder %s492, %s495
      %p501 = scmp.eq.s32.totalorder %s54, 0
      %p502 = por %p500, %p501
      %p503 = scmp.ne.s32.totalorder %s492, %s495
      %p504 = scmp.eq.s32.totalorder %s59, 3
      %p505 = por %p503, %p504
      %p506 = scmp.ne.s32.totalorder %s495, %s496
      %p507 = scmp.eq.s32.totalorder %s59, 0
      %p508 = por %p506, %p507
      %p509 = scmp.ne.s32.totalorder %s495, %s496
      %p510 = scmp.eq.s32.totalorder %s60, 3
      %p511 = por %p509, %p510
      %p513 = scmp.ne.s32.totalorder %s496, %s512
      %p514 = scmp.eq.s32.totalorder %s60, 0
      %p515 = por %p513, %p514
      %s516 = ssub.s32 %s62, %s69
      %p517 = scmp.eq.s32.totalorder %s516, 0
      %s519 = sadd.s32 %s518, 1
      %s520 = scalar_select %p517, %s518, %s519
      %p523 = pneg %p517
      %p524 = scmp.eq.s32.totalorder %s54, 3
      %p525 = por %p523, %p524
      %p526 = scmp.ne.s32.totalorder %s518, %s521
      %p527 = scmp.eq.s32.totalorder %s54, 0
      %p528 = por %p526, %p527
      %p529 = scmp.ne.s32.totalorder %s518, %s521
      %p530 = scmp.eq.s32.totalorder %s59, 3
      %p531 = por %p529, %p530
      %p532 = scmp.ne.s32.totalorder %s521, %s522
      %p533 = scmp.eq.s32.totalorder %s59, 0
      %p534 = por %p532, %p533
      %p535 = scmp.ne.s32.totalorder %s521, %s522
      %p536 = scmp.eq.s32.totalorder %s60, 3
      %p537 = por %p535, %p536
      %p539 = scmp.ne.s32.totalorder %s522, %s538
      %p540 = scmp.eq.s32.totalorder %s60, 0
      %p541 = por %p539, %p540
      %s542 = ssub.s32 %s62, %s69
      %p543 = scmp.eq.s32.totalorder %s542, 0
      %s545 = sadd.s32 %s544, 1
      %s546 = scalar_select %p543, %s544, %s545
      %p549 = pneg %p543
      %p550 = scmp.eq.s32.totalorder %s54, 3
      %p551 = por %p549, %p550
      %p552 = scmp.ne.s32.totalorder %s544, %s547
      %p553 = scmp.eq.s32.totalorder %s54, 0
      %p554 = por %p552, %p553
      %p555 = scmp.ne.s32.totalorder %s544, %s547
      %p556 = scmp.eq.s32.totalorder %s59, 3
      %p557 = por %p555, %p556
      %p558 = scmp.ne.s32.totalorder %s547, %s548
      %p559 = scmp.eq.s32.totalorder %s59, 0
      %p560 = por %p558, %p559
      %p561 = scmp.ne.s32.totalorder %s547, %s548
      %p562 = scmp.eq.s32.totalorder %s60, 3
      %p563 = por %p561, %p562
      %p565 = scmp.ne.s32.totalorder %s548, %s564
      %p566 = scmp.eq.s32.totalorder %s60, 0
      %p567 = por %p565, %p566
      %s568 = ssub.s32 %s62, %s69
      %p569 = scmp.eq.s32.totalorder %s568, 0
      %s571 = sadd.s32 %s570, 1
      %s572 = scalar_select %p569, %s570, %s571
      %p575 = pneg %p569
      %p576 = scmp.eq.s32.totalorder %s54, 3
      %p577 = por %p575, %p576
      %p578 = scmp.ne.s32.totalorder %s570, %s573
      %p579 = scmp.eq.s32.totalorder %s54, 0
      %p580 = por %p578, %p579
      %p581 = scmp.ne.s32.totalorder %s570, %s573
      %p582 = scmp.eq.s32.totalorder %s59, 3
      %p583 = por %p581, %p582
      %p584 = scmp.ne.s32.totalorder %s573, %s574
      %p585 = scmp.eq.s32.totalorder %s59, 0
      %p586 = por %p584, %p585
      %p587 = scmp.ne.s32.totalorder %s573, %s574
      %p588 = scmp.eq.s32.totalorder %s60, 3
      %p589 = por %p587, %p588
      %p591 = scmp.ne.s32.totalorder %s574, %s590
      %p592 = scmp.eq.s32.totalorder %s60, 0
      %p593 = por %p591, %p592
      %s594 = ssub.s32 %s62, %s69
      %p595 = scmp.eq.s32.totalorder %s594, 0
      %s597 = sadd.s32 %s596, 1
      %s598 = scalar_select %p595, %s596, %s597
      %p601 = pneg %p595
      %p602 = scmp.eq.s32.totalorder %s54, 3
      %p603 = por %p601, %p602
      %p604 = scmp.ne.s32.totalorder %s596, %s599
      %p605 = scmp.eq.s32.totalorder %s54, 0
      %p606 = por %p604, %p605
      %p607 = scmp.ne.s32.totalorder %s596, %s599
      %p608 = scmp.eq.s32.totalorder %s59, 3
      %p609 = por %p607, %p608
      %p610 = scmp.ne.s32.totalorder %s599, %s600
      %p611 = scmp.eq.s32.totalorder %s59, 0
      %p612 = por %p610, %p611
      %p613 = scmp.ne.s32.totalorder %s599, %s600
      %p614 = scmp.eq.s32.totalorder %s60, 3
      %p615 = por %p613, %p614
      %p617 = scmp.ne.s32.totalorder %s600, %s616
      %p618 = scmp.eq.s32.totalorder %s60, 0
      %p619 = por %p617, %p618
      %s620 = ssub.s32 %s62, %s69
      %p621 = scmp.eq.s32.totalorder %s620, 0
      %s623 = sadd.s32 %s622, 1
      %s624 = scalar_select %p621, %s622, %s623
      %p627 = pneg %p621
      %p628 = scmp.eq.s32.totalorder %s54, 3
      %p629 = por %p627, %p628
      %p630 = scmp.ne.s32.totalorder %s622, %s625
      %p631 = scmp.eq.s32.totalorder %s54, 0
      %p632 = por %p630, %p631
      %p633 = scmp.ne.s32.totalorder %s622, %s625
      %p634 = scmp.eq.s32.totalorder %s59, 3
      %p635 = por %p633, %p634
      %p636 = scmp.ne.s32.totalorder %s625, %s626
      %p637 = scmp.eq.s32.totalorder %s59, 0
      %p638 = por %p636, %p637
      %p639 = scmp.ne.s32.totalorder %s625, %s626
      %p640 = scmp.eq.s32.totalorder %s60, 3
      %p641 = por %p639, %p640
      %p643 = scmp.ne.s32.totalorder %s626, %s642
      %p644 = scmp.eq.s32.totalorder %s60, 0
      %p645 = por %p643, %p644
      %s647 = sadd.s32 %s646, 1
      %p650 = scmp.eq.s32.totalorder %s54, 3
      %p651 = scmp.ne.s32.totalorder %s646, %s648
      %p652 = scmp.eq.s32.totalorder %s54, 0
      %p653 = por %p651, %p652
      %p654 = scmp.ne.s32.totalorder %s646, %s648
      %p655 = scmp.eq.s32.totalorder %s59, 3
      %p656 = por %p654, %p655
      %p657 = scmp.ne.s32.totalorder %s648, %s649
      %p658 = scmp.eq.s32.totalorder %s59, 0
      %p659 = por %p657, %p658
      %p660 = scmp.ne.s32.totalorder %s648, %s649
      %p661 = scmp.eq.s32.totalorder %s60, 3
      %p662 = por %p660, %p661
      %p664 = scmp.ne.s32.totalorder %s649, %s663
      %p665 = scmp.eq.s32.totalorder %s60, 0
      %p666 = por %p664, %p665
      %s668 = sadd.s32 %s667, 1
      %p671 = scmp.eq.s32.totalorder %s54, 3
      %p672 = scmp.ne.s32.totalorder %s667, %s669
      %p673 = scmp.eq.s32.totalorder %s54, 0
      %p674 = por %p672, %p673
      %p675 = scmp.ne.s32.totalorder %s667, %s669
      %p676 = scmp.eq.s32.totalorder %s59, 3
      %p677 = por %p675, %p676
      %p678 = scmp.ne.s32.totalorder %s669, %s670
      %p679 = scmp.eq.s32.totalorder %s59, 0
      %p680 = por %p678, %p679
      %p681 = scmp.ne.s32.totalorder %s669, %s670
      %p682 = scmp.eq.s32.totalorder %s60, 3
      %p683 = por %p681, %p682
      %p685 = scmp.ne.s32.totalorder %s670, %s684
      %p686 = scmp.eq.s32.totalorder %s60, 0
      %p687 = por %p685, %p686
      %s688 = ssub.s32 %s61, %s73
      %p689 = scmp.eq.s32.totalorder %s688, 0
      %s691 = sadd.s32 %s690, 1
      %s692 = scalar_select %p689, %s690, %s691
      %p695 = pneg %p689
      %p696 = scmp.eq.s32.totalorder %s54, 3
      %p697 = por %p695, %p696
      %p698 = scmp.ne.s32.totalorder %s690, %s693
      %p699 = scmp.eq.s32.totalorder %s54, 0
      %p700 = por %p698, %p699
      %p701 = scmp.ne.s32.totalorder %s690, %s693
      %p702 = scmp.eq.s32.totalorder %s59, 3
      %p703 = por %p701, %p702
      %p704 = scmp.ne.s32.totalorder %s693, %s694
      %p705 = scmp.eq.s32.totalorder %s59, 0
      %p706 = por %p704, %p705
      %p707 = scmp.ne.s32.totalorder %s693, %s694
      %p708 = scmp.eq.s32.totalorder %s60, 3
      %p709 = por %p707, %p708
      %p711 = scmp.ne.s32.totalorder %s694, %s710
      %p712 = scmp.eq.s32.totalorder %s60, 0
      %p713 = por %p711, %p712
      %p714 = scmp.le.s32.totalorder 1, %s54
      %p715 = scmp.lt.s32.totalorder %s54, 5
      %p716 = pnand %p714, %p715
      %p717 = pneg %p716
      // Predicated region
      $region9: #{transformer_decoder_pallas.1} parent=5 // pred_check
        _
      $region10: #{transformer_decoder_pallas.1} parent=5 // pred_check_branch
        %719 = sbr.rel (%p716) target = $region12
      $region11: #{transformer_decoder_pallas.1} parent=5 // pred_region
        %s720 = ssub.s32 %s54, 1
        // Predicated region
        $region13: #{transformer_decoder_pallas.1} parent=11 // pred_check
          %p721 = pneg %p659
        $region14: #{transformer_decoder_pallas.1} parent=11 // pred_check_branch
          %723 = sbr.rel (%p721) target = $region16
        $region15: #{transformer_decoder_pallas.1} parent=11 // pred_region
          _
        $region16: #{transformer_decoder_pallas.1} parent=11 // pred_fallthru
          _
        // Predicated region
        $region17: #{transformer_decoder_pallas.1} parent=11 // pred_check
          %p724 = pneg %p680
        $region18: #{transformer_decoder_pallas.1} parent=11 // pred_check_branch
          %726 = sbr.rel (%p724) target = $region20
        $region19: #{transformer_decoder_pallas.1} parent=11 // pred_region
          _
        $region20: #{transformer_decoder_pallas.1} parent=11 // pred_fallthru
          _
      $region12: #{transformer_decoder_pallas.1} parent=5 // pred_fallthru
        _
      %p727 = scmp.lt.s32.totalorder %s54, 4
      // Predicated region
      $region21: #{transformer_decoder_pallas.1} parent=5 // pred_check
        %p728 = pneg %p727
      $region22: #{transformer_decoder_pallas.1} parent=5 // pred_check_branch
        %730 = sbr.rel (%p728) target = $region24
      $region23: #{transformer_decoder_pallas.1} parent=5 // pred_region
        // Predicated region
        $region25: #{transformer_decoder_pallas.1} parent=23 // pred_check
          %p731 = pneg %p86
        $region26: #{transformer_decoder_pallas.1} parent=23 // pred_check_branch
          %733 = sbr.rel (%p731) target = $region28
        $region27: #{transformer_decoder_pallas.1} parent=23 // pred_region
          %s734 = sand.u32 %s76, 1
          %s735 = scalar_lea.sflag [#allocation4], %s734
          %s736 = sand.u32 %s76, 1
          %s737 = smul.addr %s736, 8
          %s738 = scalar_lea.vmem [#allocation3], %s737
          %s740 = ssub.s32 128, 128
          %741 = vsyncadd %s735, %s740
          %s742 = smul.addr %s61, 128
          %s743 = scalar_lea.hbm %s0, %s742
          %s745 = sshll.u32 %s738, 4
          %s746 = int_to_ptr.vmem [resolvable:$true] %s745
          %748 = dma.hbm_to_vmem [thread:$0]  %s743, 128, %s746, %s735
        $region28: #{transformer_decoder_pallas.1} parent=23 // pred_fallthru
          _
        // Predicated region
        $region29: #{transformer_decoder_pallas.1} parent=23 // pred_check
          %p749 = pneg %p112
        $region30: #{transformer_decoder_pallas.1} parent=23 // pred_check_branch
          %751 = sbr.rel (%p749) target = $region32
        $region31: #{transformer_decoder_pallas.1} parent=23 // pred_region
          %s752 = sand.u32 %s54, 1
          %s753 = scalar_lea.sflag [#allocation7], %s752
          %s754 = sand.u32 %s102, 1
          %s755 = smul.addr %s754, 16
          %s756 = scalar_lea.vmem [#allocation6], %s755
          %s758 = ssub.s32 256, 256
          %759 = vsyncadd %s753, %s758
          %s760 = smul.addr %s61, 2
          %s761 = smul.addr %s760, 128
          %s762 = scalar_lea.hbm %s1, %s761
          %s763 = sshll.u32 %s756, 4
          %s764 = int_to_ptr.vmem [resolvable:$true] %s763
          %769 = dma.hbm_to_vmem [thread:$0]  %s762, 256, %s764, %s753, 128, 128, 8
        $region32: #{transformer_decoder_pallas.1} parent=23 // pred_fallthru
          _
        // Predicated region
        $region33: #{transformer_decoder_pallas.1} parent=23 // pred_check
          %p770 = pneg %p138
        $region34: #{transformer_decoder_pallas.1} parent=23 // pred_check_branch
          %772 = sbr.rel (%p770) target = $region36
        $region35: #{transformer_decoder_pallas.1} parent=23 // pred_region
          %s773 = sand.u32 %s54, 1
          %s774 = scalar_lea.sflag [#allocation7], %s773
          %s775 = sand.u32 %s128, 1
          %s776 = smul.addr %s775, 192
          %s777 = scalar_lea.vmem [#allocation8], %s776
          %s779 = ssub.s32 3072, 3072
          %780 = vsyncadd %s774, %s779
          %s781 = smul.addr %s62, 48
          %s782 = smul.addr %s781, 64
          %s783 = scalar_lea.hbm %s2, %s782
          %s784 = sshll.u32 %s777, 4
          %s785 = int_to_ptr.vmem [resolvable:$true] %s784
          %790 = dma.hbm_to_vmem [thread:$0]  %s783, 3072, %s785, %s774, 192, 192, 12
        $region36: #{transformer_decoder_pallas.1} parent=23 // pred_fallthru
          _
        // Predicated region
        $region37: #{transformer_decoder_pallas.1} parent=23 // pred_check
          %p791 = pneg %p164
        $region38: #{transformer_decoder_pallas.1} parent=23 // pred_check_branch
          %793 = sbr.rel (%p791) target = $region40
        $region39: #{transformer_decoder_pallas.1} parent=23 // pred_region
          %p794 = scmp.lt.s32.totalorder %s62, 1
          %s795 = scalar_select %p794, %s62, 1
          %s796 = smul.addr %s795, 3
          %s797 = scalar_lea.vmem %s3, %s796
        $region40: #{transformer_decoder_pallas.1} parent=23 // pred_fallthru
          _
        // Predicated region
        $region41: #{transformer_decoder_pallas.1} parent=23 // pred_check
          %p798 = pneg %p190
        $region42: #{transformer_decoder_pallas.1} parent=23 // pred_check_branch
          %800 = sbr.rel (%p798) target = $region44
        $region43: #{transformer_decoder_pallas.1} parent=23 // pred_region
          %s801 = sand.u32 %s54, 1
          %s802 = scalar_lea.sflag [#allocation10], %s801
          %s803 = sand.u32 %s180, 1
          %s804 = smul.addr %s803, 64
          %s805 = scalar_lea.vmem [#allocation9], %s804
          %s807 = ssub.s32 1024, 1024
          %808 = vsyncadd %s802, %s807
          %s809 = smul.addr %s62, 16
          %s810 = smul.addr %s809, 64
          %s811 = scalar_lea.hbm %s4, %s810
          %s812 = sshll.u32 %s805, 4
          %s813 = int_to_ptr.vmem [resolvable:$true] %s812
          %818 = dma.hbm_to_vmem [thread:$0]  %s811, 1024, %s813, %s802, 64, 64, 4
        $region44: #{transformer_decoder_pallas.1} parent=23 // pred_fallthru
          _
        // Predicated region
        $region45: #{transformer_decoder_pallas.1} parent=23 // pred_check
          %p819 = pneg %p216
        $region46: #{transformer_decoder_pallas.1} parent=23 // pred_check_branch
          %821 = sbr.rel (%p819) target = $region48
        $region47: #{transformer_decoder_pallas.1} parent=23 // pred_region
          %p822 = scmp.lt.s32.totalorder %s62, 1
          %s823 = scalar_select %p822, %s62, 1
          %s824 = scalar_lea.vmem %s5, %s823
        $region48: #{transformer_decoder_pallas.1} parent=23 // pred_fallthru
          _
        // Predicated region
        $region49: #{transformer_decoder_pallas.1} parent=23 // pred_check
          %p825 = pneg %p242
        $region50: #{transformer_decoder_pallas.1} parent=23 // pred_check_branch
          %827 = sbr.rel (%p825) target = $region52
        $region51: #{transformer_decoder_pallas.1} parent=23 // pred_region
          %p828 = scmp.lt.s32.totalorder %s62, 1
          %s829 = scalar_select %p828, %s62, 1
          %s830 = scalar_lea.vmem %s6, %s829
        $region52: #{transformer_decoder_pallas.1} parent=23 // pred_fallthru
          _
        // Predicated region
        $region53: #{transformer_decoder_pallas.1} parent=23 // pred_check
          %p831 = pneg %p268
        $region54: #{transformer_decoder_pallas.1} parent=23 // pred_check_branch
          %833 = sbr.rel (%p831) target = $region56
        $region55: #{transformer_decoder_pallas.1} parent=23 // pred_region
          %p834 = scmp.lt.s32.totalorder %s62, 1
          %s835 = scalar_select %p834, %s62, 1
          %s836 = scalar_lea.vmem %s7, %s835
        $region56: #{transformer_decoder_pallas.1} parent=23 // pred_fallthru
          _
        // Predicated region
        $region57: #{transformer_decoder_pallas.1} parent=23 // pred_check
          %p837 = pneg %p294
        $region58: #{transformer_decoder_pallas.1} parent=23 // pred_check_branch
          %839 = sbr.rel (%p837) target = $region60
        $region59: #{transformer_decoder_pallas.1} parent=23 // pred_region
          %s840 = sand.u32 %s54, 1
          %s841 = scalar_lea.sflag [#allocation10], %s840
          %s842 = sand.u32 %s284, 1
          %s843 = smul.addr %s842, 64
          %s844 = scalar_lea.vmem [#allocation11], %s843
          %s846 = ssub.s32 1024, 1024
          %847 = vsyncadd %s841, %s846
          %s848 = smul.addr %s62, 16
          %s849 = smul.addr %s848, 64
          %s850 = scalar_lea.hbm %s8, %s849
          %s851 = sshll.u32 %s844, 4
          %s852 = int_to_ptr.vmem [resolvable:$true] %s851
          %857 = dma.hbm_to_vmem [thread:$0]  %s850, 1024, %s852, %s841, 64, 64, 4
        $region60: #{transformer_decoder_pallas.1} parent=23 // pred_fallthru
          _
        // Predicated region
        $region61: #{transformer_decoder_pallas.1} parent=23 // pred_check
          %p858 = pneg %p320
        $region62: #{transformer_decoder_pallas.1} parent=23 // pred_check_branch
          %860 = sbr.rel (%p858) target = $region64
        $region63: #{transformer_decoder_pallas.1} parent=23 // pred_region
          %p861 = scmp.lt.s32.totalorder %s62, 1
          %s862 = scalar_select %p861, %s62, 1
          %s863 = scalar_lea.vmem %s9, %s862
        $region64: #{transformer_decoder_pallas.1} parent=23 // pred_fallthru
          _
        // Predicated region
        $region65: #{transformer_decoder_pallas.1} parent=23 // pred_check
          %p864 = pneg %p346
        $region66: #{transformer_decoder_pallas.1} parent=23 // pred_check_branch
          %866 = sbr.rel (%p864) target = $region68
        $region67: #{transformer_decoder_pallas.1} parent=23 // pred_region
          %s867 = sand.u32 %s54, 1
          %s868 = scalar_lea.sflag [#allocation13], %s867
          %s869 = sand.u32 %s336, 1
          %s870 = smul.addr %s869, 128
          %s871 = scalar_lea.vmem [#allocation12], %s870
          %s873 = ssub.s32 2048, 2048
          %874 = vsyncadd %s868, %s873
          %s875 = smul.addr %s62, 32
          %s876 = smul.addr %s875, 64
          %s877 = scalar_lea.hbm %s10, %s876
          %s878 = sshll.u32 %s871, 4
          %s879 = int_to_ptr.vmem [resolvable:$true] %s878
          %884 = dma.hbm_to_vmem [thread:$0]  %s877, 2048, %s879, %s868, 128, 128, 8
        $region68: #{transformer_decoder_pallas.1} parent=23 // pred_fallthru
          _
        // Predicated region
        $region69: #{transformer_decoder_pallas.1} parent=23 // pred_check
          %p885 = pneg %p372
        $region70: #{transformer_decoder_pallas.1} parent=23 // pred_check_branch
          %887 = sbr.rel (%p885) target = $region72
        $region71: #{transformer_decoder_pallas.1} parent=23 // pred_region
          %p888 = scmp.lt.s32.totalorder %s62, 1
          %s889 = scalar_select %p888, %s62, 1
          %s890 = smul.addr %s889, 2
          %s891 = scalar_lea.vmem %s11, %s890
        $region72: #{transformer_decoder_pallas.1} parent=23 // pred_fallthru
          _
        // Predicated region
        $region73: #{transformer_decoder_pallas.1} parent=23 // pred_check
          %p892 = pneg %p398
        $region74: #{transformer_decoder_pallas.1} parent=23 // pred_check_branch
          %894 = sbr.rel (%p892) target = $region76
        $region75: #{transformer_decoder_pallas.1} parent=23 // pred_region
          %s895 = sand.u32 %s54, 1
          %s896 = scalar_lea.sflag [#allocation13], %s895
          %s897 = sand.u32 %s388, 1
          %s898 = smul.addr %s897, 64
          %s899 = scalar_lea.vmem [#allocation14], %s898
          %s901 = ssub.s32 1024, 1024
          %902 = vsyncadd %s896, %s901
          %s903 = smul.addr %s62, 16
          %s904 = smul.addr %s903, 64
          %s905 = scalar_lea.hbm %s12, %s904
          %s906 = sshll.u32 %s899, 4
          %s907 = int_to_ptr.vmem [resolvable:$true] %s906
          %912 = dma.hbm_to_vmem [thread:$0]  %s905, 1024, %s907, %s896, 64, 64, 4
        $region76: #{transformer_decoder_pallas.1} parent=23 // pred_fallthru
          _
        // Predicated region
        $region77: #{transformer_decoder_pallas.1} parent=23 // pred_check
          %p913 = pneg %p424
        $region78: #{transformer_decoder_pallas.1} parent=23 // pred_check_branch
          %915 = sbr.rel (%p913) target = $region80
        $region79: #{transformer_decoder_pallas.1} parent=23 // pred_region
          %s916 = sand.u32 %s54, 1
          %s917 = scalar_lea.sflag [#allocation16], %s916
          %s918 = sand.u32 %s414, 1
          %s919 = scalar_lea.vmem [#allocation15], %s918
          %s921 = ssub.s32 16, 16
          %922 = vsyncadd %s917, %s921
          %s923 = smul.addr %s62, 16
          %s924 = scalar_lea.hbm %s13, %s923
          %s926 = sshll.u32 %s919, 4
          %s927 = int_to_ptr.vmem [resolvable:$true] %s926
          %929 = dma.hbm_to_vmem [thread:$0]  %s924, 16, %s927, %s917
        $region80: #{transformer_decoder_pallas.1} parent=23 // pred_fallthru
          _
        // Predicated region
        $region81: #{transformer_decoder_pallas.1} parent=23 // pred_check
          %p930 = pneg %p450
        $region82: #{transformer_decoder_pallas.1} parent=23 // pred_check_branch
          %932 = sbr.rel (%p930) target = $region84
        $region83: #{transformer_decoder_pallas.1} parent=23 // pred_region
          %p933 = scmp.lt.s32.totalorder %s62, 1
          %s934 = scalar_select %p933, %s62, 1
          %s935 = scalar_lea.vmem %s14, %s934
        $region84: #{transformer_decoder_pallas.1} parent=23 // pred_fallthru
          _
        // Predicated region
        $region85: #{transformer_decoder_pallas.1} parent=23 // pred_check
          %p936 = pneg %p476
        $region86: #{transformer_decoder_pallas.1} parent=23 // pred_check_branch
          %938 = sbr.rel (%p936) target = $region88
        $region87: #{transformer_decoder_pallas.1} parent=23 // pred_region
          %p939 = scmp.lt.s32.totalorder %s62, 1
          %s940 = scalar_select %p939, %s62, 1
          %s941 = scalar_lea.vmem %s15, %s940
        $region88: #{transformer_decoder_pallas.1} parent=23 // pred_fallthru
          _
        // Predicated region
        $region89: #{transformer_decoder_pallas.1} parent=23 // pred_check
          %p942 = pneg %p502
        $region90: #{transformer_decoder_pallas.1} parent=23 // pred_check_branch
          %944 = sbr.rel (%p942) target = $region92
        $region91: #{transformer_decoder_pallas.1} parent=23 // pred_region
          %s945 = sand.u32 %s54, 1
          %s946 = scalar_lea.sflag [#allocation16], %s945
          %s947 = sand.u32 %s492, 1
          %s948 = smul.addr %s947, 128
          %s949 = scalar_lea.vmem [#allocation17], %s948
          %s951 = ssub.s32 2048, 2048
          %952 = vsyncadd %s946, %s951
          %s953 = smul.addr %s62, 32
          %s954 = smul.addr %s953, 64
          %s955 = scalar_lea.hbm %s16, %s954
          %s956 = sshll.u32 %s949, 4
          %s957 = int_to_ptr.vmem [resolvable:$true] %s956
          %962 = dma.hbm_to_vmem [thread:$0]  %s955, 2048, %s957, %s946, 128, 128, 8
        $region92: #{transformer_decoder_pallas.1} parent=23 // pred_fallthru
          _
        // Predicated region
        $region93: #{transformer_decoder_pallas.1} parent=23 // pred_check
          %p963 = pneg %p528
        $region94: #{transformer_decoder_pallas.1} parent=23 // pred_check_branch
          %965 = sbr.rel (%p963) target = $region96
        $region95: #{transformer_decoder_pallas.1} parent=23 // pred_region
          %s966 = sand.u32 %s54, 1
          %s967 = scalar_lea.sflag [#allocation19], %s966
          %s968 = sand.u32 %s518, 1
          %s969 = smul.addr %s968, 2
          %s970 = scalar_lea.vmem [#allocation18], %s969
          %s972 = ssub.s32 32, 32
          %973 = vsyncadd %s967, %s972
          %s974 = smul.addr %s62, 2
          %s975 = smul.addr %s974, 16
          %s976 = scalar_lea.hbm %s17, %s975
          %s978 = sshll.u32 %s970, 4
          %s979 = int_to_ptr.vmem [resolvable:$true] %s978
          %981 = dma.hbm_to_vmem [thread:$0]  %s976, 32, %s979, %s967
        $region96: #{transformer_decoder_pallas.1} parent=23 // pred_fallthru
          _
        // Predicated region
        $region97: #{transformer_decoder_pallas.1} parent=23 // pred_check
          %p982 = pneg %p554
        $region98: #{transformer_decoder_pallas.1} parent=23 // pred_check_branch
          %984 = sbr.rel (%p982) target = $region100
        $region99: #{transformer_decoder_pallas.1} parent=23 // pred_region
          %s985 = sand.u32 %s54, 1
          %s986 = scalar_lea.sflag [#allocation19], %s985
          %s987 = sand.u32 %s544, 1
          %s988 = smul.addr %s987, 128
          %s989 = scalar_lea.vmem [#allocation20], %s988
          %s991 = ssub.s32 2048, 2048
          %992 = vsyncadd %s986, %s991
          %s993 = smul.addr %s62, 32
          %s994 = smul.addr %s993, 64
          %s995 = scalar_lea.hbm %s18, %s994
          %s996 = sshll.u32 %s989, 4
          %s997 = int_to_ptr.vmem [resolvable:$true] %s996
          %1002 = dma.hbm_to_vmem [thread:$0]  %s995, 2048, %s997, %s986, 64, 64, 4
        $region100: #{transformer_decoder_pallas.1} parent=23 // pred_fallthru
          _
        // Predicated region
        $region101: #{transformer_decoder_pallas.1} parent=23 // pred_check
          %p1003 = pneg %p580
        $region102: #{transformer_decoder_pallas.1} parent=23 // pred_check_branch
          %1005 = sbr.rel (%p1003) target = $region104
        $region103: #{transformer_decoder_pallas.1} parent=23 // pred_region
          %s1006 = sand.u32 %s570, 1
          %s1007 = scalar_lea.sflag [#allocation22], %s1006
          %s1008 = sand.u32 %s570, 1
          %s1009 = scalar_lea.vmem [#allocation21], %s1008
          %s1011 = ssub.s32 16, 16
          %1012 = vsyncadd %s1007, %s1011
          %s1013 = smul.addr %s62, 16
          %s1014 = scalar_lea.hbm %s19, %s1013
          %s1016 = sshll.u32 %s1009, 4
          %s1017 = int_to_ptr.vmem [resolvable:$true] %s1016
          %1019 = dma.hbm_to_vmem [thread:$0]  %s1014, 16, %s1017, %s1007
        $region104: #{transformer_decoder_pallas.1} parent=23 // pred_fallthru
          _
        // Predicated region
        $region105: #{transformer_decoder_pallas.1} parent=23 // pred_check
          %p1020 = pneg %p606
        $region106: #{transformer_decoder_pallas.1} parent=23 // pred_check_branch
          %1022 = sbr.rel (%p1020) target = $region108
        $region107: #{transformer_decoder_pallas.1} parent=23 // pred_region
          %p1023 = scmp.lt.s32.totalorder %s62, 1
          %s1024 = scalar_select %p1023, %s62, 1
          %s1025 = scalar_lea.vmem %s20, %s1024
        $region108: #{transformer_decoder_pallas.1} parent=23 // pred_fallthru
          _
        // Predicated region
        $region109: #{transformer_decoder_pallas.1} parent=23 // pred_check
          %p1026 = pneg %p632
        $region110: #{transformer_decoder_pallas.1} parent=23 // pred_check_branch
          %1028 = sbr.rel (%p1026) target = $region112
        $region111: #{transformer_decoder_pallas.1} parent=23 // pred_region
          %p1029 = scmp.lt.s32.totalorder %s62, 1
          %s1030 = scalar_select %p1029, %s62, 1
          %s1031 = scalar_lea.vmem %s21, %s1030
        $region112: #{transformer_decoder_pallas.1} parent=23 // pred_fallthru
          _
      $region24: #{transformer_decoder_pallas.1} parent=5 // pred_fallthru
        _
      %p1032 = scmp.le.s32.totalorder 1, %s54
      %p1033 = scmp.lt.s32.totalorder %s54, 5
      %p1034 = pnand %p1032, %p1033
      %p1035 = pneg %p1034
      // Predicated region
      $region113: #{transformer_decoder_pallas.1} parent=5 // pred_check
        _
      $region114: #{transformer_decoder_pallas.1} parent=5 // pred_check_branch
        %1037 = sbr.rel (%p1034) target = $region116
      $region115: #{transformer_decoder_pallas.1} parent=5 // pred_region
        %s1038 = ssub.s32 %s54, 1
        %s1039 = sand.u32 %s79, 1
        %s1040 = scalar_lea.sflag [#allocation4], %s1039
        %s1041 = sand.u32 %s79, 1
        %s1042 = smul.addr %s1041, 8
        %s1043 = scalar_lea.vmem [#allocation3], %s1042
        // Predicated region
        $region117: #{transformer_decoder_pallas.1} parent=115 // pred_check
          %p1044 = pneg %p92
        $region118: #{transformer_decoder_pallas.1} parent=115 // pred_check_branch
          %1046 = sbr.rel (%p1044) target = $region120
        $region119: #{transformer_decoder_pallas.1} parent=115 // pred_region
          %1047 = dma.done %s1040, 128
        $region120: #{transformer_decoder_pallas.1} parent=115 // pred_fallthru
          _
        %s1048 = sand.u32 %s59, 1
        %s1049 = scalar_lea.sflag [#allocation7], %s1048
        %s1050 = sand.u32 %s105, 1
        %s1051 = smul.addr %s1050, 16
        %s1052 = scalar_lea.vmem [#allocation6], %s1051
        // Predicated region
        $region121: #{transformer_decoder_pallas.1} parent=115 // pred_check
          %p1053 = pneg %p118
        $region122: #{transformer_decoder_pallas.1} parent=115 // pred_check_branch
          %1055 = sbr.rel (%p1053) target = $region124
        $region123: #{transformer_decoder_pallas.1} parent=115 // pred_region
          %1056 = dma.done %s1049, 256
        $region124: #{transformer_decoder_pallas.1} parent=115 // pred_fallthru
          _
        %s1057 = sand.u32 %s59, 1
        %s1058 = scalar_lea.sflag [#allocation7], %s1057
        %s1059 = sand.u32 %s131, 1
        %s1060 = smul.addr %s1059, 192
        %s1061 = scalar_lea.vmem [#allocation8], %s1060
        // Predicated region
        $region125: #{transformer_decoder_pallas.1} parent=115 // pred_check
          %p1062 = pneg %p144
        $region126: #{transformer_decoder_pallas.1} parent=115 // pred_check_branch
          %1064 = sbr.rel (%p1062) target = $region128
        $region127: #{transformer_decoder_pallas.1} parent=115 // pred_region
          %1065 = dma.done %s1058, 3072
        $region128: #{transformer_decoder_pallas.1} parent=115 // pred_fallthru
          _
        %s1066 = sand.u32 %s59, 1
        %s1067 = scalar_lea.sflag [#allocation10], %s1066
        %s1068 = sand.u32 %s183, 1
        %s1069 = smul.addr %s1068, 64
        %s1070 = scalar_lea.vmem [#allocation9], %s1069
        // Predicated region
        $region129: #{transformer_decoder_pallas.1} parent=115 // pred_check
          %p1071 = pneg %p196
        $region130: #{transformer_decoder_pallas.1} parent=115 // pred_check_branch
          %1073 = sbr.rel (%p1071) target = $region132
        $region131: #{transformer_decoder_pallas.1} parent=115 // pred_region
          %1074 = dma.done %s1067, 1024
        $region132: #{transformer_decoder_pallas.1} parent=115 // pred_fallthru
          _
        %s1075 = sand.u32 %s59, 1
        %s1076 = scalar_lea.sflag [#allocation10], %s1075
        %s1077 = sand.u32 %s287, 1
        %s1078 = smul.addr %s1077, 64
        %s1079 = scalar_lea.vmem [#allocation11], %s1078
        // Predicated region
        $region133: #{transformer_decoder_pallas.1} parent=115 // pred_check
          %p1080 = pneg %p300
        $region134: #{transformer_decoder_pallas.1} parent=115 // pred_check_branch
          %1082 = sbr.rel (%p1080) target = $region136
        $region135: #{transformer_decoder_pallas.1} parent=115 // pred_region
          %1083 = dma.done %s1076, 1024
        $region136: #{transformer_decoder_pallas.1} parent=115 // pred_fallthru
          _
        %s1084 = sand.u32 %s59, 1
        %s1085 = scalar_lea.sflag [#allocation13], %s1084
        %s1086 = sand.u32 %s339, 1
        %s1087 = smul.addr %s1086, 128
        %s1088 = scalar_lea.vmem [#allocation12], %s1087
        // Predicated region
        $region137: #{transformer_decoder_pallas.1} parent=115 // pred_check
          %p1089 = pneg %p352
        $region138: #{transformer_decoder_pallas.1} parent=115 // pred_check_branch
          %1091 = sbr.rel (%p1089) target = $region140
        $region139: #{transformer_decoder_pallas.1} parent=115 // pred_region
          %1092 = dma.done %s1085, 2048
        $region140: #{transformer_decoder_pallas.1} parent=115 // pred_fallthru
          _
        %s1093 = sand.u32 %s59, 1
        %s1094 = scalar_lea.sflag [#allocation13], %s1093
        %s1095 = sand.u32 %s391, 1
        %s1096 = smul.addr %s1095, 64
        %s1097 = scalar_lea.vmem [#allocation14], %s1096
        // Predicated region
        $region141: #{transformer_decoder_pallas.1} parent=115 // pred_check
          %p1098 = pneg %p404
        $region142: #{transformer_decoder_pallas.1} parent=115 // pred_check_branch
          %1100 = sbr.rel (%p1098) target = $region144
        $region143: #{transformer_decoder_pallas.1} parent=115 // pred_region
          %1101 = dma.done %s1094, 1024
        $region144: #{transformer_decoder_pallas.1} parent=115 // pred_fallthru
          _
        %s1102 = sand.u32 %s59, 1
        %s1103 = scalar_lea.sflag [#allocation16], %s1102
        %s1104 = sand.u32 %s417, 1
        %s1105 = scalar_lea.vmem [#allocation15], %s1104
        // Predicated region
        $region145: #{transformer_decoder_pallas.1} parent=115 // pred_check
          %p1106 = pneg %p430
        $region146: #{transformer_decoder_pallas.1} parent=115 // pred_check_branch
          %1108 = sbr.rel (%p1106) target = $region148
        $region147: #{transformer_decoder_pallas.1} parent=115 // pred_region
          %1109 = dma.done %s1103, 16
        $region148: #{transformer_decoder_pallas.1} parent=115 // pred_fallthru
          _
        %s1110 = sand.u32 %s59, 1
        %s1111 = scalar_lea.sflag [#allocation16], %s1110
        %s1112 = sand.u32 %s495, 1
        %s1113 = smul.addr %s1112, 128
        %s1114 = scalar_lea.vmem [#allocation17], %s1113
        // Predicated region
        $region149: #{transformer_decoder_pallas.1} parent=115 // pred_check
          %p1115 = pneg %p508
        $region150: #{transformer_decoder_pallas.1} parent=115 // pred_check_branch
          %1117 = sbr.rel (%p1115) target = $region152
        $region151: #{transformer_decoder_pallas.1} parent=115 // pred_region
          %1118 = dma.done %s1111, 2048
        $region152: #{transformer_decoder_pallas.1} parent=115 // pred_fallthru
          _
        %s1119 = sand.u32 %s59, 1
        %s1120 = scalar_lea.sflag [#allocation19], %s1119
        %s1121 = sand.u32 %s521, 1
        %s1122 = smul.addr %s1121, 2
        %s1123 = scalar_lea.vmem [#allocation18], %s1122
        // Predicated region
        $region153: #{transformer_decoder_pallas.1} parent=115 // pred_check
          %p1124 = pneg %p534
        $region154: #{transformer_decoder_pallas.1} parent=115 // pred_check_branch
          %1126 = sbr.rel (%p1124) target = $region156
        $region155: #{transformer_decoder_pallas.1} parent=115 // pred_region
          %1127 = dma.done %s1120, 32
        $region156: #{transformer_decoder_pallas.1} parent=115 // pred_fallthru
          _
        %s1128 = sand.u32 %s59, 1
        %s1129 = scalar_lea.sflag [#allocation19], %s1128
        %s1130 = sand.u32 %s547, 1
        %s1131 = smul.addr %s1130, 128
        %s1132 = scalar_lea.vmem [#allocation20], %s1131
        // Predicated region
        $region157: #{transformer_decoder_pallas.1} parent=115 // pred_check
          %p1133 = pneg %p560
        $region158: #{transformer_decoder_pallas.1} parent=115 // pred_check_branch
          %1135 = sbr.rel (%p1133) target = $region160
        $region159: #{transformer_decoder_pallas.1} parent=115 // pred_region
          %1136 = dma.done %s1129, 2048
        $region160: #{transformer_decoder_pallas.1} parent=115 // pred_fallthru
          _
        %s1137 = sand.u32 %s573, 1
        %s1138 = scalar_lea.sflag [#allocation22], %s1137
        %s1139 = sand.u32 %s573, 1
        %s1140 = scalar_lea.vmem [#allocation21], %s1139
        // Predicated region
        $region161: #{transformer_decoder_pallas.1} parent=115 // pred_check
          %p1141 = pneg %p586
        $region162: #{transformer_decoder_pallas.1} parent=115 // pred_check_branch
          %1143 = sbr.rel (%p1141) target = $region164
        $region163: #{transformer_decoder_pallas.1} parent=115 // pred_region
          %1144 = dma.done %s1138, 16
        $region164: #{transformer_decoder_pallas.1} parent=115 // pred_fallthru
          _
        %s1145 = sand.u32 %s79, 1
        %s1146 = scalar_lea.sflag [#allocation4], %s1145
        %s1147 = sand.u32 %s79, 1
        %s1148 = smul.addr %s1147, 8
        %s1149 = scalar_lea.vmem [#allocation3], %s1148
        %p1150 = pneg %p92
        %p1151 = pneg %p89
        %s1152 = sand.u32 %s59, 1
        %s1153 = scalar_lea.sflag [#allocation7], %s1152
        %s1154 = sand.u32 %s105, 1
        %s1155 = smul.addr %s1154, 16
        %s1156 = scalar_lea.vmem [#allocation6], %s1155
        %p1157 = pneg %p118
        %p1158 = pneg %p115
        %s1159 = sand.u32 %s59, 1
        %s1160 = scalar_lea.sflag [#allocation7], %s1159
        %s1161 = sand.u32 %s131, 1
        %s1162 = smul.addr %s1161, 192
        %s1163 = scalar_lea.vmem [#allocation8], %s1162
        %p1164 = pneg %p144
        %p1165 = pneg %p141
        %p1166 = scmp.lt.s32.totalorder %s64, 1
        %s1167 = scalar_select %p1166, %s64, 1
        %s1168 = smul.addr %s1167, 3
        %s1169 = scalar_lea.vmem %s3, %s1168
        %p1170 = pneg %p170
        %p1171 = pneg %p167
        %s1172 = sand.u32 %s59, 1
        %s1173 = scalar_lea.sflag [#allocation10], %s1172
        %s1174 = sand.u32 %s183, 1
        %s1175 = smul.addr %s1174, 64
        %s1176 = scalar_lea.vmem [#allocation9], %s1175
        %p1177 = pneg %p196
        %p1178 = pneg %p193
        %p1179 = scmp.lt.s32.totalorder %s64, 1
        %s1180 = scalar_select %p1179, %s64, 1
        %s1181 = scalar_lea.vmem %s5, %s1180
        %p1182 = pneg %p222
        %p1183 = pneg %p219
        %p1184 = scmp.lt.s32.totalorder %s64, 1
        %s1185 = scalar_select %p1184, %s64, 1
        %s1186 = scalar_lea.vmem %s6, %s1185
        %p1187 = pneg %p248
        %p1188 = pneg %p245
        %p1189 = scmp.lt.s32.totalorder %s64, 1
        %s1190 = scalar_select %p1189, %s64, 1
        %s1191 = scalar_lea.vmem %s7, %s1190
        %p1192 = pneg %p274
        %p1193 = pneg %p271
        %s1194 = sand.u32 %s59, 1
        %s1195 = scalar_lea.sflag [#allocation10], %s1194
        %s1196 = sand.u32 %s287, 1
        %s1197 = smul.addr %s1196, 64
        %s1198 = scalar_lea.vmem [#allocation11], %s1197
        %p1199 = pneg %p300
        %p1200 = pneg %p297
        %p1201 = scmp.lt.s32.totalorder %s64, 1
        %s1202 = scalar_select %p1201, %s64, 1
        %s1203 = scalar_lea.vmem %s9, %s1202
        %p1204 = pneg %p326
        %p1205 = pneg %p323
        %s1206 = sand.u32 %s59, 1
        %s1207 = scalar_lea.sflag [#allocation13], %s1206
        %s1208 = sand.u32 %s339, 1
        %s1209 = smul.addr %s1208, 128
        %s1210 = scalar_lea.vmem [#allocation12], %s1209
        %p1211 = pneg %p352
        %p1212 = pneg %p349
        %p1213 = scmp.lt.s32.totalorder %s64, 1
        %s1214 = scalar_select %p1213, %s64, 1
        %s1215 = smul.addr %s1214, 2
        %s1216 = scalar_lea.vmem %s11, %s1215
        %p1217 = pneg %p378
        %p1218 = pneg %p375
        %s1219 = sand.u32 %s59, 1
        %s1220 = scalar_lea.sflag [#allocation13], %s1219
        %s1221 = sand.u32 %s391, 1
        %s1222 = smul.addr %s1221, 64
        %s1223 = scalar_lea.vmem [#allocation14], %s1222
        %p1224 = pneg %p404
        %p1225 = pneg %p401
        %s1226 = sand.u32 %s59, 1
        %s1227 = scalar_lea.sflag [#allocation16], %s1226
        %s1228 = sand.u32 %s417, 1
        %s1229 = scalar_lea.vmem [#allocation15], %s1228
        %p1230 = pneg %p430
        %p1231 = pneg %p427
        %p1232 = scmp.lt.s32.totalorder %s64, 1
        %s1233 = scalar_select %p1232, %s64, 1
        %s1234 = scalar_lea.vmem %s14, %s1233
        %p1235 = pneg %p456
        %p1236 = pneg %p453
        %p1237 = scmp.lt.s32.totalorder %s64, 1
        %s1238 = scalar_select %p1237, %s64, 1
        %s1239 = scalar_lea.vmem %s15, %s1238
        %p1240 = pneg %p482
        %p1241 = pneg %p479
        %s1242 = sand.u32 %s59, 1
        %s1243 = scalar_lea.sflag [#allocation16], %s1242
        %s1244 = sand.u32 %s495, 1
        %s1245 = smul.addr %s1244, 128
        %s1246 = scalar_lea.vmem [#allocation17], %s1245
        %p1247 = pneg %p508
        %p1248 = pneg %p505
        %s1249 = sand.u32 %s59, 1
        %s1250 = scalar_lea.sflag [#allocation19], %s1249
        %s1251 = sand.u32 %s521, 1
        %s1252 = smul.addr %s1251, 2
        %s1253 = scalar_lea.vmem [#allocation18], %s1252
        %p1254 = pneg %p534
        %p1255 = pneg %p531
        %s1256 = sand.u32 %s59, 1
        %s1257 = scalar_lea.sflag [#allocation19], %s1256
        %s1258 = sand.u32 %s547, 1
        %s1259 = smul.addr %s1258, 128
        %s1260 = scalar_lea.vmem [#allocation20], %s1259
        %p1261 = pneg %p560
        %p1262 = pneg %p557
        %s1263 = sand.u32 %s573, 1
        %s1264 = scalar_lea.sflag [#allocation22], %s1263
        %s1265 = sand.u32 %s573, 1
        %s1266 = scalar_lea.vmem [#allocation21], %s1265
        %p1267 = pneg %p586
        %p1268 = pneg %p583
        %p1269 = scmp.lt.s32.totalorder %s64, 1
        %s1270 = scalar_select %p1269, %s64, 1
        %s1271 = scalar_lea.vmem %s20, %s1270
        %p1272 = pneg %p612
        %p1273 = pneg %p609
        %p1274 = scmp.lt.s32.totalorder %s64, 1
        %s1275 = scalar_select %p1274, %s64, 1
        %s1276 = scalar_lea.vmem %s21, %s1275
        %p1277 = pneg %p638
        %p1278 = pneg %p635
        %p1279 = pneg %p659
        %p1280 = pneg %p656
        %p1281 = pneg %p680
        %p1282 = pneg %p677
        %p1283 = pneg %p706
        %p1284 = pneg %p703
        %s1285 = sand.u32 %s693, 1
        %s1286 = scalar_lea.sflag [#allocation5], %s1285
        %s1287 = sand.u32 %s693, 1
        %s1288 = smul.addr %s1287, 8
        %s1289 = scalar_lea.vmem [#allocation23], %s1288
        %p1290 = scmp.lt.s32.totalorder %s64, 1
        %s1291 = scalar_select %p1290, %s64, 1
        %s1292 = smul.addr %s1291, 3
        %s1293 = scalar_lea.vmem %s3, %s1292
        %p1294 = scmp.lt.s32.totalorder %s64, 1
        %s1295 = scalar_select %p1294, %s64, 1
        %s1296 = scalar_lea.vmem %s5, %s1295
        %p1297 = scmp.lt.s32.totalorder %s64, 1
        %s1298 = scalar_select %p1297, %s64, 1
        %s1299 = scalar_lea.vmem %s6, %s1298
        %p1300 = scmp.lt.s32.totalorder %s64, 1
        %s1301 = scalar_select %p1300, %s64, 1
        %s1302 = scalar_lea.vmem %s7, %s1301
        %p1303 = scmp.lt.s32.totalorder %s64, 1
        %s1304 = scalar_select %p1303, %s64, 1
        %s1305 = scalar_lea.vmem %s9, %s1304
        %p1306 = scmp.lt.s32.totalorder %s64, 1
        %s1307 = scalar_select %p1306, %s64, 1
        %s1308 = smul.addr %s1307, 2
        %s1309 = scalar_lea.vmem %s11, %s1308
        %p1310 = scmp.lt.s32.totalorder %s64, 1
        %s1311 = scalar_select %p1310, %s64, 1
        %s1312 = scalar_lea.vmem %s14, %s1311
        %p1313 = scmp.lt.s32.totalorder %s64, 1
        %s1314 = scalar_select %p1313, %s64, 1
        %s1315 = scalar_lea.vmem %s15, %s1314
        %p1316 = scmp.lt.s32.totalorder %s64, 1
        %s1317 = scalar_select %p1316, %s64, 1
        %s1318 = scalar_lea.vmem %s20, %s1317
        %p1319 = scmp.lt.s32.totalorder %s64, 1
        %s1320 = scalar_select %p1319, %s64, 1
        %s1321 = scalar_lea.vmem %s21, %s1320
        %p1323 = scmp.eq.s32.totalorder %s64, 0
        // Predicated region
        $region165: #{transformer_decoder_pallas.1} parent=115 // pred_check
          %p1324 = pneg %p1323
        $region166: #{transformer_decoder_pallas.1} parent=115 // pred_check_branch
          %1326 = sbr.rel (%p1324) target = $region168
        $region167: #{transformer_decoder_pallas.1} parent=115 // pred_region
          %v1327 = vld [vmem:[%s1043] sm:$0xff]
          %1328 = vst [vmem:[%s1289] sm:$0xff] %v1327
        $region168: #{transformer_decoder_pallas.1} parent=115 // pred_fallthru
          _
        %v1329 = vld [vmem:[%s1289] sm:$0xff]
        %v1330 = vld [vmem:[%s1052] sm:$0xff]
        %v1331 = vld [vmem:[%s1052 + $0x8] sm:$0xff]
        %v1332 = vpack.c.bf16 %v1329, %v1329
        %v1333 = vld [vmem:[%s1061] sm:$0xff]
        %v1334 = vld [vmem:[%s1061 + $0x8] sm:$0xf]
        %v1335 = vld [vmem:[%s1061 + $0xc] sm:$0xff]
        %v1336 = vld [vmem:[%s1061 + $0x14] sm:$0xf]
        %v1337 = vld [vmem:[%s1061 + $0x18] sm:$0xff]
        %v1338 = vld [vmem:[%s1061 + $0x20] sm:$0xf]
        %v1339 = vld [vmem:[%s1061 + $0x24] sm:$0xff]
        %v1340 = vld [vmem:[%s1061 + $0x2c] sm:$0xf]
        %v1341 = vld [vmem:[%s1061 + $0x30] sm:$0xff]
        %v1342 = vld [vmem:[%s1061 + $0x38] sm:$0xf]
        %v1343 = vld [vmem:[%s1061 + $0x3c] sm:$0xff]
        %v1344 = vld [vmem:[%s1061 + $0x44] sm:$0xf]
        %v1345 = vld [vmem:[%s1061 + $0x48] sm:$0xff]
        %v1346 = vld [vmem:[%s1061 + $0x50] sm:$0xf]
        %v1347 = vld [vmem:[%s1061 + $0x54] sm:$0xff]
        %v1348 = vld [vmem:[%s1061 + $0x5c] sm:$0xf]
        %v1349 = vld [vmem:[%s1061 + $0x60] sm:$0xff]
        %v1350 = vld [vmem:[%s1061 + $0x68] sm:$0xf]
        %v1351 = vld [vmem:[%s1061 + $0x6c] sm:$0xff]
        %v1352 = vld [vmem:[%s1061 + $0x74] sm:$0xf]
        %v1353 = vld [vmem:[%s1061 + $0x78] sm:$0xff]
        %v1354 = vld [vmem:[%s1061 + $0x80] sm:$0xf]
        %v1355 = vld [vmem:[%s1061 + $0x84] sm:$0xff]
        %v1356 = vld [vmem:[%s1061 + $0x8c] sm:$0xf]
        %v1357 = vld [vmem:[%s1061 + $0x90] sm:$0xff]
        %v1358 = vld [vmem:[%s1061 + $0x98] sm:$0xf]
        %v1359 = vld [vmem:[%s1061 + $0x9c] sm:$0xff]
        %v1360 = vld [vmem:[%s1061 + $0xa4] sm:$0xf]
        %v1361 = vld [vmem:[%s1061 + $0xa8] sm:$0xff]
        %v1362 = vld [vmem:[%s1061 + $0xb0] sm:$0xf]
        %v1363 = vld [vmem:[%s1061 + $0xb4] sm:$0xff]
        %v1364 = vld [vmem:[%s1061 + $0xbc] sm:$0xf]
        %v1365 = vld [vmem:[%s1293] sm:$0x7]
        %v1367 = vlaneseq
        %v1368 = vshrl.u32 %v1367, 7
        %v1369 = vsub.s32 0, %v1368
        %v1370 = vrot.slane %v1365, %v1369
        %v1371 = vlaneseq
        %v1372 = vshrl.u32 %v1371, 7
        %v1373 = vsub.s32 1, %v1372
        %v1374 = vrot.slane %v1365, %v1373
        %v1375 = vlaneseq
        %v1376 = vshrl.u32 %v1375, 7
        %v1377 = vsub.s32 2, %v1376
        %v1378 = vrot.slane %v1365, %v1377
        %v1414 = vunpack.c.l.b16 %v1333
        %v1415 = vunpack.c.h.b16 %v1333
        %v1416 = vunpack.c.l.b16 %v1334
        %v1417 = vunpack.c.l.b16 %v1335
        %v1418 = vunpack.c.h.b16 %v1335
        %v1419 = vunpack.c.l.b16 %v1336
        %v1420 = vunpack.c.l.b16 %v1337
        %v1421 = vunpack.c.h.b16 %v1337
        %v1422 = vunpack.c.l.b16 %v1338
        %v1423 = vunpack.c.l.b16 %v1339
        %v1424 = vunpack.c.h.b16 %v1339
        %v1425 = vunpack.c.l.b16 %v1340
        %v1426 = vunpack.c.l.b16 %v1341
        %v1427 = vunpack.c.h.b16 %v1341
        %v1428 = vunpack.c.l.b16 %v1342
        %v1429 = vunpack.c.l.b16 %v1343
        %v1430 = vunpack.c.h.b16 %v1343
        %v1431 = vunpack.c.l.b16 %v1344
        %v1432 = vunpack.c.l.b16 %v1345
        %v1433 = vunpack.c.h.b16 %v1345
        %v1434 = vunpack.c.l.b16 %v1346
        %v1435 = vunpack.c.l.b16 %v1347
        %v1436 = vunpack.c.h.b16 %v1347
        %v1437 = vunpack.c.l.b16 %v1348
        %v1438 = vunpack.c.l.b16 %v1349
        %v1439 = vunpack.c.h.b16 %v1349
        %v1440 = vunpack.c.l.b16 %v1350
        %v1441 = vunpack.c.l.b16 %v1351
        %v1442 = vunpack.c.h.b16 %v1351
        %v1443 = vunpack.c.l.b16 %v1352
        %v1444 = vunpack.c.l.b16 %v1353
        %v1445 = vunpack.c.h.b16 %v1353
        %v1446 = vunpack.c.l.b16 %v1354
        %v1447 = vunpack.c.l.b16 %v1355
        %v1448 = vunpack.c.h.b16 %v1355
        %v1449 = vunpack.c.l.b16 %v1356
        %v1450 = vunpack.c.l.b16 %v1357
        %v1451 = vunpack.c.h.b16 %v1357
        %v1452 = vunpack.c.l.b16 %v1358
        %v1453 = vunpack.c.l.b16 %v1359
        %v1454 = vunpack.c.h.b16 %v1359
        %v1455 = vunpack.c.l.b16 %v1360
        %v1456 = vunpack.c.l.b16 %v1361
        %v1457 = vunpack.c.h.b16 %v1361
        %v1458 = vunpack.c.l.b16 %v1362
        %v1459 = vunpack.c.l.b16 %v1363
        %v1460 = vunpack.c.h.b16 %v1363
        %v1461 = vunpack.c.l.b16 %v1364
        %v1462 = vpack.c.b16 %v1417, %v1414
        %v1463 = vpack.c.b16 %v1418, %v1415
        %v1464 = vpack.c.b16 %v1419, %v1416
        %v1465 = vpack.c.b16 %v1423, %v1420
        %v1466 = vpack.c.b16 %v1424, %v1421
        %v1467 = vpack.c.b16 %v1425, %v1422
        %v1468 = vpack.c.b16 %v1429, %v1426
        %v1469 = vpack.c.b16 %v1430, %v1427
        %v1470 = vpack.c.b16 %v1431, %v1428
        %v1471 = vpack.c.b16 %v1435, %v1432
        %v1472 = vpack.c.b16 %v1436, %v1433
        %v1473 = vpack.c.b16 %v1437, %v1434
        %v1474 = vpack.c.b16 %v1441, %v1438
        %v1475 = vpack.c.b16 %v1442, %v1439
        %v1476 = vpack.c.b16 %v1443, %v1440
        %v1477 = vpack.c.b16 %v1447, %v1444
        %v1478 = vpack.c.b16 %v1448, %v1445
        %v1479 = vpack.c.b16 %v1449, %v1446
        %v1480 = vpack.c.b16 %v1453, %v1450
        %v1481 = vpack.c.b16 %v1454, %v1451
        %v1482 = vpack.c.b16 %v1455, %v1452
        %v1483 = vpack.c.b16 %v1459, %v1456
        %v1484 = vpack.c.b16 %v1460, %v1457
        %v1485 = vpack.c.b16 %v1461, %v1458
        %1510 = vmatprep.subr.bf16.mxu0 %v1463
        %1511 = vmatpush1.bf16.msra.mxu0 %v1462
        %1512 = vmatprep.subr.bf16.mxu0 %v1466
        %1513 = vmatpush1.bf16.msra.mxu0 %v1465
        %1514 = vmatprep.subr.bf16.mxu0 %v1469
        %1515 = vmatpush1.bf16.msra.mxu0 %v1468
        %1516 = vmatprep.subr.bf16.mxu0 %v1472
        %1517 = vmatpush1.bf16.msra.mxu0 %v1471
        %1518 = vmatprep.subr.bf16.mxu0 %v1475
        %1519 = vmatpush1.bf16.msra.mxu0 %v1474
        %1520 = vmatprep.subr.bf16.mxu0 %v1478
        %1521 = vmatpush1.bf16.msra.mxu0 %v1477
        %1522 = vmatprep.subr.bf16.mxu0 %v1481
        %1523 = vmatpush1.bf16.msra.mxu0 %v1480
        %1524 = vmatprep.subr.bf16.mxu0 %v1484
        %1525 = vmatpush1.bf16.msra.mxu0 %v1483
        %1526 = vmatprep.subr.bf16.mxu0 0
        %1527 = vmatpush1.bf16.msra.mxu0 0
        %1528 = vmatprep.subr.bf16.mxu0 0
        %1529 = vmatpush1.bf16.msra.mxu0 0
        %1530 = vmatprep.subr.bf16.mxu0 0
        %1531 = vmatpush1.bf16.msra.mxu0 0
        %1532 = vmatprep.subr.bf16.mxu0 0
        %1533 = vmatpush1.bf16.msra.mxu0 0
        %1534 = vmatprep.subr.bf16.mxu0 0
        %1535 = vmatpush1.bf16.msra.mxu0 0
        %1536 = vmatprep.subr.bf16.mxu0 0
        %1537 = vmatpush1.bf16.msra.mxu0 0
        %1538 = vmatprep.subr.bf16.mxu0 0
        %1539 = vmatpush1.bf16.msra.mxu0 0
        %1540 = vmatprep.subr.bf16.mxu0 0
        %1541 = vmatpush1.bf16.msra.mxu0 0
        %1542 = vmatprep.mubr.bf16.mxu0 0
        %1543 = vmatmul.mubr.bf16.gmra.mrb[0].mxu0 %v1332
        %v1544 = vpop.f32.mrb[0].mxu0
        %v1545 = vadd.f32 %v1370, %v1544
        %v1546 = vpop.f32.mrb[0].mxu0
        %v1547 = vadd.f32 %v1374, %v1546
        %v1548 = vpop.f32.mrb[0].mxu0
        %v1549 = vpop.f32.mrb[0].mxu0
        %1550 = vdwg.mxu0
        %1551 = vmatprep.subr.bf16.mxu0 0
        %1552 = vmatpush1.bf16.msra.mxu0 %v1464
        %1553 = vmatprep.subr.bf16.mxu0 0
        %1554 = vmatpush1.bf16.msra.mxu0 %v1467
        %1555 = vmatprep.subr.bf16.mxu0 0
        %1556 = vmatpush1.bf16.msra.mxu0 %v1470
        %1557 = vmatprep.subr.bf16.mxu0 0
        %1558 = vmatpush1.bf16.msra.mxu0 %v1473
        %1559 = vmatprep.subr.bf16.mxu0 0
        %1560 = vmatpush1.bf16.msra.mxu0 %v1476
        %1561 = vmatprep.subr.bf16.mxu0 0
        %1562 = vmatpush1.bf16.msra.mxu0 %v1479
        %1563 = vmatprep.subr.bf16.mxu0 0
        %1564 = vmatpush1.bf16.msra.mxu0 %v1482
        %1565 = vmatprep.subr.bf16.mxu0 0
        %1566 = vmatpush1.bf16.msra.mxu0 %v1485
        %1567 = vmatprep.subr.bf16.mxu0 0
        %1568 = vmatpush1.bf16.msra.mxu0 0
        %1569 = vmatprep.subr.bf16.mxu0 0
        %1570 = vmatpush1.bf16.msra.mxu0 0
        %1571 = vmatprep.subr.bf16.mxu0 0
        %1572 = vmatpush1.bf16.msra.mxu0 0
        %1573 = vmatprep.subr.bf16.mxu0 0
        %1574 = vmatpush1.bf16.msra.mxu0 0
        %1575 = vmatprep.subr.bf16.mxu0 0
        %1576 = vmatpush1.bf16.msra.mxu0 0
        %1577 = vmatprep.subr.bf16.mxu0 0
        %1578 = vmatpush1.bf16.msra.mxu0 0
        %1579 = vmatprep.subr.bf16.mxu0 0
        %1580 = vmatpush1.bf16.msra.mxu0 0
        %1581 = vmatprep.subr.bf16.mxu0 0
        %1582 = vmatpush1.bf16.msra.mxu0 0
        %1583 = vmatprep.mubr.bf16.mxu0 0
        %1584 = vmatmul.mubr.bf16.gmra.mrb[0].mxu0 %v1332
        %v1585 = vpop.f32.mrb[0].mxu0
        %v1586 = vadd.f32 %v1378, %v1585
        %v1587 = vpop.f32.mrb[0].mxu0
        %v1588 = vpop.f32.mrb[0].mxu0
        %v1589 = vpop.f32.mrb[0].mxu0
        %1590 = vdwg.mxu0
        %v1591 = vld [vmem:[%s1070] sm:$0xf]
        %v1592 = vld [vmem:[%s1070 + $0x4] sm:$0xf]
        %v1593 = vld [vmem:[%s1070 + $0x8] sm:$0xf]
        %v1594 = vld [vmem:[%s1070 + $0xc] sm:$0xf]
        %v1595 = vld [vmem:[%s1070 + $0x10] sm:$0xf]
        %v1596 = vld [vmem:[%s1070 + $0x14] sm:$0xf]
        %v1597 = vld [vmem:[%s1070 + $0x18] sm:$0xf]
        %v1598 = vld [vmem:[%s1070 + $0x1c] sm:$0xf]
        %v1599 = vld [vmem:[%s1070 + $0x20] sm:$0xf]
        %v1600 = vld [vmem:[%s1070 + $0x24] sm:$0xf]
        %v1601 = vld [vmem:[%s1070 + $0x28] sm:$0xf]
        %v1602 = vld [vmem:[%s1070 + $0x2c] sm:$0xf]
        %v1603 = vld [vmem:[%s1070 + $0x30] sm:$0xf]
        %v1604 = vld [vmem:[%s1070 + $0x34] sm:$0xf]
        %v1605 = vld [vmem:[%s1070 + $0x38] sm:$0xf]
        %v1606 = vld [vmem:[%s1070 + $0x3c] sm:$0xf]
        %v1607 = vld [vmem:[%s1296] sm:$0x1]
        %v1608 = vpack.c.bf16 %v1545, %v1545
        %v1609 = vpack.c.bf16 %v1547, %v1547
        %v1610 = vpack.c.bf16 %v1586, %v1586
        %vm1611 = vcmask 261120
        %v1613 = vsel %vm1611, %v1608, 0
        %v1616 = vsel %vm1611, %v1609, 0
        %1618 = vmatprep.subr.bf16.mxu0 0
        %1619 = vmatpush1.bf16.xpose.msra.mxu0 %v1616
        %1620 = vmatprep.subr.bf16.mxu0 0
        %1621 = vmatpush1.bf16.xpose.msra.mxu0 0
        %1622 = vmatprep.subr.bf16.mxu0 0
        %1623 = vmatpush1.bf16.xpose.msra.mxu0 0
        %1624 = vmatprep.subr.bf16.mxu0 0
        %1625 = vmatpush1.bf16.xpose.msra.mxu0 0
        %1626 = vmatprep.subr.bf16.mxu0 0
        %1627 = vmatpush1.bf16.xpose.msra.mxu0 0
        %1628 = vmatprep.subr.bf16.mxu0 0
        %1629 = vmatpush1.bf16.xpose.msra.mxu0 0
        %1630 = vmatprep.subr.bf16.mxu0 0
        %1631 = vmatpush1.bf16.xpose.msra.mxu0 0
        %1632 = vmatprep.subr.bf16.mxu0 0
        %1633 = vmatpush1.bf16.xpose.msra.mxu0 0
        %1634 = vmatprep.subr.bf16.mxu0 0
        %1635 = vmatpush1.bf16.xpose.msra.mxu0 0
        %1636 = vmatprep.subr.bf16.mxu0 0
        %1637 = vmatpush1.bf16.xpose.msra.mxu0 0
        %1638 = vmatprep.subr.bf16.mxu0 0
        %1639 = vmatpush1.bf16.xpose.msra.mxu0 0
        %1640 = vmatprep.subr.bf16.mxu0 0
        %1641 = vmatpush1.bf16.xpose.msra.mxu0 0
        %1642 = vmatprep.subr.bf16.mxu0 0
        %1643 = vmatpush1.bf16.xpose.msra.mxu0 0
        %1644 = vmatprep.subr.bf16.mxu0 0
        %1645 = vmatpush1.bf16.xpose.msra.mxu0 0
        %1646 = vmatprep.subr.bf16.mxu0 0
        %1647 = vmatpush1.bf16.xpose.msra.mxu0 0
        %1648 = vmatprep.subr.bf16.mxu0 0
        %1649 = vmatpush1.bf16.xpose.msra.mxu0 0
        %1650 = vmatprep.mubr.bf16.mxu0 0
        %1651 = vmatmul.mubr.bf16.gmra.mrb[0].mxu0 %v1613
        %v1652 = vpop.f32.mrb[0].mxu0
        %v1653 = vadd.f32 0.0, %v1652
        %v1654 = vpop.f32.mrb[0].mxu0
        %v1655 = vpop.f32.mrb[0].mxu0
        %v1656 = vpop.f32.mrb[0].mxu0
        %1657 = vdwg.mxu0
        %vm1658 = vcmask 64512
        %v1659 = vsel %vm1658, %v1653, -inf
        %1660 = vmax.xlane.f32.xlu0 %v1659
        %v1661 = vpop.xlane.xlu0 %1660
        %v1662 = vsub.f32 %v1653, %v1661
        %v1663 = vmul.f32 %v1662, 1.442695
        %v1664 = vpow.pop %v1663
        %v1665 = vsel %vm1658, %v1664, 0.0
        %1666 = vadd.xlane.f32.xlu0 %v1665
        %v1667 = vpop.xlane.xlu0 %1666
        %v1668 = vrcp.pop %v1667
        %v1669 = vmul.f32 %v1664, %v1668
        %v1670 = vpack.c.bf16 %v1669, %v1669
        %v1672 = vsel %vm1658, %v1670, 0
        %vm1674 = vcmask 1043456
        %v1676 = vsel %vm1674, %v1610, 0
        %1678 = vmatprep.subr.bf16.mxu0 0
        %1679 = vmatpush1.bf16.msra.mxu0 %v1676
        %1680 = vmatprep.subr.bf16.mxu0 0
        %1681 = vmatpush1.bf16.msra.mxu0 0
        %1682 = vmatprep.subr.bf16.mxu0 0
        %1683 = vmatpush1.bf16.msra.mxu0 0
        %1684 = vmatprep.subr.bf16.mxu0 0
        %1685 = vmatpush1.bf16.msra.mxu0 0
        %1686 = vmatprep.subr.bf16.mxu0 0
        %1687 = vmatpush1.bf16.msra.mxu0 0
        %1688 = vmatprep.subr.bf16.mxu0 0
        %1689 = vmatpush1.bf16.msra.mxu0 0
        %1690 = vmatprep.subr.bf16.mxu0 0
        %1691 = vmatpush1.bf16.msra.mxu0 0
        %1692 = vmatprep.subr.bf16.mxu0 0
        %1693 = vmatpush1.bf16.msra.mxu0 0
        %1694 = vmatprep.subr.bf16.mxu0 0
        %1695 = vmatpush1.bf16.msra.mxu0 0
        %1696 = vmatprep.subr.bf16.mxu0 0
        %1697 = vmatpush1.bf16.msra.mxu0 0
        %1698 = vmatprep.subr.bf16.mxu0 0
        %1699 = vmatpush1.bf16.msra.mxu0 0
        %1700 = vmatprep.subr.bf16.mxu0 0
        %1701 = vmatpush1.bf16.msra.mxu0 0
        %1702 = vmatprep.subr.bf16.mxu0 0
        %1703 = vmatpush1.bf16.msra.mxu0 0
        %1704 = vmatprep.subr.bf16.mxu0 0
        %1705 = vmatpush1.bf16.msra.mxu0 0
        %1706 = vmatprep.subr.bf16.mxu0 0
        %1707 = vmatpush1.bf16.msra.mxu0 0
        %1708 = vmatprep.subr.bf16.mxu0 0
        %1709 = vmatpush1.bf16.msra.mxu0 0
        %1710 = vmatprep.mubr.bf16.mxu0 0
        %1711 = vmatmul.mubr.bf16.gmra.mrb[0].mxu0 %v1672
        %v1712 = vpop.f32.mrb[0].mxu0
        %v1713 = vadd.f32 0.0, %v1712
        %v1714 = vpop.f32.mrb[0].mxu0
        %v1715 = vpop.f32.mrb[0].mxu0
        %v1716 = vpop.f32.mrb[0].mxu0
        %1717 = vdwg.mxu0
        %1718 = vst.msk [vmem:[#allocation2] sm:$0xff] %vm1611, %v1713
        %1720 = vrot.lane.b32.xlu0 %v1608, 96
        %v1721 = vpop.permute.xlu0 %1720
        %1723 = vrot.lane.b32.xlu0 %v1609, 96
        %v1724 = vpop.permute.xlu0 %1723
        %v1726 = vsel %vm1611, %v1721, 0
        %v1729 = vsel %vm1611, %v1724, 0
        %1731 = vmatprep.subr.bf16.mxu0 0
        %1732 = vmatpush1.bf16.xpose.msra.mxu0 %v1729
        %1733 = vmatprep.subr.bf16.mxu0 0
        %1734 = vmatpush1.bf16.xpose.msra.mxu0 0
        %1735 = vmatprep.subr.bf16.mxu0 0
        %1736 = vmatpush1.bf16.xpose.msra.mxu0 0
        %1737 = vmatprep.subr.bf16.mxu0 0
        %1738 = vmatpush1.bf16.xpose.msra.mxu0 0
        %1739 = vmatprep.subr.bf16.mxu0 0
        %1740 = vmatpush1.bf16.xpose.msra.mxu0 0
        %1741 = vmatprep.subr.bf16.mxu0 0
        %1742 = vmatpush1.bf16.xpose.msra.mxu0 0
        %1743 = vmatprep.subr.bf16.mxu0 0
        %1744 = vmatpush1.bf16.xpose.msra.mxu0 0
        %1745 = vmatprep.subr.bf16.mxu0 0
        %1746 = vmatpush1.bf16.xpose.msra.mxu0 0
        %1747 = vmatprep.subr.bf16.mxu0 0
        %1748 = vmatpush1.bf16.xpose.msra.mxu0 0
        %1749 = vmatprep.subr.bf16.mxu0 0
        %1750 = vmatpush1.bf16.xpose.msra.mxu0 0
        %1751 = vmatprep.subr.bf16.mxu0 0
        %1752 = vmatpush1.bf16.xpose.msra.mxu0 0
        %1753 = vmatprep.subr.bf16.mxu0 0
        %1754 = vmatpush1.bf16.xpose.msra.mxu0 0
        %1755 = vmatprep.subr.bf16.mxu0 0
        %1756 = vmatpush1.bf16.xpose.msra.mxu0 0
        %1757 = vmatprep.subr.bf16.mxu0 0
        %1758 = vmatpush1.bf16.xpose.msra.mxu0 0
        %1759 = vmatprep.subr.bf16.mxu0 0
        %1760 = vmatpush1.bf16.xpose.msra.mxu0 0
        %1761 = vmatprep.subr.bf16.mxu0 0
        %1762 = vmatpush1.bf16.xpose.msra.mxu0 0
        %1763 = vmatprep.mubr.bf16.mxu0 0
        %1764 = vmatmul.mubr.bf16.gmra.mrb[0].mxu0 %v1726
        %v1765 = vpop.f32.mrb[0].mxu0
        %v1766 = vadd.f32 0.0, %v1765
        %v1767 = vpop.f32.mrb[0].mxu0
        %v1768 = vpop.f32.mrb[0].mxu0
        %v1769 = vpop.f32.mrb[0].mxu0
        %1770 = vdwg.mxu0
        %v1771 = vsel %vm1658, %v1766, -inf
        %1772 = vmax.xlane.f32.xlu0 %v1771
        %v1773 = vpop.xlane.xlu0 %1772
        %v1774 = vsub.f32 %v1766, %v1773
        %v1775 = vmul.f32 %v1774, 1.442695
        %v1776 = vpow.pop %v1775
        %v1777 = vsel %vm1658, %v1776, 0.0
        %1778 = vadd.xlane.f32.xlu0 %v1777
        %v1779 = vpop.xlane.xlu0 %1778
        %v1780 = vrcp.pop %v1779
        %v1781 = vmul.f32 %v1776, %v1780
        %v1782 = vpack.c.bf16 %v1781, %v1781
        %1784 = vrot.lane.b32.xlu0 %v1610, 96
        %v1785 = vpop.permute.xlu0 %1784
        %v1787 = vsel %vm1658, %v1782, 0
        %v1790 = vsel %vm1674, %v1785, 0
        %1792 = vmatprep.subr.bf16.mxu0 0
        %1793 = vmatpush1.bf16.msra.mxu0 %v1790
        %1794 = vmatprep.subr.bf16.mxu0 0
        %1795 = vmatpush1.bf16.msra.mxu0 0
        %1796 = vmatprep.subr.bf16.mxu0 0
        %1797 = vmatpush1.bf16.msra.mxu0 0
        %1798 = vmatprep.subr.bf16.mxu0 0
        %1799 = vmatpush1.bf16.msra.mxu0 0
        %1800 = vmatprep.subr.bf16.mxu0 0
        %1801 = vmatpush1.bf16.msra.mxu0 0
        %1802 = vmatprep.subr.bf16.mxu0 0
        %1803 = vmatpush1.bf16.msra.mxu0 0
        %1804 = vmatprep.subr.bf16.mxu0 0
        %1805 = vmatpush1.bf16.msra.mxu0 0
        %1806 = vmatprep.subr.bf16.mxu0 0
        %1807 = vmatpush1.bf16.msra.mxu0 0
        %1808 = vmatprep.subr.bf16.mxu0 0
        %1809 = vmatpush1.bf16.msra.mxu0 0
        %1810 = vmatprep.subr.bf16.mxu0 0
        %1811 = vmatpush1.bf16.msra.mxu0 0
        %1812 = vmatprep.subr.bf16.mxu0 0
        %1813 = vmatpush1.bf16.msra.mxu0 0
        %1814 = vmatprep.subr.bf16.mxu0 0
        %1815 = vmatpush1.bf16.msra.mxu0 0
        %1816 = vmatprep.subr.bf16.mxu0 0
        %1817 = vmatpush1.bf16.msra.mxu0 0
        %1818 = vmatprep.subr.bf16.mxu0 0
        %1819 = vmatpush1.bf16.msra.mxu0 0
        %1820 = vmatprep.subr.bf16.mxu0 0
        %1821 = vmatpush1.bf16.msra.mxu0 0
        %1822 = vmatprep.subr.bf16.mxu0 0
        %1823 = vmatpush1.bf16.msra.mxu0 0
        %1824 = vmatprep.mubr.bf16.mxu0 0
        %1825 = vmatmul.mubr.bf16.gmra.mrb[0].mxu0 %v1787
        %v1826 = vpop.f32.mrb[0].mxu0
        %v1827 = vadd.f32 0.0, %v1826
        %v1828 = vpop.f32.mrb[0].mxu0
        %v1829 = vpop.f32.mrb[0].mxu0
        %v1830 = vpop.f32.mrb[0].mxu0
        %1831 = vdwg.mxu0
        %1833 = vrot.lane.b32.xlu0 %v1827, 32
        %v1834 = vpop.permute.xlu0 %1833
        %vm1836 = vcmask 523520
        %1837 = vst.msk [vmem:[#allocation2] sm:$0xff] %vm1836, %v1834
        %1838 = vrot.lane.b32.xlu0 %v1608, 64
        %v1839 = vpop.permute.xlu0 %1838
        %1840 = vrot.lane.b32.xlu0 %v1609, 64
        %v1841 = vpop.permute.xlu0 %1840
        %v1843 = vsel %vm1611, %v1839, 0
        %v1846 = vsel %vm1611, %v1841, 0
        %1848 = vmatprep.subr.bf16.mxu0 0
        %1849 = vmatpush1.bf16.xpose.msra.mxu0 %v1846
        %1850 = vmatprep.subr.bf16.mxu0 0
        %1851 = vmatpush1.bf16.xpose.msra.mxu0 0
        %1852 = vmatprep.subr.bf16.mxu0 0
        %1853 = vmatpush1.bf16.xpose.msra.mxu0 0
        %1854 = vmatprep.subr.bf16.mxu0 0
        %1855 = vmatpush1.bf16.xpose.msra.mxu0 0
        %1856 = vmatprep.subr.bf16.mxu0 0
        %1857 = vmatpush1.bf16.xpose.msra.mxu0 0
        %1858 = vmatprep.subr.bf16.mxu0 0
        %1859 = vmatpush1.bf16.xpose.msra.mxu0 0
        %1860 = vmatprep.subr.bf16.mxu0 0
        %1861 = vmatpush1.bf16.xpose.msra.mxu0 0
        %1862 = vmatprep.subr.bf16.mxu0 0
        %1863 = vmatpush1.bf16.xpose.msra.mxu0 0
        %1864 = vmatprep.subr.bf16.mxu0 0
        %1865 = vmatpush1.bf16.xpose.msra.mxu0 0
        %1866 = vmatprep.subr.bf16.mxu0 0
        %1867 = vmatpush1.bf16.xpose.msra.mxu0 0
        %1868 = vmatprep.subr.bf16.mxu0 0
        %1869 = vmatpush1.bf16.xpose.msra.mxu0 0
        %1870 = vmatprep.subr.bf16.mxu0 0
        %1871 = vmatpush1.bf16.xpose.msra.mxu0 0
        %1872 = vmatprep.subr.bf16.mxu0 0
        %1873 = vmatpush1.bf16.xpose.msra.mxu0 0
        %1874 = vmatprep.subr.bf16.mxu0 0
        %1875 = vmatpush1.bf16.xpose.msra.mxu0 0
        %1876 = vmatprep.subr.bf16.mxu0 0
        %1877 = vmatpush1.bf16.xpose.msra.mxu0 0
        %1878 = vmatprep.subr.bf16.mxu0 0
        %1879 = vmatpush1.bf16.xpose.msra.mxu0 0
        %1880 = vmatprep.mubr.bf16.mxu0 0
        %1881 = vmatmul.mubr.bf16.gmra.mrb[0].mxu0 %v1843
        %v1882 = vpop.f32.mrb[0].mxu0
        %v1883 = vadd.f32 0.0, %v1882
        %v1884 = vpop.f32.mrb[0].mxu0
        %v1885 = vpop.f32.mrb[0].mxu0
        %v1886 = vpop.f32.mrb[0].mxu0
        %1887 = vdwg.mxu0
        %v1888 = vsel %vm1658, %v1883, -inf
        %1889 = vmax.xlane.f32.xlu0 %v1888
        %v1890 = vpop.xlane.xlu0 %1889
        %v1891 = vsub.f32 %v1883, %v1890
        %v1892 = vmul.f32 %v1891, 1.442695
        %v1893 = vpow.pop %v1892
        %v1894 = vsel %vm1658, %v1893, 0.0
        %1895 = vadd.xlane.f32.xlu0 %v1894
        %v1896 = vpop.xlane.xlu0 %1895
        %v1897 = vrcp.pop %v1896
        %v1898 = vmul.f32 %v1893, %v1897
        %v1899 = vpack.c.bf16 %v1898, %v1898
        %1900 = vrot.lane.b32.xlu0 %v1610, 64
        %v1901 = vpop.permute.xlu0 %1900
        %v1903 = vsel %vm1658, %v1899, 0
        %v1906 = vsel %vm1674, %v1901, 0
        %1908 = vmatprep.subr.bf16.mxu0 0
        %1909 = vmatpush1.bf16.msra.mxu0 %v1906
        %1910 = vmatprep.subr.bf16.mxu0 0
        %1911 = vmatpush1.bf16.msra.mxu0 0
        %1912 = vmatprep.subr.bf16.mxu0 0
        %1913 = vmatpush1.bf16.msra.mxu0 0
        %1914 = vmatprep.subr.bf16.mxu0 0
        %1915 = vmatpush1.bf16.msra.mxu0 0
        %1916 = vmatprep.subr.bf16.mxu0 0
        %1917 = vmatpush1.bf16.msra.mxu0 0
        %1918 = vmatprep.subr.bf16.mxu0 0
        %1919 = vmatpush1.bf16.msra.mxu0 0
        %1920 = vmatprep.subr.bf16.mxu0 0
        %1921 = vmatpush1.bf16.msra.mxu0 0
        %1922 = vmatprep.subr.bf16.mxu0 0
        %1923 = vmatpush1.bf16.msra.mxu0 0
        %1924 = vmatprep.subr.bf16.mxu0 0
        %1925 = vmatpush1.bf16.msra.mxu0 0
        %1926 = vmatprep.subr.bf16.mxu0 0
        %1927 = vmatpush1.bf16.msra.mxu0 0
        %1928 = vmatprep.subr.bf16.mxu0 0
        %1929 = vmatpush1.bf16.msra.mxu0 0
        %1930 = vmatprep.subr.bf16.mxu0 0
        %1931 = vmatpush1.bf16.msra.mxu0 0
        %1932 = vmatprep.subr.bf16.mxu0 0
        %1933 = vmatpush1.bf16.msra.mxu0 0
        %1934 = vmatprep.subr.bf16.mxu0 0
        %1935 = vmatpush1.bf16.msra.mxu0 0
        %1936 = vmatprep.subr.bf16.mxu0 0
        %1937 = vmatpush1.bf16.msra.mxu0 0
        %1938 = vmatprep.subr.bf16.mxu0 0
        %1939 = vmatpush1.bf16.msra.mxu0 0
        %1940 = vmatprep.mubr.bf16.mxu0 0
        %1941 = vmatmul.mubr.bf16.gmra.mrb[0].mxu0 %v1903
        %v1942 = vpop.f32.mrb[0].mxu0
        %v1943 = vadd.f32 0.0, %v1942
        %v1944 = vpop.f32.mrb[0].mxu0
        %v1945 = vpop.f32.mrb[0].mxu0
        %v1946 = vpop.f32.mrb[0].mxu0
        %1947 = vdwg.mxu0
        %1949 = vrot.lane.b32.xlu0 %v1943, 64
        %v1950 = vpop.permute.xlu0 %1949
        %vm1952 = vcmask 785920
        %1953 = vst.msk [vmem:[#allocation2] sm:$0xff] %vm1952, %v1950
        %1954 = vrot.lane.b32.xlu0 %v1608, 32
        %v1955 = vpop.permute.xlu0 %1954
        %1956 = vrot.lane.b32.xlu0 %v1609, 32
        %v1957 = vpop.permute.xlu0 %1956
        %v1959 = vsel %vm1611, %v1955, 0
        %v1962 = vsel %vm1611, %v1957, 0
        %1964 = vmatprep.subr.bf16.mxu0 0
        %1965 = vmatpush1.bf16.xpose.msra.mxu0 %v1962
        %1966 = vmatprep.subr.bf16.mxu0 0
        %1967 = vmatpush1.bf16.xpose.msra.mxu0 0
        %1968 = vmatprep.subr.bf16.mxu0 0
        %1969 = vmatpush1.bf16.xpose.msra.mxu0 0
        %1970 = vmatprep.subr.bf16.mxu0 0
        %1971 = vmatpush1.bf16.xpose.msra.mxu0 0
        %1972 = vmatprep.subr.bf16.mxu0 0
        %1973 = vmatpush1.bf16.xpose.msra.mxu0 0
        %1974 = vmatprep.subr.bf16.mxu0 0
        %1975 = vmatpush1.bf16.xpose.msra.mxu0 0
        %1976 = vmatprep.subr.bf16.mxu0 0
        %1977 = vmatpush1.bf16.xpose.msra.mxu0 0
        %1978 = vmatprep.subr.bf16.mxu0 0
        %1979 = vmatpush1.bf16.xpose.msra.mxu0 0
        %1980 = vmatprep.subr.bf16.mxu0 0
        %1981 = vmatpush1.bf16.xpose.msra.mxu0 0
        %1982 = vmatprep.subr.bf16.mxu0 0
        %1983 = vmatpush1.bf16.xpose.msra.mxu0 0
        %1984 = vmatprep.subr.bf16.mxu0 0
        %1985 = vmatpush1.bf16.xpose.msra.mxu0 0
        %1986 = vmatprep.subr.bf16.mxu0 0
        %1987 = vmatpush1.bf16.xpose.msra.mxu0 0
        %1988 = vmatprep.subr.bf16.mxu0 0
        %1989 = vmatpush1.bf16.xpose.msra.mxu0 0
        %1990 = vmatprep.subr.bf16.mxu0 0
        %1991 = vmatpush1.bf16.xpose.msra.mxu0 0
        %1992 = vmatprep.subr.bf16.mxu0 0
        %1993 = vmatpush1.bf16.xpose.msra.mxu0 0
        %1994 = vmatprep.subr.bf16.mxu0 0
        %1995 = vmatpush1.bf16.xpose.msra.mxu0 0
        %1996 = vmatprep.mubr.bf16.mxu0 0
        %1997 = vmatmul.mubr.bf16.gmra.mrb[0].mxu0 %v1959
        %v1998 = vpop.f32.mrb[0].mxu0
        %v1999 = vadd.f32 0.0, %v1998
        %v2000 = vpop.f32.mrb[0].mxu0
        %v2001 = vpop.f32.mrb[0].mxu0
        %v2002 = vpop.f32.mrb[0].mxu0
        %2003 = vdwg.mxu0
        %v2004 = vsel %vm1658, %v1999, -inf
        %2005 = vmax.xlane.f32.xlu0 %v2004
        %v2006 = vpop.xlane.xlu0 %2005
        %v2007 = vsub.f32 %v1999, %v2006
        %v2008 = vmul.f32 %v2007, 1.442695
        %v2009 = vpow.pop %v2008
        %v2010 = vsel %vm1658, %v2009, 0.0
        %2011 = vadd.xlane.f32.xlu0 %v2010
        %v2012 = vpop.xlane.xlu0 %2011
        %v2013 = vrcp.pop %v2012
        %v2014 = vmul.f32 %v2009, %v2013
        %v2015 = vpack.c.bf16 %v2014, %v2014
        %2016 = vrot.lane.b32.xlu0 %v1610, 32
        %v2017 = vpop.permute.xlu0 %2016
        %v2019 = vsel %vm1658, %v2015, 0
        %v2022 = vsel %vm1674, %v2017, 0
        %2024 = vmatprep.subr.bf16.mxu0 0
        %2025 = vmatpush1.bf16.msra.mxu0 %v2022
        %2026 = vmatprep.subr.bf16.mxu0 0
        %2027 = vmatpush1.bf16.msra.mxu0 0
        %2028 = vmatprep.subr.bf16.mxu0 0
        %2029 = vmatpush1.bf16.msra.mxu0 0
        %2030 = vmatprep.subr.bf16.mxu0 0
        %2031 = vmatpush1.bf16.msra.mxu0 0
        %2032 = vmatprep.subr.bf16.mxu0 0
        %2033 = vmatpush1.bf16.msra.mxu0 0
        %2034 = vmatprep.subr.bf16.mxu0 0
        %2035 = vmatpush1.bf16.msra.mxu0 0
        %2036 = vmatprep.subr.bf16.mxu0 0
        %2037 = vmatpush1.bf16.msra.mxu0 0
        %2038 = vmatprep.subr.bf16.mxu0 0
        %2039 = vmatpush1.bf16.msra.mxu0 0
        %2040 = vmatprep.subr.bf16.mxu0 0
        %2041 = vmatpush1.bf16.msra.mxu0 0
        %2042 = vmatprep.subr.bf16.mxu0 0
        %2043 = vmatpush1.bf16.msra.mxu0 0
        %2044 = vmatprep.subr.bf16.mxu0 0
        %2045 = vmatpush1.bf16.msra.mxu0 0
        %2046 = vmatprep.subr.bf16.mxu0 0
        %2047 = vmatpush1.bf16.msra.mxu0 0
        %2048 = vmatprep.subr.bf16.mxu0 0
        %2049 = vmatpush1.bf16.msra.mxu0 0
        %2050 = vmatprep.subr.bf16.mxu0 0
        %2051 = vmatpush1.bf16.msra.mxu0 0
        %2052 = vmatprep.subr.bf16.mxu0 0
        %2053 = vmatpush1.bf16.msra.mxu0 0
        %2054 = vmatprep.subr.bf16.mxu0 0
        %2055 = vmatpush1.bf16.msra.mxu0 0
        %2056 = vmatprep.mubr.bf16.mxu0 0
        %2057 = vmatmul.mubr.bf16.gmra.mrb[0].mxu0 %v2019
        %v2058 = vpop.f32.mrb[0].mxu0
        %v2059 = vadd.f32 0.0, %v2058
        %v2060 = vpop.f32.mrb[0].mxu0
        %v2061 = vpop.f32.mrb[0].mxu0
        %v2062 = vpop.f32.mrb[0].mxu0
        %2063 = vdwg.mxu0
        %2065 = vrot.lane.b32.xlu0 %v2059, 96
        %v2066 = vpop.permute.xlu0 %2065
        %vm2068 = vcmask 1048320
        %2069 = vst.msk [vmem:[#allocation2] sm:$0xff] %vm2068, %v2066
        %v2070 = vld [vmem:[#allocation2] sm:$0xff]
        %v2071 = vpack.c.bf16 %v2070, %v2070
        %v2073 = vlaneseq
        %v2074 = vshrl.u32 %v2073, 7
        %v2075 = vsub.s32 0, %v2074
        %v2076 = vrot.slane %v1607, %v2075
        %v2094 = vunpack.c.l.b16 %v1591
        %v2095 = vunpack.c.l.b16 %v1592
        %v2096 = vunpack.c.l.b16 %v1593
        %v2097 = vunpack.c.l.b16 %v1594
        %v2098 = vunpack.c.l.b16 %v1595
        %v2099 = vunpack.c.l.b16 %v1596
        %v2100 = vunpack.c.l.b16 %v1597
        %v2101 = vunpack.c.l.b16 %v1598
        %v2102 = vunpack.c.l.b16 %v1599
        %v2103 = vunpack.c.l.b16 %v1600
        %v2104 = vunpack.c.l.b16 %v1601
        %v2105 = vunpack.c.l.b16 %v1602
        %v2106 = vunpack.c.l.b16 %v1603
        %v2107 = vunpack.c.l.b16 %v1604
        %v2108 = vunpack.c.l.b16 %v1605
        %v2109 = vunpack.c.l.b16 %v1606
        %v2110 = vpack.c.b16 %v2095, %v2094
        %v2111 = vpack.c.b16 %v2097, %v2096
        %v2112 = vpack.c.b16 %v2099, %v2098
        %v2113 = vpack.c.b16 %v2101, %v2100
        %v2114 = vpack.c.b16 %v2103, %v2102
        %v2115 = vpack.c.b16 %v2105, %v2104
        %v2116 = vpack.c.b16 %v2107, %v2106
        %v2117 = vpack.c.b16 %v2109, %v2108
        %2126 = vmatprep.subr.bf16.mxu0 0
        %2127 = vmatpush1.bf16.msra.mxu0 %v2110
        %2128 = vmatprep.subr.bf16.mxu0 0
        %2129 = vmatpush1.bf16.msra.mxu0 %v2111
        %2130 = vmatprep.subr.bf16.mxu0 0
        %2131 = vmatpush1.bf16.msra.mxu0 %v2112
        %2132 = vmatprep.subr.bf16.mxu0 0
        %2133 = vmatpush1.bf16.msra.mxu0 %v2113
        %2134 = vmatprep.subr.bf16.mxu0 0
        %2135 = vmatpush1.bf16.msra.mxu0 %v2114
        %2136 = vmatprep.subr.bf16.mxu0 0
        %2137 = vmatpush1.bf16.msra.mxu0 %v2115
        %2138 = vmatprep.subr.bf16.mxu0 0
        %2139 = vmatpush1.bf16.msra.mxu0 %v2116
        %2140 = vmatprep.subr.bf16.mxu0 0
        %2141 = vmatpush1.bf16.msra.mxu0 %v2117
        %2142 = vmatprep.subr.bf16.mxu0 0
        %2143 = vmatpush1.bf16.msra.mxu0 0
        %2144 = vmatprep.subr.bf16.mxu0 0
        %2145 = vmatpush1.bf16.msra.mxu0 0
        %2146 = vmatprep.subr.bf16.mxu0 0
        %2147 = vmatpush1.bf16.msra.mxu0 0
        %2148 = vmatprep.subr.bf16.mxu0 0
        %2149 = vmatpush1.bf16.msra.mxu0 0
        %2150 = vmatprep.subr.bf16.mxu0 0
        %2151 = vmatpush1.bf16.msra.mxu0 0
        %2152 = vmatprep.subr.bf16.mxu0 0
        %2153 = vmatpush1.bf16.msra.mxu0 0
        %2154 = vmatprep.subr.bf16.mxu0 0
        %2155 = vmatpush1.bf16.msra.mxu0 0
        %2156 = vmatprep.subr.bf16.mxu0 0
        %2157 = vmatpush1.bf16.msra.mxu0 0
        %2158 = vmatprep.mubr.bf16.mxu0 0
        %2159 = vmatmul.mubr.bf16.gmra.mrb[0].mxu0 %v2071
        %v2160 = vpop.f32.mrb[0].mxu0
        %v2161 = vadd.f32 %v2076, %v2160
        %v2162 = vpop.f32.mrb[0].mxu0
        %v2163 = vpop.f32.mrb[0].mxu0
        %v2164 = vpop.f32.mrb[0].mxu0
        %2165 = vdwg.mxu0
        %v2166 = vadd.f32 %v1329, %v2161
        %v2167 = vld [vmem:[%s1299] sm:$0x1]
        %v2168 = vld [vmem:[%s1302] sm:$0x1]
        %2169 = vadd.xlane.f32.xlu0 %v2166
        %v2170 = vpop.xlane.xlu0 %2169
        %v2171 = vrcp.pop 128.0
        %v2172 = vmul.f32 %v2170, %v2171
        %v2173 = vsub.f32 %v2166, %v2172
        %v2174 = vmul.f32 %v2173, %v2173
        %2175 = vadd.xlane.f32.xlu0 %v2174
        %v2176 = vpop.xlane.xlu0 %2175
        %v2177 = vmul.f32 %v2176, %v2171
        %v2178 = vadd.f32 %v2177, 1e-06
        %v2179 = vrsqrt.pop %v2178
        %v2180 = vmul.f32 %v2173, %v2179
        %v2182 = vlaneseq
        %v2183 = vshrl.u32 %v2182, 7
        %v2184 = vsub.s32 0, %v2183
        %v2185 = vrot.slane %v2167, %v2184
        %v2187 = vmul.f32 %v2180, %v2185
        %v2189 = vlaneseq
        %v2190 = vshrl.u32 %v2189, 7
        %v2191 = vsub.s32 0, %v2190
        %v2192 = vrot.slane %v2168, %v2191
        %v2194 = vadd.f32 %v2187, %v2192
        %v2195 = vpack.c.bf16 %v2194, %v2194
        %v2196 = vld [vmem:[%s1079] sm:$0xf]
        %v2197 = vld [vmem:[%s1079 + $0x4] sm:$0xf]
        %v2198 = vld [vmem:[%s1079 + $0x8] sm:$0xf]
        %v2199 = vld [vmem:[%s1079 + $0xc] sm:$0xf]
        %v2200 = vld [vmem:[%s1079 + $0x10] sm:$0xf]
        %v2201 = vld [vmem:[%s1079 + $0x14] sm:$0xf]
        %v2202 = vld [vmem:[%s1079 + $0x18] sm:$0xf]
        %v2203 = vld [vmem:[%s1079 + $0x1c] sm:$0xf]
        %v2204 = vld [vmem:[%s1079 + $0x20] sm:$0xf]
        %v2205 = vld [vmem:[%s1079 + $0x24] sm:$0xf]
        %v2206 = vld [vmem:[%s1079 + $0x28] sm:$0xf]
        %v2207 = vld [vmem:[%s1079 + $0x2c] sm:$0xf]
        %v2208 = vld [vmem:[%s1079 + $0x30] sm:$0xf]
        %v2209 = vld [vmem:[%s1079 + $0x34] sm:$0xf]
        %v2210 = vld [vmem:[%s1079 + $0x38] sm:$0xf]
        %v2211 = vld [vmem:[%s1079 + $0x3c] sm:$0xf]
        %v2212 = vld [vmem:[%s1305] sm:$0x1]
        %v2214 = vlaneseq
        %v2215 = vshrl.u32 %v2214, 7
        %v2216 = vsub.s32 0, %v2215
        %v2217 = vrot.slane %v2212, %v2216
        %v2235 = vunpack.c.l.b16 %v2196
        %v2236 = vunpack.c.l.b16 %v2197
        %v2237 = vunpack.c.l.b16 %v2198
        %v2238 = vunpack.c.l.b16 %v2199
        %v2239 = vunpack.c.l.b16 %v2200
        %v2240 = vunpack.c.l.b16 %v2201
        %v2241 = vunpack.c.l.b16 %v2202
        %v2242 = vunpack.c.l.b16 %v2203
        %v2243 = vunpack.c.l.b16 %v2204
        %v2244 = vunpack.c.l.b16 %v2205
        %v2245 = vunpack.c.l.b16 %v2206
        %v2246 = vunpack.c.l.b16 %v2207
        %v2247 = vunpack.c.l.b16 %v2208
        %v2248 = vunpack.c.l.b16 %v2209
        %v2249 = vunpack.c.l.b16 %v2210
        %v2250 = vunpack.c.l.b16 %v2211
        %v2251 = vpack.c.b16 %v2236, %v2235
        %v2252 = vpack.c.b16 %v2238, %v2237
        %v2253 = vpack.c.b16 %v2240, %v2239
        %v2254 = vpack.c.b16 %v2242, %v2241
        %v2255 = vpack.c.b16 %v2244, %v2243
        %v2256 = vpack.c.b16 %v2246, %v2245
        %v2257 = vpack.c.b16 %v2248, %v2247
        %v2258 = vpack.c.b16 %v2250, %v2249
        %2267 = vmatprep.subr.bf16.mxu0 0
        %2268 = vmatpush1.bf16.msra.mxu0 %v2251
        %2269 = vmatprep.subr.bf16.mxu0 0
        %2270 = vmatpush1.bf16.msra.mxu0 %v2252
        %2271 = vmatprep.subr.bf16.mxu0 0
        %2272 = vmatpush1.bf16.msra.mxu0 %v2253
        %2273 = vmatprep.subr.bf16.mxu0 0
        %2274 = vmatpush1.bf16.msra.mxu0 %v2254
        %2275 = vmatprep.subr.bf16.mxu0 0
        %2276 = vmatpush1.bf16.msra.mxu0 %v2255
        %2277 = vmatprep.subr.bf16.mxu0 0
        %2278 = vmatpush1.bf16.msra.mxu0 %v2256
        %2279 = vmatprep.subr.bf16.mxu0 0
        %2280 = vmatpush1.bf16.msra.mxu0 %v2257
        %2281 = vmatprep.subr.bf16.mxu0 0
        %2282 = vmatpush1.bf16.msra.mxu0 %v2258
        %2283 = vmatprep.subr.bf16.mxu0 0
        %2284 = vmatpush1.bf16.msra.mxu0 0
        %2285 = vmatprep.subr.bf16.mxu0 0
        %2286 = vmatpush1.bf16.msra.mxu0 0
        %2287 = vmatprep.subr.bf16.mxu0 0
        %2288 = vmatpush1.bf16.msra.mxu0 0
        %2289 = vmatprep.subr.bf16.mxu0 0
        %2290 = vmatpush1.bf16.msra.mxu0 0
        %2291 = vmatprep.subr.bf16.mxu0 0
        %2292 = vmatpush1.bf16.msra.mxu0 0
        %2293 = vmatprep.subr.bf16.mxu0 0
        %2294 = vmatpush1.bf16.msra.mxu0 0
        %2295 = vmatprep.subr.bf16.mxu0 0
        %2296 = vmatpush1.bf16.msra.mxu0 0
        %2297 = vmatprep.subr.bf16.mxu0 0
        %2298 = vmatpush1.bf16.msra.mxu0 0
        %2299 = vmatprep.mubr.bf16.mxu0 0
        %2300 = vmatmul.mubr.bf16.gmra.mrb[0].mxu0 %v2195
        %v2301 = vpop.f32.mrb[0].mxu0
        %v2302 = vadd.f32 %v2217, %v2301
        %v2303 = vpop.f32.mrb[0].mxu0
        %v2304 = vpop.f32.mrb[0].mxu0
        %v2305 = vpop.f32.mrb[0].mxu0
        %2306 = vdwg.mxu0
        %v2307 = vpack.c.bf16 %v1331, %v1330
        %v2308 = vld [vmem:[%s1088] sm:$0xff]
        %v2309 = vld [vmem:[%s1088 + $0x8] sm:$0xff]
        %v2310 = vld [vmem:[%s1088 + $0x10] sm:$0xff]
        %v2311 = vld [vmem:[%s1088 + $0x18] sm:$0xff]
        %v2312 = vld [vmem:[%s1088 + $0x20] sm:$0xff]
        %v2313 = vld [vmem:[%s1088 + $0x28] sm:$0xff]
        %v2314 = vld [vmem:[%s1088 + $0x30] sm:$0xff]
        %v2315 = vld [vmem:[%s1088 + $0x38] sm:$0xff]
        %v2316 = vld [vmem:[%s1088 + $0x40] sm:$0xff]
        %v2317 = vld [vmem:[%s1088 + $0x48] sm:$0xff]
        %v2318 = vld [vmem:[%s1088 + $0x50] sm:$0xff]
        %v2319 = vld [vmem:[%s1088 + $0x58] sm:$0xff]
        %v2320 = vld [vmem:[%s1088 + $0x60] sm:$0xff]
        %v2321 = vld [vmem:[%s1088 + $0x68] sm:$0xff]
        %v2322 = vld [vmem:[%s1088 + $0x70] sm:$0xff]
        %v2323 = vld [vmem:[%s1088 + $0x78] sm:$0xff]
        %v2324 = vld [vmem:[%s1309] sm:$0x3]
        %v2326 = vlaneseq
        %v2327 = vshrl.u32 %v2326, 7
        %v2328 = vsub.s32 0, %v2327
        %v2329 = vrot.slane %v2324, %v2328
        %v2330 = vlaneseq
        %v2331 = vshrl.u32 %v2330, 7
        %v2332 = vsub.s32 1, %v2331
        %v2333 = vrot.slane %v2324, %v2332
        %v2352 = vunpack.c.l.b16 %v2308
        %v2353 = vunpack.c.h.b16 %v2308
        %v2354 = vunpack.c.l.b16 %v2309
        %v2355 = vunpack.c.h.b16 %v2309
        %v2356 = vunpack.c.l.b16 %v2310
        %v2357 = vunpack.c.h.b16 %v2310
        %v2358 = vunpack.c.l.b16 %v2311
        %v2359 = vunpack.c.h.b16 %v2311
        %v2360 = vunpack.c.l.b16 %v2312
        %v2361 = vunpack.c.h.b16 %v2312
        %v2362 = vunpack.c.l.b16 %v2313
        %v2363 = vunpack.c.h.b16 %v2313
        %v2364 = vunpack.c.l.b16 %v2314
        %v2365 = vunpack.c.h.b16 %v2314
        %v2366 = vunpack.c.l.b16 %v2315
        %v2367 = vunpack.c.h.b16 %v2315
        %v2368 = vunpack.c.l.b16 %v2316
        %v2369 = vunpack.c.h.b16 %v2316
        %v2370 = vunpack.c.l.b16 %v2317
        %v2371 = vunpack.c.h.b16 %v2317
        %v2372 = vunpack.c.l.b16 %v2318
        %v2373 = vunpack.c.h.b16 %v2318
        %v2374 = vunpack.c.l.b16 %v2319
        %v2375 = vunpack.c.h.b16 %v2319
        %v2376 = vunpack.c.l.b16 %v2320
        %v2377 = vunpack.c.h.b16 %v2320
        %v2378 = vunpack.c.l.b16 %v2321
        %v2379 = vunpack.c.h.b16 %v2321
        %v2380 = vunpack.c.l.b16 %v2322
        %v2381 = vunpack.c.h.b16 %v2322
        %v2382 = vunpack.c.l.b16 %v2323
        %v2383 = vunpack.c.h.b16 %v2323
        %v2384 = vpack.c.b16 %v2354, %v2352
        %v2385 = vpack.c.b16 %v2355, %v2353
        %v2386 = vpack.c.b16 %v2358, %v2356
        %v2387 = vpack.c.b16 %v2359, %v2357
        %v2388 = vpack.c.b16 %v2362, %v2360
        %v2389 = vpack.c.b16 %v2363, %v2361
        %v2390 = vpack.c.b16 %v2366, %v2364
        %v2391 = vpack.c.b16 %v2367, %v2365
        %v2392 = vpack.c.b16 %v2370, %v2368
        %v2393 = vpack.c.b16 %v2371, %v2369
        %v2394 = vpack.c.b16 %v2374, %v2372
        %v2395 = vpack.c.b16 %v2375, %v2373
        %v2396 = vpack.c.b16 %v2378, %v2376
        %v2397 = vpack.c.b16 %v2379, %v2377
        %v2398 = vpack.c.b16 %v2382, %v2380
        %v2399 = vpack.c.b16 %v2383, %v2381
        %2416 = vmatprep.subr.bf16.mxu0 %v2385
        %2417 = vmatpush1.bf16.msra.mxu0 %v2384
        %2418 = vmatprep.subr.bf16.mxu0 %v2387
        %2419 = vmatpush1.bf16.msra.mxu0 %v2386
        %2420 = vmatprep.subr.bf16.mxu0 %v2389
        %2421 = vmatpush1.bf16.msra.mxu0 %v2388
        %2422 = vmatprep.subr.bf16.mxu0 %v2391
        %2423 = vmatpush1.bf16.msra.mxu0 %v2390
        %2424 = vmatprep.subr.bf16.mxu0 %v2393
        %2425 = vmatpush1.bf16.msra.mxu0 %v2392
        %2426 = vmatprep.subr.bf16.mxu0 %v2395
        %2427 = vmatpush1.bf16.msra.mxu0 %v2394
        %2428 = vmatprep.subr.bf16.mxu0 %v2397
        %2429 = vmatpush1.bf16.msra.mxu0 %v2396
        %2430 = vmatprep.subr.bf16.mxu0 %v2399
        %2431 = vmatpush1.bf16.msra.mxu0 %v2398
        %2432 = vmatprep.subr.bf16.mxu0 0
        %2433 = vmatpush1.bf16.msra.mxu0 0
        %2434 = vmatprep.subr.bf16.mxu0 0
        %2435 = vmatpush1.bf16.msra.mxu0 0
        %2436 = vmatprep.subr.bf16.mxu0 0
        %2437 = vmatpush1.bf16.msra.mxu0 0
        %2438 = vmatprep.subr.bf16.mxu0 0
        %2439 = vmatpush1.bf16.msra.mxu0 0
        %2440 = vmatprep.subr.bf16.mxu0 0
        %2441 = vmatpush1.bf16.msra.mxu0 0
        %2442 = vmatprep.subr.bf16.mxu0 0
        %2443 = vmatpush1.bf16.msra.mxu0 0
        %2444 = vmatprep.subr.bf16.mxu0 0
        %2445 = vmatpush1.bf16.msra.mxu0 0
        %2446 = vmatprep.subr.bf16.mxu0 0
        %2447 = vmatpush1.bf16.msra.mxu0 0
        %2448 = vmatprep.mubr.bf16.mxu0 0
        %2449 = vmatmul.mubr.bf16.gmra.mrb[0].mxu0 %v2307
        %v2450 = vpop.f32.mrb[0].mxu0
        %v2451 = vadd.f32 %v2329, %v2450
        %v2452 = vpop.f32.mrb[0].mxu0
        %v2453 = vadd.f32 %v2333, %v2452
        %v2454 = vpop.f32.mrb[0].mxu0
        %v2455 = vadd.f32 %v2329, %v2454
        %v2456 = vpop.f32.mrb[0].mxu0
        %v2457 = vadd.f32 %v2333, %v2456
        %2458 = vdwg.mxu0
        %v2459 = vld [vmem:[%s1097] sm:$0xf]
        %v2460 = vld [vmem:[%s1097 + $0x4] sm:$0xf]
        %v2461 = vld [vmem:[%s1097 + $0x8] sm:$0xf]
        %v2462 = vld [vmem:[%s1097 + $0xc] sm:$0xf]
        %v2463 = vld [vmem:[%s1097 + $0x10] sm:$0xf]
        %v2464 = vld [vmem:[%s1097 + $0x14] sm:$0xf]
        %v2465 = vld [vmem:[%s1097 + $0x18] sm:$0xf]
        %v2466 = vld [vmem:[%s1097 + $0x1c] sm:$0xf]
        %v2467 = vld [vmem:[%s1097 + $0x20] sm:$0xf]
        %v2468 = vld [vmem:[%s1097 + $0x24] sm:$0xf]
        %v2469 = vld [vmem:[%s1097 + $0x28] sm:$0xf]
        %v2470 = vld [vmem:[%s1097 + $0x2c] sm:$0xf]
        %v2471 = vld [vmem:[%s1097 + $0x30] sm:$0xf]
        %v2472 = vld [vmem:[%s1097 + $0x34] sm:$0xf]
        %v2473 = vld [vmem:[%s1097 + $0x38] sm:$0xf]
        %v2474 = vld [vmem:[%s1097 + $0x3c] sm:$0xf]
        %v2475 = vld [vmem:[%s1105] sm:$0x1]
        %v2476 = vpack.c.bf16 %v2302, %v2302
        %v2477 = vpack.c.bf16 %v2455, %v2451
        %v2478 = vpack.c.bf16 %v2457, %v2453
        %v2480 = vsel %vm1611, %v2476, 0
        %v2483 = vsel %vm1611, %v2477, 0
        %2485 = vmatprep.subr.bf16.mxu0 0
        %2486 = vmatpush1.bf16.xpose.msra.mxu0 %v2483
        %2487 = vmatprep.subr.bf16.mxu0 0
        %2488 = vmatpush1.bf16.xpose.msra.mxu0 0
        %2489 = vmatprep.subr.bf16.mxu0 0
        %2490 = vmatpush1.bf16.xpose.msra.mxu0 0
        %2491 = vmatprep.subr.bf16.mxu0 0
        %2492 = vmatpush1.bf16.xpose.msra.mxu0 0
        %2493 = vmatprep.subr.bf16.mxu0 0
        %2494 = vmatpush1.bf16.xpose.msra.mxu0 0
        %2495 = vmatprep.subr.bf16.mxu0 0
        %2496 = vmatpush1.bf16.xpose.msra.mxu0 0
        %2497 = vmatprep.subr.bf16.mxu0 0
        %2498 = vmatpush1.bf16.xpose.msra.mxu0 0
        %2499 = vmatprep.subr.bf16.mxu0 0
        %2500 = vmatpush1.bf16.xpose.msra.mxu0 0
        %2501 = vmatprep.subr.bf16.mxu0 0
        %2502 = vmatpush1.bf16.xpose.msra.mxu0 0
        %2503 = vmatprep.subr.bf16.mxu0 0
        %2504 = vmatpush1.bf16.xpose.msra.mxu0 0
        %2505 = vmatprep.subr.bf16.mxu0 0
        %2506 = vmatpush1.bf16.xpose.msra.mxu0 0
        %2507 = vmatprep.subr.bf16.mxu0 0
        %2508 = vmatpush1.bf16.xpose.msra.mxu0 0
        %2509 = vmatprep.subr.bf16.mxu0 0
        %2510 = vmatpush1.bf16.xpose.msra.mxu0 0
        %2511 = vmatprep.subr.bf16.mxu0 0
        %2512 = vmatpush1.bf16.xpose.msra.mxu0 0
        %2513 = vmatprep.subr.bf16.mxu0 0
        %2514 = vmatpush1.bf16.xpose.msra.mxu0 0
        %2515 = vmatprep.subr.bf16.mxu0 0
        %2516 = vmatpush1.bf16.xpose.msra.mxu0 0
        %2517 = vmatprep.mubr.bf16.mxu0 0
        %2518 = vmatmul.mubr.bf16.gmra.mrb[0].mxu0 %v2480
        %v2519 = vpop.f32.mrb[0].mxu0
        %v2520 = vadd.f32 0.0, %v2519
        %v2521 = vpop.f32.mrb[0].mxu0
        %v2522 = vpop.f32.mrb[0].mxu0
        %v2523 = vpop.f32.mrb[0].mxu0
        %2524 = vdwg.mxu0
        %vm2525 = vcmask 130048
        %v2526 = vsel %vm2525, %v2520, -inf
        %2527 = vmax.xlane.f32.xlu0 %v2526
        %v2528 = vpop.xlane.xlu0 %2527
        %v2529 = vsub.f32 %v2520, %v2528
        %v2530 = vmul.f32 %v2529, 1.442695
        %v2531 = vpow.pop %v2530
        %v2532 = vsel %vm2525, %v2531, 0.0
        %2533 = vadd.xlane.f32.xlu0 %v2532
        %v2534 = vpop.xlane.xlu0 %2533
        %v2535 = vrcp.pop %v2534
        %v2536 = vmul.f32 %v2531, %v2535
        %v2537 = vpack.c.bf16 %v2536, %v2536
        %v2539 = vsel %vm2525, %v2537, 0
        %2541 = vmatprep.subr.bf16.mxu0 0
        %2542 = vmatpush1.bf16.msra.mxu0 %v2478
        %2543 = vmatprep.subr.bf16.mxu0 0
        %2544 = vmatpush1.bf16.msra.mxu0 0
        %2545 = vmatprep.subr.bf16.mxu0 0
        %2546 = vmatpush1.bf16.msra.mxu0 0
        %2547 = vmatprep.subr.bf16.mxu0 0
        %2548 = vmatpush1.bf16.msra.mxu0 0
        %2549 = vmatprep.subr.bf16.mxu0 0
        %2550 = vmatpush1.bf16.msra.mxu0 0
        %2551 = vmatprep.subr.bf16.mxu0 0
        %2552 = vmatpush1.bf16.msra.mxu0 0
        %2553 = vmatprep.subr.bf16.mxu0 0
        %2554 = vmatpush1.bf16.msra.mxu0 0
        %2555 = vmatprep.subr.bf16.mxu0 0
        %2556 = vmatpush1.bf16.msra.mxu0 0
        %2557 = vmatprep.subr.bf16.mxu0 0
        %2558 = vmatpush1.bf16.msra.mxu0 0
        %2559 = vmatprep.subr.bf16.mxu0 0
        %2560 = vmatpush1.bf16.msra.mxu0 0
        %2561 = vmatprep.subr.bf16.mxu0 0
        %2562 = vmatpush1.bf16.msra.mxu0 0
        %2563 = vmatprep.subr.bf16.mxu0 0
        %2564 = vmatpush1.bf16.msra.mxu0 0
        %2565 = vmatprep.subr.bf16.mxu0 0
        %2566 = vmatpush1.bf16.msra.mxu0 0
        %2567 = vmatprep.subr.bf16.mxu0 0
        %2568 = vmatpush1.bf16.msra.mxu0 0
        %2569 = vmatprep.subr.bf16.mxu0 0
        %2570 = vmatpush1.bf16.msra.mxu0 0
        %2571 = vmatprep.subr.bf16.mxu0 0
        %2572 = vmatpush1.bf16.msra.mxu0 0
        %2573 = vmatprep.mubr.bf16.mxu0 0
        %2574 = vmatmul.mubr.bf16.gmra.mrb[0].mxu0 %v2539
        %v2575 = vpop.f32.mrb[0].mxu0
        %v2576 = vadd.f32 0.0, %v2575
        %v2577 = vpop.f32.mrb[0].mxu0
        %v2578 = vpop.f32.mrb[0].mxu0
        %v2579 = vpop.f32.mrb[0].mxu0
        %2580 = vdwg.mxu0
        %2581 = vst.msk [vmem:[#allocation2] sm:$0xff] %vm1611, %v2576
        %2583 = vrot.lane.b32.xlu0 %v2476, 96
        %v2584 = vpop.permute.xlu0 %2583
        %2586 = vrot.lane.b32.xlu0 %v2477, 96
        %v2587 = vpop.permute.xlu0 %2586
        %v2589 = vsel %vm1611, %v2584, 0
        %v2592 = vsel %vm1611, %v2587, 0
        %2594 = vmatprep.subr.bf16.mxu0 0
        %2595 = vmatpush1.bf16.xpose.msra.mxu0 %v2592
        %2596 = vmatprep.subr.bf16.mxu0 0
        %2597 = vmatpush1.bf16.xpose.msra.mxu0 0
        %2598 = vmatprep.subr.bf16.mxu0 0
        %2599 = vmatpush1.bf16.xpose.msra.mxu0 0
        %2600 = vmatprep.subr.bf16.mxu0 0
        %2601 = vmatpush1.bf16.xpose.msra.mxu0 0
        %2602 = vmatprep.subr.bf16.mxu0 0
        %2603 = vmatpush1.bf16.xpose.msra.mxu0 0
        %2604 = vmatprep.subr.bf16.mxu0 0
        %2605 = vmatpush1.bf16.xpose.msra.mxu0 0
        %2606 = vmatprep.subr.bf16.mxu0 0
        %2607 = vmatpush1.bf16.xpose.msra.mxu0 0
        %2608 = vmatprep.subr.bf16.mxu0 0
        %2609 = vmatpush1.bf16.xpose.msra.mxu0 0
        %2610 = vmatprep.subr.bf16.mxu0 0
        %2611 = vmatpush1.bf16.xpose.msra.mxu0 0
        %2612 = vmatprep.subr.bf16.mxu0 0
        %2613 = vmatpush1.bf16.xpose.msra.mxu0 0
        %2614 = vmatprep.subr.bf16.mxu0 0
        %2615 = vmatpush1.bf16.xpose.msra.mxu0 0
        %2616 = vmatprep.subr.bf16.mxu0 0
        %2617 = vmatpush1.bf16.xpose.msra.mxu0 0
        %2618 = vmatprep.subr.bf16.mxu0 0
        %2619 = vmatpush1.bf16.xpose.msra.mxu0 0
        %2620 = vmatprep.subr.bf16.mxu0 0
        %2621 = vmatpush1.bf16.xpose.msra.mxu0 0
        %2622 = vmatprep.subr.bf16.mxu0 0
        %2623 = vmatpush1.bf16.xpose.msra.mxu0 0
        %2624 = vmatprep.subr.bf16.mxu0 0
        %2625 = vmatpush1.bf16.xpose.msra.mxu0 0
        %2626 = vmatprep.mubr.bf16.mxu0 0
        %2627 = vmatmul.mubr.bf16.gmra.mrb[0].mxu0 %v2589
        %v2628 = vpop.f32.mrb[0].mxu0
        %v2629 = vadd.f32 0.0, %v2628
        %v2630 = vpop.f32.mrb[0].mxu0
        %v2631 = vpop.f32.mrb[0].mxu0
        %v2632 = vpop.f32.mrb[0].mxu0
        %2633 = vdwg.mxu0
        %v2634 = vsel %vm2525, %v2629, -inf
        %2635 = vmax.xlane.f32.xlu0 %v2634
        %v2636 = vpop.xlane.xlu0 %2635
        %v2637 = vsub.f32 %v2629, %v2636
        %v2638 = vmul.f32 %v2637, 1.442695
        %v2639 = vpow.pop %v2638
        %v2640 = vsel %vm2525, %v2639, 0.0
        %2641 = vadd.xlane.f32.xlu0 %v2640
        %v2642 = vpop.xlane.xlu0 %2641
        %v2643 = vrcp.pop %v2642
        %v2644 = vmul.f32 %v2639, %v2643
        %v2645 = vpack.c.bf16 %v2644, %v2644
        %2647 = vrot.lane.b32.xlu0 %v2478, 96
        %v2648 = vpop.permute.xlu0 %2647
        %v2651 = vsel %vm2525, %v2645, 0
        %2653 = vmatprep.subr.bf16.mxu0 0
        %2654 = vmatpush1.bf16.msra.mxu0 %v2648
        %2655 = vmatprep.subr.bf16.mxu0 0
        %2656 = vmatpush1.bf16.msra.mxu0 0
        %2657 = vmatprep.subr.bf16.mxu0 0
        %2658 = vmatpush1.bf16.msra.mxu0 0
        %2659 = vmatprep.subr.bf16.mxu0 0
        %2660 = vmatpush1.bf16.msra.mxu0 0
        %2661 = vmatprep.subr.bf16.mxu0 0
        %2662 = vmatpush1.bf16.msra.mxu0 0
        %2663 = vmatprep.subr.bf16.mxu0 0
        %2664 = vmatpush1.bf16.msra.mxu0 0
        %2665 = vmatprep.subr.bf16.mxu0 0
        %2666 = vmatpush1.bf16.msra.mxu0 0
        %2667 = vmatprep.subr.bf16.mxu0 0
        %2668 = vmatpush1.bf16.msra.mxu0 0
        %2669 = vmatprep.subr.bf16.mxu0 0
        %2670 = vmatpush1.bf16.msra.mxu0 0
        %2671 = vmatprep.subr.bf16.mxu0 0
        %2672 = vmatpush1.bf16.msra.mxu0 0
        %2673 = vmatprep.subr.bf16.mxu0 0
        %2674 = vmatpush1.bf16.msra.mxu0 0
        %2675 = vmatprep.subr.bf16.mxu0 0
        %2676 = vmatpush1.bf16.msra.mxu0 0
        %2677 = vmatprep.subr.bf16.mxu0 0
        %2678 = vmatpush1.bf16.msra.mxu0 0
        %2679 = vmatprep.subr.bf16.mxu0 0
        %2680 = vmatpush1.bf16.msra.mxu0 0
        %2681 = vmatprep.subr.bf16.mxu0 0
        %2682 = vmatpush1.bf16.msra.mxu0 0
        %2683 = vmatprep.subr.bf16.mxu0 0
        %2684 = vmatpush1.bf16.msra.mxu0 0
        %2685 = vmatprep.mubr.bf16.mxu0 0
        %2686 = vmatmul.mubr.bf16.gmra.mrb[0].mxu0 %v2651
        %v2687 = vpop.f32.mrb[0].mxu0
        %v2688 = vadd.f32 0.0, %v2687
        %v2689 = vpop.f32.mrb[0].mxu0
        %v2690 = vpop.f32.mrb[0].mxu0
        %v2691 = vpop.f32.mrb[0].mxu0
        %2692 = vdwg.mxu0
        %2694 = vrot.lane.b32.xlu0 %v2688, 32
        %v2695 = vpop.permute.xlu0 %2694
        %2697 = vst.msk [vmem:[#allocation2] sm:$0xff] %vm1836, %v2695
        %2698 = vrot.lane.b32.xlu0 %v2476, 64
        %v2699 = vpop.permute.xlu0 %2698
        %2700 = vrot.lane.b32.xlu0 %v2477, 64
        %v2701 = vpop.permute.xlu0 %2700
        %v2703 = vsel %vm1611, %v2699, 0
        %v2706 = vsel %vm1611, %v2701, 0
        %2708 = vmatprep.subr.bf16.mxu0 0
        %2709 = vmatpush1.bf16.xpose.msra.mxu0 %v2706
        %2710 = vmatprep.subr.bf16.mxu0 0
        %2711 = vmatpush1.bf16.xpose.msra.mxu0 0
        %2712 = vmatprep.subr.bf16.mxu0 0
        %2713 = vmatpush1.bf16.xpose.msra.mxu0 0
        %2714 = vmatprep.subr.bf16.mxu0 0
        %2715 = vmatpush1.bf16.xpose.msra.mxu0 0
        %2716 = vmatprep.subr.bf16.mxu0 0
        %2717 = vmatpush1.bf16.xpose.msra.mxu0 0
        %2718 = vmatprep.subr.bf16.mxu0 0
        %2719 = vmatpush1.bf16.xpose.msra.mxu0 0
        %2720 = vmatprep.subr.bf16.mxu0 0
        %2721 = vmatpush1.bf16.xpose.msra.mxu0 0
        %2722 = vmatprep.subr.bf16.mxu0 0
        %2723 = vmatpush1.bf16.xpose.msra.mxu0 0
        %2724 = vmatprep.subr.bf16.mxu0 0
        %2725 = vmatpush1.bf16.xpose.msra.mxu0 0
        %2726 = vmatprep.subr.bf16.mxu0 0
        %2727 = vmatpush1.bf16.xpose.msra.mxu0 0
        %2728 = vmatprep.subr.bf16.mxu0 0
        %2729 = vmatpush1.bf16.xpose.msra.mxu0 0
        %2730 = vmatprep.subr.bf16.mxu0 0
        %2731 = vmatpush1.bf16.xpose.msra.mxu0 0
        %2732 = vmatprep.subr.bf16.mxu0 0
        %2733 = vmatpush1.bf16.xpose.msra.mxu0 0
        %2734 = vmatprep.subr.bf16.mxu0 0
        %2735 = vmatpush1.bf16.xpose.msra.mxu0 0
        %2736 = vmatprep.subr.bf16.mxu0 0
        %2737 = vmatpush1.bf16.xpose.msra.mxu0 0
        %2738 = vmatprep.subr.bf16.mxu0 0
        %2739 = vmatpush1.bf16.xpose.msra.mxu0 0
        %2740 = vmatprep.mubr.bf16.mxu0 0
        %2741 = vmatmul.mubr.bf16.gmra.mrb[0].mxu0 %v2703
        %v2742 = vpop.f32.mrb[0].mxu0
        %v2743 = vadd.f32 0.0, %v2742
        %v2744 = vpop.f32.mrb[0].mxu0
        %v2745 = vpop.f32.mrb[0].mxu0
        %v2746 = vpop.f32.mrb[0].mxu0
        %2747 = vdwg.mxu0
        %v2748 = vsel %vm2525, %v2743, -inf
        %2749 = vmax.xlane.f32.xlu0 %v2748
        %v2750 = vpop.xlane.xlu0 %2749
        %v2751 = vsub.f32 %v2743, %v2750
        %v2752 = vmul.f32 %v2751, 1.442695
        %v2753 = vpow.pop %v2752
        %v2754 = vsel %vm2525, %v2753, 0.0
        %2755 = vadd.xlane.f32.xlu0 %v2754
        %v2756 = vpop.xlane.xlu0 %2755
        %v2757 = vrcp.pop %v2756
        %v2758 = vmul.f32 %v2753, %v2757
        %v2759 = vpack.c.bf16 %v2758, %v2758
        %2760 = vrot.lane.b32.xlu0 %v2478, 64
        %v2761 = vpop.permute.xlu0 %2760
        %v2764 = vsel %vm2525, %v2759, 0
        %2766 = vmatprep.subr.bf16.mxu0 0
        %2767 = vmatpush1.bf16.msra.mxu0 %v2761
        %2768 = vmatprep.subr.bf16.mxu0 0
        %2769 = vmatpush1.bf16.msra.mxu0 0
        %2770 = vmatprep.subr.bf16.mxu0 0
        %2771 = vmatpush1.bf16.msra.mxu0 0
        %2772 = vmatprep.subr.bf16.mxu0 0
        %2773 = vmatpush1.bf16.msra.mxu0 0
        %2774 = vmatprep.subr.bf16.mxu0 0
        %2775 = vmatpush1.bf16.msra.mxu0 0
        %2776 = vmatprep.subr.bf16.mxu0 0
        %2777 = vmatpush1.bf16.msra.mxu0 0
        %2778 = vmatprep.subr.bf16.mxu0 0
        %2779 = vmatpush1.bf16.msra.mxu0 0
        %2780 = vmatprep.subr.bf16.mxu0 0
        %2781 = vmatpush1.bf16.msra.mxu0 0
        %2782 = vmatprep.subr.bf16.mxu0 0
        %2783 = vmatpush1.bf16.msra.mxu0 0
        %2784 = vmatprep.subr.bf16.mxu0 0
        %2785 = vmatpush1.bf16.msra.mxu0 0
        %2786 = vmatprep.subr.bf16.mxu0 0
        %2787 = vmatpush1.bf16.msra.mxu0 0
        %2788 = vmatprep.subr.bf16.mxu0 0
        %2789 = vmatpush1.bf16.msra.mxu0 0
        %2790 = vmatprep.subr.bf16.mxu0 0
        %2791 = vmatpush1.bf16.msra.mxu0 0
        %2792 = vmatprep.subr.bf16.mxu0 0
        %2793 = vmatpush1.bf16.msra.mxu0 0
        %2794 = vmatprep.subr.bf16.mxu0 0
        %2795 = vmatpush1.bf16.msra.mxu0 0
        %2796 = vmatprep.subr.bf16.mxu0 0
        %2797 = vmatpush1.bf16.msra.mxu0 0
        %2798 = vmatprep.mubr.bf16.mxu0 0
        %2799 = vmatmul.mubr.bf16.gmra.mrb[0].mxu0 %v2764
        %v2800 = vpop.f32.mrb[0].mxu0
        %v2801 = vadd.f32 0.0, %v2800
        %v2802 = vpop.f32.mrb[0].mxu0
        %v2803 = vpop.f32.mrb[0].mxu0
        %v2804 = vpop.f32.mrb[0].mxu0
        %2805 = vdwg.mxu0
        %2807 = vrot.lane.b32.xlu0 %v2801, 64
        %v2808 = vpop.permute.xlu0 %2807
        %2810 = vst.msk [vmem:[#allocation2] sm:$0xff] %vm1952, %v2808
        %2811 = vrot.lane.b32.xlu0 %v2476, 32
        %v2812 = vpop.permute.xlu0 %2811
        %2813 = vrot.lane.b32.xlu0 %v2477, 32
        %v2814 = vpop.permute.xlu0 %2813
        %v2816 = vsel %vm1611, %v2812, 0
        %v2819 = vsel %vm1611, %v2814, 0
        %2821 = vmatprep.subr.bf16.mxu0 0
        %2822 = vmatpush1.bf16.xpose.msra.mxu0 %v2819
        %2823 = vmatprep.subr.bf16.mxu0 0
        %2824 = vmatpush1.bf16.xpose.msra.mxu0 0
        %2825 = vmatprep.subr.bf16.mxu0 0
        %2826 = vmatpush1.bf16.xpose.msra.mxu0 0
        %2827 = vmatprep.subr.bf16.mxu0 0
        %2828 = vmatpush1.bf16.xpose.msra.mxu0 0
        %2829 = vmatprep.subr.bf16.mxu0 0
        %2830 = vmatpush1.bf16.xpose.msra.mxu0 0
        %2831 = vmatprep.subr.bf16.mxu0 0
        %2832 = vmatpush1.bf16.xpose.msra.mxu0 0
        %2833 = vmatprep.subr.bf16.mxu0 0
        %2834 = vmatpush1.bf16.xpose.msra.mxu0 0
        %2835 = vmatprep.subr.bf16.mxu0 0
        %2836 = vmatpush1.bf16.xpose.msra.mxu0 0
        %2837 = vmatprep.subr.bf16.mxu0 0
        %2838 = vmatpush1.bf16.xpose.msra.mxu0 0
        %2839 = vmatprep.subr.bf16.mxu0 0
        %2840 = vmatpush1.bf16.xpose.msra.mxu0 0
        %2841 = vmatprep.subr.bf16.mxu0 0
        %2842 = vmatpush1.bf16.xpose.msra.mxu0 0
        %2843 = vmatprep.subr.bf16.mxu0 0
        %2844 = vmatpush1.bf16.xpose.msra.mxu0 0
        %2845 = vmatprep.subr.bf16.mxu0 0
        %2846 = vmatpush1.bf16.xpose.msra.mxu0 0
        %2847 = vmatprep.subr.bf16.mxu0 0
        %2848 = vmatpush1.bf16.xpose.msra.mxu0 0
        %2849 = vmatprep.subr.bf16.mxu0 0
        %2850 = vmatpush1.bf16.xpose.msra.mxu0 0
        %2851 = vmatprep.subr.bf16.mxu0 0
        %2852 = vmatpush1.bf16.xpose.msra.mxu0 0
        %2853 = vmatprep.mubr.bf16.mxu0 0
        %2854 = vmatmul.mubr.bf16.gmra.mrb[0].mxu0 %v2816
        %v2855 = vpop.f32.mrb[0].mxu0
        %v2856 = vadd.f32 0.0, %v2855
        %v2857 = vpop.f32.mrb[0].mxu0
        %v2858 = vpop.f32.mrb[0].mxu0
        %v2859 = vpop.f32.mrb[0].mxu0
        %2860 = vdwg.mxu0
        %v2861 = vsel %vm2525, %v2856, -inf
        %2862 = vmax.xlane.f32.xlu0 %v2861
        %v2863 = vpop.xlane.xlu0 %2862
        %v2864 = vsub.f32 %v2856, %v2863
        %v2865 = vmul.f32 %v2864, 1.442695
        %v2866 = vpow.pop %v2865
        %v2867 = vsel %vm2525, %v2866, 0.0
        %2868 = vadd.xlane.f32.xlu0 %v2867
        %v2869 = vpop.xlane.xlu0 %2868
        %v2870 = vrcp.pop %v2869
        %v2871 = vmul.f32 %v2866, %v2870
        %v2872 = vpack.c.bf16 %v2871, %v2871
        %2873 = vrot.lane.b32.xlu0 %v2478, 32
        %v2874 = vpop.permute.xlu0 %2873
        %v2877 = vsel %vm2525, %v2872, 0
        %2879 = vmatprep.subr.bf16.mxu0 0
        %2880 = vmatpush1.bf16.msra.mxu0 %v2874
        %2881 = vmatprep.subr.bf16.mxu0 0
        %2882 = vmatpush1.bf16.msra.mxu0 0
        %2883 = vmatprep.subr.bf16.mxu0 0
        %2884 = vmatpush1.bf16.msra.mxu0 0
        %2885 = vmatprep.subr.bf16.mxu0 0
        %2886 = vmatpush1.bf16.msra.mxu0 0
        %2887 = vmatprep.subr.bf16.mxu0 0
        %2888 = vmatpush1.bf16.msra.mxu0 0
        %2889 = vmatprep.subr.bf16.mxu0 0
        %2890 = vmatpush1.bf16.msra.mxu0 0
        %2891 = vmatprep.subr.bf16.mxu0 0
        %2892 = vmatpush1.bf16.msra.mxu0 0
        %2893 = vmatprep.subr.bf16.mxu0 0
        %2894 = vmatpush1.bf16.msra.mxu0 0
        %2895 = vmatprep.subr.bf16.mxu0 0
        %2896 = vmatpush1.bf16.msra.mxu0 0
        %2897 = vmatprep.subr.bf16.mxu0 0
        %2898 = vmatpush1.bf16.msra.mxu0 0
        %2899 = vmatprep.subr.bf16.mxu0 0
        %2900 = vmatpush1.bf16.msra.mxu0 0
        %2901 = vmatprep.subr.bf16.mxu0 0
        %2902 = vmatpush1.bf16.msra.mxu0 0
        %2903 = vmatprep.subr.bf16.mxu0 0
        %2904 = vmatpush1.bf16.msra.mxu0 0
        %2905 = vmatprep.subr.bf16.mxu0 0
        %2906 = vmatpush1.bf16.msra.mxu0 0
        %2907 = vmatprep.subr.bf16.mxu0 0
        %2908 = vmatpush1.bf16.msra.mxu0 0
        %2909 = vmatprep.subr.bf16.mxu0 0
        %2910 = vmatpush1.bf16.msra.mxu0 0
        %2911 = vmatprep.mubr.bf16.mxu0 0
        %2912 = vmatmul.mubr.bf16.gmra.mrb[0].mxu0 %v2877
        %v2913 = vpop.f32.mrb[0].mxu0
        %v2914 = vadd.f32 0.0, %v2913
        %v2915 = vpop.f32.mrb[0].mxu0
        %v2916 = vpop.f32.mrb[0].mxu0
        %v2917 = vpop.f32.mrb[0].mxu0
        %2918 = vdwg.mxu0
        %2920 = vrot.lane.b32.xlu0 %v2914, 96
        %v2921 = vpop.permute.xlu0 %2920
        %2923 = vst.msk [vmem:[#allocation2] sm:$0xff] %vm2068, %v2921
        %v2924 = vld [vmem:[#allocation2] sm:$0xff]
        %v2925 = vpack.c.bf16 %v2924, %v2924
        %v2927 = vlaneseq
        %v2928 = vshrl.u32 %v2927, 7
        %v2929 = vsub.s32 0, %v2928
        %v2930 = vrot.slane %v2475, %v2929
        %v2948 = vunpack.c.l.b16 %v2459
        %v2949 = vunpack.c.l.b16 %v2460
        %v2950 = vunpack.c.l.b16 %v2461
        %v2951 = vunpack.c.l.b16 %v2462
        %v2952 = vunpack.c.l.b16 %v2463
        %v2953 = vunpack.c.l.b16 %v2464
        %v2954 = vunpack.c.l.b16 %v2465
        %v2955 = vunpack.c.l.b16 %v2466
        %v2956 = vunpack.c.l.b16 %v2467
        %v2957 = vunpack.c.l.b16 %v2468
        %v2958 = vunpack.c.l.b16 %v2469
        %v2959 = vunpack.c.l.b16 %v2470
        %v2960 = vunpack.c.l.b16 %v2471
        %v2961 = vunpack.c.l.b16 %v2472
        %v2962 = vunpack.c.l.b16 %v2473
        %v2963 = vunpack.c.l.b16 %v2474
        %v2964 = vpack.c.b16 %v2949, %v2948
        %v2965 = vpack.c.b16 %v2951, %v2950
        %v2966 = vpack.c.b16 %v2953, %v2952
        %v2967 = vpack.c.b16 %v2955, %v2954
        %v2968 = vpack.c.b16 %v2957, %v2956
        %v2969 = vpack.c.b16 %v2959, %v2958
        %v2970 = vpack.c.b16 %v2961, %v2960
        %v2971 = vpack.c.b16 %v2963, %v2962
        %2980 = vmatprep.subr.bf16.mxu0 0
        %2981 = vmatpush1.bf16.msra.mxu0 %v2964
        %2982 = vmatprep.subr.bf16.mxu0 0
        %2983 = vmatpush1.bf16.msra.mxu0 %v2965
        %2984 = vmatprep.subr.bf16.mxu0 0
        %2985 = vmatpush1.bf16.msra.mxu0 %v2966
        %2986 = vmatprep.subr.bf16.mxu0 0
        %2987 = vmatpush1.bf16.msra.mxu0 %v2967
        %2988 = vmatprep.subr.bf16.mxu0 0
        %2989 = vmatpush1.bf16.msra.mxu0 %v2968
        %2990 = vmatprep.subr.bf16.mxu0 0
        %2991 = vmatpush1.bf16.msra.mxu0 %v2969
        %2992 = vmatprep.subr.bf16.mxu0 0
        %2993 = vmatpush1.bf16.msra.mxu0 %v2970
        %2994 = vmatprep.subr.bf16.mxu0 0
        %2995 = vmatpush1.bf16.msra.mxu0 %v2971
        %2996 = vmatprep.subr.bf16.mxu0 0
        %2997 = vmatpush1.bf16.msra.mxu0 0
        %2998 = vmatprep.subr.bf16.mxu0 0
        %2999 = vmatpush1.bf16.msra.mxu0 0
        %3000 = vmatprep.subr.bf16.mxu0 0
        %3001 = vmatpush1.bf16.msra.mxu0 0
        %3002 = vmatprep.subr.bf16.mxu0 0
        %3003 = vmatpush1.bf16.msra.mxu0 0
        %3004 = vmatprep.subr.bf16.mxu0 0
        %3005 = vmatpush1.bf16.msra.mxu0 0
        %3006 = vmatprep.subr.bf16.mxu0 0
        %3007 = vmatpush1.bf16.msra.mxu0 0
        %3008 = vmatprep.subr.bf16.mxu0 0
        %3009 = vmatpush1.bf16.msra.mxu0 0
        %3010 = vmatprep.subr.bf16.mxu0 0
        %3011 = vmatpush1.bf16.msra.mxu0 0
        %3012 = vmatprep.mubr.bf16.mxu0 0
        %3013 = vmatmul.mubr.bf16.gmra.mrb[0].mxu0 %v2925
        %v3014 = vpop.f32.mrb[0].mxu0
        %v3015 = vadd.f32 %v2930, %v3014
        %v3016 = vpop.f32.mrb[0].mxu0
        %v3017 = vpop.f32.mrb[0].mxu0
        %v3018 = vpop.f32.mrb[0].mxu0
        %3019 = vdwg.mxu0
        %v3020 = vadd.f32 %v2194, %v3015
        %v3021 = vld [vmem:[%s1312] sm:$0x1]
        %v3022 = vld [vmem:[%s1315] sm:$0x1]
        %3023 = vadd.xlane.f32.xlu0 %v3020
        %v3024 = vpop.xlane.xlu0 %3023
        %v3025 = vmul.f32 %v3024, %v2171
        %v3026 = vsub.f32 %v3020, %v3025
        %v3027 = vmul.f32 %v3026, %v3026
        %3028 = vadd.xlane.f32.xlu0 %v3027
        %v3029 = vpop.xlane.xlu0 %3028
        %v3030 = vmul.f32 %v3029, %v2171
        %v3031 = vadd.f32 %v3030, 1e-06
        %v3032 = vrsqrt.pop %v3031
        %v3033 = vmul.f32 %v3026, %v3032
        %v3035 = vlaneseq
        %v3036 = vshrl.u32 %v3035, 7
        %v3037 = vsub.s32 0, %v3036
        %v3038 = vrot.slane %v3021, %v3037
        %v3040 = vmul.f32 %v3033, %v3038
        %v3042 = vlaneseq
        %v3043 = vshrl.u32 %v3042, 7
        %v3044 = vsub.s32 0, %v3043
        %v3045 = vrot.slane %v3022, %v3044
        %v3047 = vadd.f32 %v3040, %v3045
        %v3048 = vpack.c.bf16 %v3047, %v3047
        %v3049 = vld [vmem:[%s1114] sm:$0xff]
        %v3050 = vld [vmem:[%s1114 + $0x8] sm:$0xff]
        %v3051 = vld [vmem:[%s1114 + $0x10] sm:$0xff]
        %v3052 = vld [vmem:[%s1114 + $0x18] sm:$0xff]
        %v3053 = vld [vmem:[%s1114 + $0x20] sm:$0xff]
        %v3054 = vld [vmem:[%s1114 + $0x28] sm:$0xff]
        %v3055 = vld [vmem:[%s1114 + $0x30] sm:$0xff]
        %v3056 = vld [vmem:[%s1114 + $0x38] sm:$0xff]
        %v3057 = vld [vmem:[%s1114 + $0x40] sm:$0xff]
        %v3058 = vld [vmem:[%s1114 + $0x48] sm:$0xff]
        %v3059 = vld [vmem:[%s1114 + $0x50] sm:$0xff]
        %v3060 = vld [vmem:[%s1114 + $0x58] sm:$0xff]
        %v3061 = vld [vmem:[%s1114 + $0x60] sm:$0xff]
        %v3062 = vld [vmem:[%s1114 + $0x68] sm:$0xff]
        %v3063 = vld [vmem:[%s1114 + $0x70] sm:$0xff]
        %v3064 = vld [vmem:[%s1114 + $0x78] sm:$0xff]
        %v3065 = vld [vmem:[%s1123] sm:$0x3]
        %v3067 = vlaneseq
        %v3068 = vshrl.u32 %v3067, 7
        %v3069 = vsub.s32 0, %v3068
        %v3070 = vrot.slane %v3065, %v3069
        %v3071 = vlaneseq
        %v3072 = vshrl.u32 %v3071, 7
        %v3073 = vsub.s32 1, %v3072
        %v3074 = vrot.slane %v3065, %v3073
        %v3093 = vunpack.c.l.b16 %v3049
        %v3094 = vunpack.c.h.b16 %v3049
        %v3095 = vunpack.c.l.b16 %v3050
        %v3096 = vunpack.c.h.b16 %v3050
        %v3097 = vunpack.c.l.b16 %v3051
        %v3098 = vunpack.c.h.b16 %v3051
        %v3099 = vunpack.c.l.b16 %v3052
        %v3100 = vunpack.c.h.b16 %v3052
        %v3101 = vunpack.c.l.b16 %v3053
        %v3102 = vunpack.c.h.b16 %v3053
        %v3103 = vunpack.c.l.b16 %v3054
        %v3104 = vunpack.c.h.b16 %v3054
        %v3105 = vunpack.c.l.b16 %v3055
        %v3106 = vunpack.c.h.b16 %v3055
        %v3107 = vunpack.c.l.b16 %v3056
        %v3108 = vunpack.c.h.b16 %v3056
        %v3109 = vunpack.c.l.b16 %v3057
        %v3110 = vunpack.c.h.b16 %v3057
        %v3111 = vunpack.c.l.b16 %v3058
        %v3112 = vunpack.c.h.b16 %v3058
        %v3113 = vunpack.c.l.b16 %v3059
        %v3114 = vunpack.c.h.b16 %v3059
        %v3115 = vunpack.c.l.b16 %v3060
        %v3116 = vunpack.c.h.b16 %v3060
        %v3117 = vunpack.c.l.b16 %v3061
        %v3118 = vunpack.c.h.b16 %v3061
        %v3119 = vunpack.c.l.b16 %v3062
        %v3120 = vunpack.c.h.b16 %v3062
        %v3121 = vunpack.c.l.b16 %v3063
        %v3122 = vunpack.c.h.b16 %v3063
        %v3123 = vunpack.c.l.b16 %v3064
        %v3124 = vunpack.c.h.b16 %v3064
        %v3125 = vpack.c.b16 %v3095, %v3093
        %v3126 = vpack.c.b16 %v3096, %v3094
        %v3127 = vpack.c.b16 %v3099, %v3097
        %v3128 = vpack.c.b16 %v3100, %v3098
        %v3129 = vpack.c.b16 %v3103, %v3101
        %v3130 = vpack.c.b16 %v3104, %v3102
        %v3131 = vpack.c.b16 %v3107, %v3105
        %v3132 = vpack.c.b16 %v3108, %v3106
        %v3133 = vpack.c.b16 %v3111, %v3109
        %v3134 = vpack.c.b16 %v3112, %v3110
        %v3135 = vpack.c.b16 %v3115, %v3113
        %v3136 = vpack.c.b16 %v3116, %v3114
        %v3137 = vpack.c.b16 %v3119, %v3117
        %v3138 = vpack.c.b16 %v3120, %v3118
        %v3139 = vpack.c.b16 %v3123, %v3121
        %v3140 = vpack.c.b16 %v3124, %v3122
        %3157 = vmatprep.subr.bf16.mxu0 %v3126
        %3158 = vmatpush1.bf16.msra.mxu0 %v3125
        %3159 = vmatprep.subr.bf16.mxu0 %v3128
        %3160 = vmatpush1.bf16.msra.mxu0 %v3127
        %3161 = vmatprep.subr.bf16.mxu0 %v3130
        %3162 = vmatpush1.bf16.msra.mxu0 %v3129
        %3163 = vmatprep.subr.bf16.mxu0 %v3132
        %3164 = vmatpush1.bf16.msra.mxu0 %v3131
        %3165 = vmatprep.subr.bf16.mxu0 %v3134
        %3166 = vmatpush1.bf16.msra.mxu0 %v3133
        %3167 = vmatprep.subr.bf16.mxu0 %v3136
        %3168 = vmatpush1.bf16.msra.mxu0 %v3135
        %3169 = vmatprep.subr.bf16.mxu0 %v3138
        %3170 = vmatpush1.bf16.msra.mxu0 %v3137
        %3171 = vmatprep.subr.bf16.mxu0 %v3140
        %3172 = vmatpush1.bf16.msra.mxu0 %v3139
        %3173 = vmatprep.subr.bf16.mxu0 0
        %3174 = vmatpush1.bf16.msra.mxu0 0
        %3175 = vmatprep.subr.bf16.mxu0 0
        %3176 = vmatpush1.bf16.msra.mxu0 0
        %3177 = vmatprep.subr.bf16.mxu0 0
        %3178 = vmatpush1.bf16.msra.mxu0 0
        %3179 = vmatprep.subr.bf16.mxu0 0
        %3180 = vmatpush1.bf16.msra.mxu0 0
        %3181 = vmatprep.subr.bf16.mxu0 0
        %3182 = vmatpush1.bf16.msra.mxu0 0
        %3183 = vmatprep.subr.bf16.mxu0 0
        %3184 = vmatpush1.bf16.msra.mxu0 0
        %3185 = vmatprep.subr.bf16.mxu0 0
        %3186 = vmatpush1.bf16.msra.mxu0 0
        %3187 = vmatprep.subr.bf16.mxu0 0
        %3188 = vmatpush1.bf16.msra.mxu0 0
        %3189 = vmatprep.mubr.bf16.mxu0 0
        %3190 = vmatmul.mubr.bf16.gmra.mrb[0].mxu0 %v3048
        %v3191 = vpop.f32.mrb[0].mxu0
        %v3192 = vadd.f32 %v3070, %v3191
        %v3193 = vpop.f32.mrb[0].mxu0
        %v3194 = vadd.f32 %v3074, %v3193
        %v3195 = vpop.f32.mrb[0].mxu0
        %v3196 = vpop.f32.mrb[0].mxu0
        %3197 = vdwg.mxu0
        %v3198 = vmax.f32 %v3192, 0.0
        %v3199 = vmax.f32 %v3194, 0.0
        %v3200 = vpack.c.bf16 %v3198, %v3198
        %v3201 = vpack.c.bf16 %v3199, %v3199
        %v3202 = vld [vmem:[%s1132] sm:$0xf]
        %v3203 = vld [vmem:[%s1132 + $0x4] sm:$0xf]
        %v3204 = vld [vmem:[%s1132 + $0x8] sm:$0xf]
        %v3205 = vld [vmem:[%s1132 + $0xc] sm:$0xf]
        %v3206 = vld [vmem:[%s1132 + $0x10] sm:$0xf]
        %v3207 = vld [vmem:[%s1132 + $0x14] sm:$0xf]
        %v3208 = vld [vmem:[%s1132 + $0x18] sm:$0xf]
        %v3209 = vld [vmem:[%s1132 + $0x1c] sm:$0xf]
        %v3210 = vld [vmem:[%s1132 + $0x20] sm:$0xf]
        %v3211 = vld [vmem:[%s1132 + $0x24] sm:$0xf]
        %v3212 = vld [vmem:[%s1132 + $0x28] sm:$0xf]
        %v3213 = vld [vmem:[%s1132 + $0x2c] sm:$0xf]
        %v3214 = vld [vmem:[%s1132 + $0x30] sm:$0xf]
        %v3215 = vld [vmem:[%s1132 + $0x34] sm:$0xf]
        %v3216 = vld [vmem:[%s1132 + $0x38] sm:$0xf]
        %v3217 = vld [vmem:[%s1132 + $0x3c] sm:$0xf]
        %v3218 = vld [vmem:[%s1132 + $0x40] sm:$0xf]
        %v3219 = vld [vmem:[%s1132 + $0x44] sm:$0xf]
        %v3220 = vld [vmem:[%s1132 + $0x48] sm:$0xf]
        %v3221 = vld [vmem:[%s1132 + $0x4c] sm:$0xf]
        %v3222 = vld [vmem:[%s1132 + $0x50] sm:$0xf]
        %v3223 = vld [vmem:[%s1132 + $0x54] sm:$0xf]
        %v3224 = vld [vmem:[%s1132 + $0x58] sm:$0xf]
        %v3225 = vld [vmem:[%s1132 + $0x5c] sm:$0xf]
        %v3226 = vld [vmem:[%s1132 + $0x60] sm:$0xf]
        %v3227 = vld [vmem:[%s1132 + $0x64] sm:$0xf]
        %v3228 = vld [vmem:[%s1132 + $0x68] sm:$0xf]
        %v3229 = vld [vmem:[%s1132 + $0x6c] sm:$0xf]
        %v3230 = vld [vmem:[%s1132 + $0x70] sm:$0xf]
        %v3231 = vld [vmem:[%s1132 + $0x74] sm:$0xf]
        %v3232 = vld [vmem:[%s1132 + $0x78] sm:$0xf]
        %v3233 = vld [vmem:[%s1132 + $0x7c] sm:$0xf]
        %v3234 = vld [vmem:[%s1140] sm:$0x1]
        %v3236 = vlaneseq
        %v3237 = vshrl.u32 %v3236, 7
        %v3238 = vsub.s32 0, %v3237
        %v3239 = vrot.slane %v3234, %v3238
        %v3273 = vunpack.c.l.b16 %v3202
        %v3274 = vunpack.c.l.b16 %v3203
        %v3275 = vunpack.c.l.b16 %v3204
        %v3276 = vunpack.c.l.b16 %v3205
        %v3277 = vunpack.c.l.b16 %v3206
        %v3278 = vunpack.c.l.b16 %v3207
        %v3279 = vunpack.c.l.b16 %v3208
        %v3280 = vunpack.c.l.b16 %v3209
        %v3281 = vunpack.c.l.b16 %v3210
        %v3282 = vunpack.c.l.b16 %v3211
        %v3283 = vunpack.c.l.b16 %v3212
        %v3284 = vunpack.c.l.b16 %v3213
        %v3285 = vunpack.c.l.b16 %v3214
        %v3286 = vunpack.c.l.b16 %v3215
        %v3287 = vunpack.c.l.b16 %v3216
        %v3288 = vunpack.c.l.b16 %v3217
        %v3289 = vunpack.c.l.b16 %v3218
        %v3290 = vunpack.c.l.b16 %v3219
        %v3291 = vunpack.c.l.b16 %v3220
        %v3292 = vunpack.c.l.b16 %v3221
        %v3293 = vunpack.c.l.b16 %v3222
        %v3294 = vunpack.c.l.b16 %v3223
        %v3295 = vunpack.c.l.b16 %v3224
        %v3296 = vunpack.c.l.b16 %v3225
        %v3297 = vunpack.c.l.b16 %v3226
        %v3298 = vunpack.c.l.b16 %v3227
        %v3299 = vunpack.c.l.b16 %v3228
        %v3300 = vunpack.c.l.b16 %v3229
        %v3301 = vunpack.c.l.b16 %v3230
        %v3302 = vunpack.c.l.b16 %v3231
        %v3303 = vunpack.c.l.b16 %v3232
        %v3304 = vunpack.c.l.b16 %v3233
        %v3305 = vpack.c.b16 %v3274, %v3273
        %v3306 = vpack.c.b16 %v3276, %v3275
        %v3307 = vpack.c.b16 %v3278, %v3277
        %v3308 = vpack.c.b16 %v3280, %v3279
        %v3309 = vpack.c.b16 %v3282, %v3281
        %v3310 = vpack.c.b16 %v3284, %v3283
        %v3311 = vpack.c.b16 %v3286, %v3285
        %v3312 = vpack.c.b16 %v3288, %v3287
        %v3313 = vpack.c.b16 %v3290, %v3289
        %v3314 = vpack.c.b16 %v3292, %v3291
        %v3315 = vpack.c.b16 %v3294, %v3293
        %v3316 = vpack.c.b16 %v3296, %v3295
        %v3317 = vpack.c.b16 %v3298, %v3297
        %v3318 = vpack.c.b16 %v3300, %v3299
        %v3319 = vpack.c.b16 %v3302, %v3301
        %v3320 = vpack.c.b16 %v3304, %v3303
        %3337 = vmatprep.subr.bf16.mxu0 0
        %3338 = vmatpush1.bf16.msra.mxu0 %v3305
        %3339 = vmatprep.subr.bf16.mxu0 0
        %3340 = vmatpush1.bf16.msra.mxu0 %v3306
        %3341 = vmatprep.subr.bf16.mxu0 0
        %3342 = vmatpush1.bf16.msra.mxu0 %v3307
        %3343 = vmatprep.subr.bf16.mxu0 0
        %3344 = vmatpush1.bf16.msra.mxu0 %v3308
        %3345 = vmatprep.subr.bf16.mxu0 0
        %3346 = vmatpush1.bf16.msra.mxu0 %v3309
        %3347 = vmatprep.subr.bf16.mxu0 0
        %3348 = vmatpush1.bf16.msra.mxu0 %v3310
        %3349 = vmatprep.subr.bf16.mxu0 0
        %3350 = vmatpush1.bf16.msra.mxu0 %v3311
        %3351 = vmatprep.subr.bf16.mxu0 0
        %3352 = vmatpush1.bf16.msra.mxu0 %v3312
        %3353 = vmatprep.subr.bf16.mxu0 0
        %3354 = vmatpush1.bf16.msra.mxu0 %v3313
        %3355 = vmatprep.subr.bf16.mxu0 0
        %3356 = vmatpush1.bf16.msra.mxu0 %v3314
        %3357 = vmatprep.subr.bf16.mxu0 0
        %3358 = vmatpush1.bf16.msra.mxu0 %v3315
        %3359 = vmatprep.subr.bf16.mxu0 0
        %3360 = vmatpush1.bf16.msra.mxu0 %v3316
        %3361 = vmatprep.subr.bf16.mxu0 0
        %3362 = vmatpush1.bf16.msra.mxu0 %v3317
        %3363 = vmatprep.subr.bf16.mxu0 0
        %3364 = vmatpush1.bf16.msra.mxu0 %v3318
        %3365 = vmatprep.subr.bf16.mxu0 0
        %3366 = vmatpush1.bf16.msra.mxu0 %v3319
        %3367 = vmatprep.subr.bf16.mxu0 0
        %3368 = vmatpush1.bf16.msra.mxu0 %v3320
        %3369 = vmatprep.mubr.bf16.mxu0 %v3201
        %3370 = vmatmul.mubr.bf16.gmra.mrb[0].mxu0 %v3200
        %v3371 = vpop.f32.mrb[0].mxu0
        %v3372 = vadd.f32 %v3239, %v3371
        %v3373 = vpop.f32.mrb[0].mxu0
        %v3374 = vpop.f32.mrb[0].mxu0
        %v3375 = vpop.f32.mrb[0].mxu0
        %3376 = vdwg.mxu0
        %v3377 = vadd.f32 %v3372, %v3015
        %v3378 = vld [vmem:[%s1318] sm:$0x1]
        %v3379 = vld [vmem:[%s1321] sm:$0x1]
        %3380 = vadd.xlane.f32.xlu0 %v3377
        %v3381 = vpop.xlane.xlu0 %3380
        %v3382 = vmul.f32 %v3381, %v2171
        %v3383 = vsub.f32 %v3377, %v3382
        %v3384 = vmul.f32 %v3383, %v3383
        %3385 = vadd.xlane.f32.xlu0 %v3384
        %v3386 = vpop.xlane.xlu0 %3385
        %v3387 = vmul.f32 %v3386, %v2171
        %v3388 = vadd.f32 %v3387, 1e-06
        %v3389 = vrsqrt.pop %v3388
        %v3390 = vmul.f32 %v3383, %v3389
        %v3392 = vlaneseq
        %v3393 = vshrl.u32 %v3392, 7
        %v3394 = vsub.s32 0, %v3393
        %v3395 = vrot.slane %v3378, %v3394
        %v3397 = vmul.f32 %v3390, %v3395
        %v3399 = vlaneseq
        %v3400 = vshrl.u32 %v3399, 7
        %v3401 = vsub.s32 0, %v3400
        %v3402 = vrot.slane %v3379, %v3401
        %v3404 = vadd.f32 %v3397, %v3402
        %p3405 = scmp.lt.s32.totalorder %s64, 1
        // Predicated region
        $region169: #{transformer_decoder_pallas.1} parent=115 // pred_check
          %p3406 = pneg %p3405
        $region170: #{transformer_decoder_pallas.1} parent=115 // pred_check_branch
          %3408 = sbr.rel (%p3406) target = $region172
        $region171: #{transformer_decoder_pallas.1} parent=115 // pred_region
          %3409 = vst [vmem:[%s1289] sm:$0xff] %v3404
        $region172: #{transformer_decoder_pallas.1} parent=115 // pred_fallthru
          _
        %p3410 = scmp.eq.s32.totalorder %s64, 1
        // Predicated region
        $region173: #{transformer_decoder_pallas.1} parent=115 // pred_check
          %p3411 = pneg %p3410
        $region174: #{transformer_decoder_pallas.1} parent=115 // pred_check_branch
          %3413 = sbr.rel (%p3411) target = $region176
        $region175: #{transformer_decoder_pallas.1} parent=115 // pred_region
          %v3414 = vld [vmem:[%s22] sm:$0x1]
          %v3415 = vld [vmem:[%s23] sm:$0x1]
          %3416 = vadd.xlane.f32.xlu0 %v3404
          %v3417 = vpop.xlane.xlu0 %3416
          %v3418 = vmul.f32 %v3417, %v2171
          %v3419 = vsub.f32 %v3404, %v3418
          %v3420 = vmul.f32 %v3419, %v3419
          %3421 = vadd.xlane.f32.xlu0 %v3420
          %v3422 = vpop.xlane.xlu0 %3421
          %v3423 = vmul.f32 %v3422, %v2171
          %v3424 = vadd.f32 %v3423, 1e-06
          %v3425 = vrsqrt.pop %v3424
          %v3426 = vmul.f32 %v3419, %v3425
          %v3428 = vlaneseq
          %v3429 = vshrl.u32 %v3428, 7
          %v3430 = vsub.s32 0, %v3429
          %v3431 = vrot.slane %v3414, %v3430
          %v3433 = vmul.f32 %v3426, %v3431
          %v3435 = vlaneseq
          %v3436 = vshrl.u32 %v3435, 7
          %v3437 = vsub.s32 0, %v3436
          %v3438 = vrot.slane %v3415, %v3437
          %v3440 = vadd.f32 %v3433, %v3438
          %3441 = vst [vmem:[%s1289] sm:$0xff] %v3440
        $region176: #{transformer_decoder_pallas.1} parent=115 // pred_fallthru
          _
        %s3442 = sand.u32 %s693, 1
        %s3443 = scalar_lea.sflag [#allocation5], %s3442
        %s3444 = sand.u32 %s693, 1
        %s3445 = smul.addr %s3444, 8
        %s3446 = scalar_lea.vmem [#allocation23], %s3445
        // Predicated region
        $region177: #{transformer_decoder_pallas.1} parent=115 // pred_check
          %p3447 = pneg %p703
        $region178: #{transformer_decoder_pallas.1} parent=115 // pred_check_branch
          %3449 = sbr.rel (%p3447) target = $region180
        $region179: #{transformer_decoder_pallas.1} parent=115 // pred_region
          %s3451 = ssub.s32 128, 128
          %3452 = vsyncadd %s3443, %s3451
          %s3453 = smul.addr %s63, 128
          %s3454 = scalar_lea.hbm %s24, %s3453
          %s3456 = sshll.u32 %s3446, 4
          %s3457 = int_to_ptr.vmem [resolvable:$true] %s3456
          %3459 = dma.vmem_to_hbm [thread:$0]  %s3457, 128, %s3454, %s3443
        $region180: #{transformer_decoder_pallas.1} parent=115 // pred_fallthru
          _
      $region116: #{transformer_decoder_pallas.1} parent=5 // pred_fallthru
        _
      %p3460 = scmp.le.s32.totalorder 2, %s54
      // Predicated region
      $region181: #{transformer_decoder_pallas.1} parent=5 // pred_check
        %p3461 = pneg %p3460
      $region182: #{transformer_decoder_pallas.1} parent=5 // pred_check_branch
        %3463 = sbr.rel (%p3461) target = $region184
      $region183: #{transformer_decoder_pallas.1} parent=5 // pred_region
        %s3464 = ssub.s32 %s54, 2
        // Predicated region
        $region185: #{transformer_decoder_pallas.1} parent=183 // pred_check
          %p3465 = pneg %p709
        $region186: #{transformer_decoder_pallas.1} parent=183 // pred_check_branch
          %3467 = sbr.rel (%p3465) target = $region188
        $region187: #{transformer_decoder_pallas.1} parent=183 // pred_region
          %s3468 = sand.u32 %s694, 1
          %s3469 = scalar_lea.sflag [#allocation5], %s3468
          %s3470 = sand.u32 %s694, 1
          %s3471 = smul.addr %s3470, 8
          %s3472 = scalar_lea.vmem [#allocation23], %s3471
          %3473 = dma.done %s3469, 128
        $region188: #{transformer_decoder_pallas.1} parent=183 // pred_fallthru
          _
      $region184: #{transformer_decoder_pallas.1} parent=5 // pred_fallthru
        _
    $region6: #{transformer_decoder_pallas.1} parent=1 // loop_footer
      %s58 = sadd.s32 1, %s54
    $region7: #{transformer_decoder_pallas.1} parent=1 // loop_footer_branch
      %53 = sbr.rel target = $region3
    $region8: #{transformer_decoder_pallas.1} parent=1 // loop_exit
      _
    %3474 = vsyncpa [#allocation4], 1
    %s3475 = scalar_lea.sflag [#allocation4], 1
    %3476 = vsyncpa %s3475, 1
    %3477 = vsyncpa [#allocation7], 1
    %s3478 = scalar_lea.sflag [#allocation7], 1
    %3479 = vsyncpa %s3478, 1
    %3480 = vsyncpa [#allocation10], 1
    %s3481 = scalar_lea.sflag [#allocation10], 1
    %3482 = vsyncpa %s3481, 1
    %3483 = vsyncpa [#allocation13], 1
    %s3484 = scalar_lea.sflag [#allocation13], 1
    %3485 = vsyncpa %s3484, 1
    %3486 = vsyncpa [#allocation16], 1
    %s3487 = scalar_lea.sflag [#allocation16], 1
    %3488 = vsyncpa %s3487, 1
    %3489 = vsyncpa [#allocation19], 1
    %s3490 = scalar_lea.sflag [#allocation19], 1
    %3491 = vsyncpa %s3490, 1
    %3492 = vsyncpa [#allocation22], 1
    %s3493 = scalar_lea.sflag [#allocation22], 1
    %3494 = vsyncpa %s3493, 1
    %3495 = vsyncpa [#allocation5], 1
    %s3496 = scalar_lea.sflag [#allocation5], 1
    %3497 = vsyncpa %s3496, 1

</llo_original>
